<compile_context>
chip_gen: v6e
topology: v6e:2x2x1
jax: 0.10.0
libtpu: 0.0.40
codegen_flags: <defaults>
</compile_context>

<pallas_src>
import jax
import jax.numpy as jnp
from jax import lax
from jax.experimental import pallas as pl
from jax.experimental.pallas import tpu as pltpu


def _make_gru_kernel(n_layers, t_chunk, seq_len, mask_tail, unroll):
    def kernel(*refs):
        # ---- unpack refs: inputs, outputs, scratch ---------------------
        x_ref, h0_ref = refs[0], refs[1]
        idx = 2
        layer_refs = []
        for _ in range(n_layers):
            layer_refs.append(refs[idx:idx + 5])   # wx_all, wh_zr, b_zr, whg, bg
            idx += 5
        wy_ref, by_ref = refs[idx], refs[idx + 1]
        y_ref, hout_ref = refs[idx + 2], refs[idx + 3]
        h_state = refs[idx + 4]                    # VMEM (L, TB, H_pad) f32
        top_h = refs[idx + 5]                      # VMEM (t_chunk, TB, H_pad) f32

        tc = pl.program_id(1)                      # time-chunk index (sequential)

        # Load initial hidden state at the first time chunk of each batch block.
        @pl.when(tc == 0)
        def _():
            h_state[...] = h0_ref[...].astype(jnp.float32)

        tb = x_ref.shape[1]
        h_pad = h_state.shape[2]
        o_pad = y_ref.shape[2]

        # Hoist weight loads + bias broadcasts out of the per-timestep loop
        # (JAX does not CSE broadcast_in_dim; keeps vld slots free for acts).
        layer_w = []
        for i in range(n_layers):
            wx_ref, whzr_ref, bzr_ref, whg_ref, bg_ref = layer_refs[i]
            layer_w.append((
                wx_ref[...],                                       # bf16 (D_in, 3H)
                whzr_ref[...],                                     # bf16 (H, 2H)
                jnp.broadcast_to(bzr_ref[...], (tb, 2 * h_pad)),   # f32  (TB, 2H)
                whg_ref[...],                                      # bf16 (H, H)
                jnp.broadcast_to(bg_ref[...], (tb, h_pad)),        # f32  (TB, H)
            ))

        hs0 = tuple(h_state[i] for i in range(n_layers))

        def step(tt, hs):
            x = x_ref[tt].astype(jnp.bfloat16)       # (TB, D_in) MXU operand
            new_hs = []
            for i in range(n_layers):
                wx, whzr, bzr, whg, bg = layer_w[i]
                h = hs[i]                            # f32 (TB, H_pad)
                # Fused input-side gates: one (TB, D_in) @ (D_in, 3H) matmul.
                xw = jnp.dot(x, wx, preferred_element_type=jnp.float32)
                # Fused z/r hidden-side: one (TB, H) @ (H, 2H) matmul + bias.
                hw = jnp.dot(h.astype(jnp.bfloat16), whzr,
                             preferred_element_type=jnp.float32) + bzr
                z = jax.nn.sigmoid(xw[:, :h_pad] + hw[:, :h_pad])
                r = jax.nn.sigmoid(xw[:, h_pad:2 * h_pad] + hw[:, h_pad:])
                g = jnp.tanh(
                    xw[:, 2 * h_pad:]
                    + jnp.dot((r * h).astype(jnp.bfloat16), whg,
                              preferred_element_type=jnp.float32)
                    + bg)
                h_new = z * h + (1.0 - z) * g
                if mask_tail:
                    # Padded timesteps (t >= seq_len) must not advance state.
                    valid = (tc * t_chunk + tt) < seq_len
                    h_new = jnp.where(valid, h_new, h)
                new_hs.append(h_new)
                x = h_new.astype(jnp.bfloat16)        # dropout=0 -> identity
            top_h[tt] = new_hs[-1]                    # top-layer hidden (f32)
            return tuple(new_hs)

        hs = lax.fori_loop(0, t_chunk, step, hs0, unroll=unroll)

        # Write carried states back to the resident scratch once per chunk.
        for i in range(n_layers):
            h_state[i] = hs[i]

        # In-kernel output projection: one (t_chunk*TB, H_pad) @ (H_pad, O_pad)
        # GEMM per chunk (lane-dense store, no extra HBM round trip).
        top = top_h[...].astype(jnp.bfloat16).reshape(t_chunk * tb, h_pad)
        y = jnp.dot(top, wy_ref[...], preferred_element_type=jnp.float32)
        y = y + jnp.broadcast_to(by_ref[...], (t_chunk * tb, o_pad))
        y_ref[...] = y.reshape(t_chunk, tb, o_pad).astype(y_ref.dtype)

        # Final hidden state written once at the last time chunk.
        @pl.when(tc == pl.num_programs(1) - 1)
        def _():
            hout_ref[...] = h_state[...].astype(hout_ref.dtype)

    return kernel


def _vmem_limit_bytes():
    """Per-generation VMEM budget: ~80% of physical, capped at 100 MiB."""
    try:
        cap = pltpu.get_tpu_info().vmem_capacity_bytes
    except Exception:
        cap = 64 * 1024 * 1024          # conservative fallback (safe on v7x)
    return int(min(cap * 8 // 10, 100 * 1024 * 1024))


def multilayer_gru_pallas(x, h0, layer_params, wy, by, *, t_chunk=None):
    """x: (B,S,I), h0: (B,L,H). layer_params[i] = (Wxz,Wxr,Wxg,Whz,Whr,Whg,bz,br,bg)
    with Wx*: (D_in_i, H), Wh*: (H, H), b*: (1, H). wy: (H, O), by: (1, O)."""
    B, S, I = x.shape
    _, L, H = h0.shape
    O = wy.shape[1]
    dtype = x.dtype

    def rup(a, m):
        return ((a + m - 1) // m) * m

    H_pad = rup(H, 128)                 # lane-align gate slices & stores
    O_pad = rup(O, 128)                 # lane-dense output store
    TB = min(128, rup(B, 8))            # MXU-row fill vs. padding waste
    B_pad = rup(B, TB)
    if t_chunk is None:
        t_chunk = min(S, 64)
    S_pad = rup(S, t_chunk)
    mask_tail = (S_pad != S)
    unroll = max(1, min(8, t_chunk))

    # Time-major, batch-padded input (S_pad, B_pad, I).
    x_tm = jnp.transpose(x, (1, 0, 2))
    x_tm = jnp.pad(x_tm, ((0, S_pad - S), (0, B_pad - B), (0, 0)))
    # Layer-major, padded hidden state (L, B_pad, H_pad). Zero lane/batch
    # padding is exact: padded lanes stay identically zero through the GRU.
    h0_lm = jnp.transpose(h0, (1, 0, 2)).astype(jnp.float32)
    h0_lm = jnp.pad(h0_lm, ((0, 0), (0, B_pad - B), (0, H_pad - H)))

    def pad2(a, rows, cols):
        return jnp.pad(a, ((0, rows - a.shape[0]), (0, cols - a.shape[1])))

    # Fuse + pad gate weights in the wrapper; bf16 matmul operands, f32 biases.
    fused = []
    for li, (wxz, wxr, wxg, whz, whr, whg, bz, br, bg) in enumerate(layer_params):
        d_in = wxz.shape[0]
        d_in_p = d_in if li == 0 else H_pad
        fused.append((
            jnp.concatenate([pad2(wxz, d_in_p, H_pad),
                             pad2(wxr, d_in_p, H_pad),
                             pad2(wxg, d_in_p, H_pad)],
                            axis=1).astype(jnp.bfloat16),          # (D_in, 3H_pad)
            jnp.concatenate([pad2(whz, H_pad, H_pad),
                             pad2(whr, H_pad, H_pad)],
                            axis=1).astype(jnp.bfloat16),          # (H_pad, 2H_pad)
            jnp.concatenate([pad2(bz, 1, H_pad), pad2(br, 1, H_pad)],
                            axis=1).astype(jnp.float32),           # (1, 2H_pad)
            pad2(whg, H_pad, H_pad).astype(jnp.bfloat16),          # (H_pad, H_pad)
            pad2(bg, 1, H_pad).astype(jnp.float32),                # (1, H_pad)
        ))
    wy_p = pad2(wy, H_pad, O_pad).astype(jnp.bfloat16)
    by_p = pad2(by, 1, O_pad).astype(jnp.float32)

    n_bblk = B_pad // TB
    n_tchunk = S_pad // t_chunk

    def const_spec(arr):
        zeros = (0,) * arr.ndim
        # Weights never change block index -> single buffer (saves VMEM).
        return pl.BlockSpec(arr.shape, lambda bb, tc: zeros,
                            pipeline_mode=pl.Buffered(1))

    in_specs = [
        pl.BlockSpec((t_chunk, TB, I), lambda bb, tc: (tc, bb, 0)),   # x chunk
        pl.BlockSpec((L, TB, H_pad), lambda bb, tc: (0, bb, 0)),      # h0 block
    ]
    flat_inputs = [x_tm, h0_lm]
    for p in fused:
        for w in p:
            in_specs.append(const_spec(w))
            flat_inputs.append(w)
    in_specs += [const_spec(wy_p), const_spec(by_p)]
    flat_inputs += [wy_p, by_p]

    out_shape = (
        jax.ShapeDtypeStruct((S_pad, B_pad, O_pad), dtype),   # projected outputs
        jax.ShapeDtypeStruct((L, B_pad, H_pad), dtype),       # final hidden state
    )
    out_specs = (
        pl.BlockSpec((t_chunk, TB, O_pad), lambda bb, tc: (tc, bb, 0)),
        pl.BlockSpec((L, TB, H_pad), lambda bb, tc: (0, bb, 0)),
    )

    grid_spec = pltpu.PrefetchScalarGridSpec(
        num_scalar_prefetch=0,
        grid=(n_bblk, n_tchunk),          # batch parallel, time sequential
        in_specs=in_specs,
        out_specs=out_specs,
        scratch_shapes=[
            pltpu.VMEM((L, TB, H_pad), jnp.float32),          # resident h state
            pltpu.VMEM((t_chunk, TB, H_pad), jnp.float32),    # top-layer h chunk
        ],
    )

    y_tm, h_final_lm = pl.pallas_call(
        _make_gru_kernel(L, t_chunk, S, mask_tail, unroll),
        out_shape=out_shape,
        grid_spec=grid_spec,
        compiler_params=pltpu.CompilerParams(
            dimension_semantics=("parallel", "arbitrary"),
            vmem_limit_bytes=_vmem_limit_bytes(),
        ),
    )(*flat_inputs)

    # Strip padding, back to batch-major.
    y = jnp.transpose(y_tm[:S, :B, :O], (1, 0, 2))              # (B, S, O)
    h_final = jnp.transpose(h_final_lm[:, :B, :H], (1, 0, 2))   # (B, L, H)
    return y, h_final


def multilayer_gru_ref(x, h0, layer_params, wy, by):
    """Pure-JAX reference matching the PyTorch forward exactly (all f32)."""
    B, S, _ = x.shape
    L = len(layer_params)
    h = [h0[:, i, :] for i in range(L)]
    outs = []
    for t in range(S):
        xt = x[:, t, :]
        for i in range(L):
            wxz, wxr, wxg, whz, whr, whg, bz, br, bg = layer_params[i]
            z = jax.nn.sigmoid(xt @ wxz + h[i] @ whz + bz)
            r = jax.nn.sigmoid(xt @ wxr + h[i] @ whr + br)
            g = jnp.tanh(xt @ wxg + (r * h[i]) @ whg + bg)
            h[i] = z * h[i] + (1.0 - z) * g
            xt = h[i]
        outs.append(xt @ wy + by)
    return jnp.stack(outs, axis=1), jnp.stack(h, axis=1)


if __name__ == "__main__":
    # Small shapes consistent with the module: (B, S, I) input, L layers, H hidden, O output.
    B, S, I, H, O, L = 2, 8, 16, 32, 16, 2

    key = jax.random.PRNGKey(0)
    keys = iter(jax.random.split(key, 64))

    def init(shape, scale=0.1):
        return scale * jax.random.normal(next(keys), shape, dtype=jnp.float32)

    layer_params = []
    for layer in range(L):
        d_in = I if layer == 0 else H
        layer_params.append((
            init((d_in, H)),   # Wxz (pre-transposed, no bias)
            init((d_in, H)),   # Wxr
            init((d_in, H)),   # Wxg
            init((H, H)),      # Whz
            init((H, H)),      # Whr
            init((H, H)),      # Whg
            init((1, H)),      # bz
            init((1, H)),      # br
            init((1, H)),      # bg
        ))
    wy = init((H, O))
    by = init((1, O))

    x = jax.random.normal(next(keys), (B, S, I), dtype=jnp.float32)
    h0 = jax.random.normal(next(keys), (B, L, H), dtype=jnp.float32)

    y, h_final = multilayer_gru_pallas(x, h0, layer_params, wy, by)
    jax.block_until_ready((y, h_final))

    y_ref, h_ref = multilayer_gru_ref(x, h0, layer_params, wy, by)
    assert y.shape == (B, S, O) and h_final.shape == (B, L, H)
    # bf16 MXU operands (f32 accumulation) -> loosened tolerance vs. all-f32 ref.
    assert jnp.allclose(y, y_ref, atol=2e-2, rtol=2e-2)
    assert jnp.allclose(h_final, h_ref, atol=2e-2, rtol=2e-2)

    print("KERNEL_OK")
</pallas_src>

<mosaic_0001>
module attributes {stable_mosaic.version = 11 : i64} {
  func.func @kernel(%arg0: i32, %arg1: i32, %arg2: memref<8x8x16xf32, #tpu.memory_space<vmem>>, %arg3: memref<2x8x128xf32, #tpu.memory_space<vmem>>, %arg4: memref<16x384xbf16, #tpu.memory_space<vmem>>, %arg5: memref<128x256xbf16, #tpu.memory_space<vmem>>, %arg6: memref<1x256xf32, #tpu.memory_space<vmem>>, %arg7: memref<128x128xbf16, #tpu.memory_space<vmem>>, %arg8: memref<1x128xf32, #tpu.memory_space<vmem>>, %arg9: memref<128x384xbf16, #tpu.memory_space<vmem>>, %arg10: memref<128x256xbf16, #tpu.memory_space<vmem>>, %arg11: memref<1x256xf32, #tpu.memory_space<vmem>>, %arg12: memref<128x128xbf16, #tpu.memory_space<vmem>>, %arg13: memref<1x128xf32, #tpu.memory_space<vmem>>, %arg14: memref<128x128xbf16, #tpu.memory_space<vmem>>, %arg15: memref<1x128xf32, #tpu.memory_space<vmem>>, %arg16: memref<8x8x128xf32, #tpu.memory_space<vmem>>, %arg17: memref<2x8x128xf32, #tpu.memory_space<vmem>>, %arg18: memref<2x8x128xf32, #tpu.memory_space<vmem>>, %arg19: memref<8x8x128xf32, #tpu.memory_space<vmem>>) attributes {dimension_semantics = [#tpu.dimension_semantics<parallel>, #tpu.dimension_semantics<arbitrary>], iteration_bounds = array<i64: 1, 1>, scalar_prefetch = 0 : i64, scratch_operands = 2 : i64, tpu.core_type = #tpu.core_type<tc>, window_params = [{transform_indices = @transform_0, window_bounds = array<i64: 8, 8, 16>}, {transform_indices = @transform_1, window_bounds = array<i64: 2, 8, 128>}, {pipeline_mode = #tpu.pipeline_mode<synchronous>, transform_indices = @transform_2, window_bounds = array<i64: 16, 384>}, {pipeline_mode = #tpu.pipeline_mode<synchronous>, transform_indices = @transform_3, window_bounds = array<i64: 128, 256>}, {pipeline_mode = #tpu.pipeline_mode<synchronous>, transform_indices = @transform_4, window_bounds = array<i64: 1, 256>}, {pipeline_mode = #tpu.pipeline_mode<synchronous>, transform_indices = @transform_5, window_bounds = array<i64: 128, 128>}, {pipeline_mode = #tpu.pipeline_mode<synchronous>, transform_indices = @transform_6, window_bounds = array<i64: 1, 128>}, {pipeline_mode = #tpu.pipeline_mode<synchronous>, transform_indices = @transform_7, window_bounds = array<i64: 128, 384>}, {pipeline_mode = #tpu.pipeline_mode<synchronous>, transform_indices = @transform_8, window_bounds = array<i64: 128, 256>}, {pipeline_mode = #tpu.pipeline_mode<synchronous>, transform_indices = @transform_9, window_bounds = array<i64: 1, 256>}, {pipeline_mode = #tpu.pipeline_mode<synchronous>, transform_indices = @transform_10, window_bounds = array<i64: 128, 128>}, {pipeline_mode = #tpu.pipeline_mode<synchronous>, transform_indices = @transform_11, window_bounds = array<i64: 1, 128>}, {pipeline_mode = #tpu.pipeline_mode<synchronous>, transform_indices = @transform_12, window_bounds = array<i64: 128, 128>}, {pipeline_mode = #tpu.pipeline_mode<synchronous>, transform_indices = @transform_13, window_bounds = array<i64: 1, 128>}, {transform_indices = @transform_14, window_bounds = array<i64: 8, 8, 128>}, {transform_indices = @transform_15, window_bounds = array<i64: 2, 8, 128>}]} {
    %c0_i32 = arith.constant 0 : i32
    %0 = arith.cmpi eq, %arg1, %c0_i32 : i32
    %1 = arith.extui %0 : i1 to i32
    %c0_i32_0 = arith.constant 0 : i32
    %2 = arith.cmpi ne, %1, %c0_i32_0 : i32
    scf.if %2 {
      %c0_172 = arith.constant 0 : index
      %c0_173 = arith.constant 0 : index
      %c0_174 = arith.constant 0 : index
      %629 = vector.load %arg3[%c0_172, %c0_173, %c0_174] : memref<2x8x128xf32, #tpu.memory_space<vmem>>, vector<2x8x128xf32>
      %c0_175 = arith.constant 0 : index
      %c0_176 = arith.constant 0 : index
      %c0_177 = arith.constant 0 : index
      %630 = vector.load %arg18[%c0_175, %c0_176, %c0_177] : memref<2x8x128xf32, #tpu.memory_space<vmem>>, vector<2x8x128xf32>
      tpu.vector_store %arg18[%c0_175, %c0_176, %c0_177], %629 {strides = array<i32>} : memref<2x8x128xf32, #tpu.memory_space<vmem>>, vector<2x8x128xf32>,
    } else {
    }
    %c0 = arith.constant 0 : index
    %c0_1 = arith.constant 0 : index
    %3 = vector.load %arg4[%c0, %c0_1] : memref<16x384xbf16, #tpu.memory_space<vmem>>, vector<16x384xbf16>
    %c0_2 = arith.constant 0 : index
    %c0_3 = arith.constant 0 : index
    %4 = vector.load %arg5[%c0_2, %c0_3] : memref<128x256xbf16, #tpu.memory_space<vmem>>, vector<128x256xbf16>
    %c0_4 = arith.constant 0 : index
    %c0_5 = arith.constant 0 : index
    %5 = vector.load %arg6[%c0_4, %c0_5] : memref<1x256xf32, #tpu.memory_space<vmem>>, vector<1x256xf32>
    %6 = vector.shape_cast %5 : vector<1x256xf32> to vector<1x256xf32>
    %7 = vector.broadcast %6 : vector<1x256xf32> to vector<8x256xf32>
    %c0_6 = arith.constant 0 : index
    %c0_7 = arith.constant 0 : index
    %8 = vector.load %arg7[%c0_6, %c0_7] : memref<128x128xbf16, #tpu.memory_space<vmem>>, vector<128x128xbf16>
    %c0_8 = arith.constant 0 : index
    %c0_9 = arith.constant 0 : index
    %9 = vector.load %arg8[%c0_8, %c0_9] : memref<1x128xf32, #tpu.memory_space<vmem>>, vector<1x128xf32>
    %10 = vector.shape_cast %9 : vector<1x128xf32> to vector<1x128xf32>
    %11 = vector.broadcast %10 : vector<1x128xf32> to vector<8x128xf32>
    %c0_10 = arith.constant 0 : index
    %c0_11 = arith.constant 0 : index
    %12 = vector.load %arg9[%c0_10, %c0_11] : memref<128x384xbf16, #tpu.memory_space<vmem>>, vector<128x384xbf16>
    %c0_12 = arith.constant 0 : index
    %c0_13 = arith.constant 0 : index
    %13 = vector.load %arg10[%c0_12, %c0_13] : memref<128x256xbf16, #tpu.memory_space<vmem>>, vector<128x256xbf16>
    %c0_14 = arith.constant 0 : index
    %c0_15 = arith.constant 0 : index
    %14 = vector.load %arg11[%c0_14, %c0_15] : memref<1x256xf32, #tpu.memory_space<vmem>>, vector<1x256xf32>
    %15 = vector.shape_cast %14 : vector<1x256xf32> to vector<1x256xf32>
    %16 = vector.broadcast %15 : vector<1x256xf32> to vector<8x256xf32>
    %c0_16 = arith.constant 0 : index
    %c0_17 = arith.constant 0 : index
    %17 = vector.load %arg12[%c0_16, %c0_17] : memref<128x128xbf16, #tpu.memory_space<vmem>>, vector<128x128xbf16>
    %c0_18 = arith.constant 0 : index
    %c0_19 = arith.constant 0 : index
    %18 = vector.load %arg13[%c0_18, %c0_19] : memref<1x128xf32, #tpu.memory_space<vmem>>, vector<1x128xf32>
    %19 = vector.shape_cast %18 : vector<1x128xf32> to vector<1x128xf32>
    %20 = vector.broadcast %19 : vector<1x128xf32> to vector<8x128xf32>
    %c0_20 = arith.constant 0 : index
    %c0_21 = arith.constant 0 : index
    %c0_22 = arith.constant 0 : index
    %21 = vector.load %arg18[%c0_20, %c0_21, %c0_22] : memref<2x8x128xf32, #tpu.memory_space<vmem>>, vector<1x8x128xf32>
    %22 = vector.shape_cast %21 : vector<1x8x128xf32> to vector<8x128xf32>
    %c1 = arith.constant 1 : index
    %c0_23 = arith.constant 0 : index
    %c0_24 = arith.constant 0 : index
    %23 = vector.load %arg18[%c1, %c0_23, %c0_24] : memref<2x8x128xf32, #tpu.memory_space<vmem>>, vector<1x8x128xf32>
    %24 = vector.shape_cast %23 : vector<1x8x128xf32> to vector<8x128xf32>
    %c0_i32_25 = arith.constant 0 : i32
    %25 = arith.index_cast %c0_i32_25 : i32 to index
    %c0_26 = arith.constant 0 : index
    %c0_27 = arith.constant 0 : index
    %26 = vector.load %arg2[%25, %c0_26, %c0_27] : memref<8x8x16xf32, #tpu.memory_space<vmem>>, vector<1x8x16xf32>
    %27 = vector.shape_cast %26 : vector<1x8x16xf32> to vector<8x16xf32>
    %28 = arith.truncf %27 : vector<8x16xf32> to vector<8x16xbf16>
    %cst = arith.constant dense<0.000000e+00> : vector<8x384xf32>
    %29 = tpu.matmul %28, %3, %cst {dimension_numbers = #tpu.dot_dimension_numbers<[1], [0], [0], [1], [0, 0, 1, 1], [], []>} : vector<8x16xbf16>, vector<16x384xbf16>, vector<8x384xf32> -> vector<8x384xf32>
    %30 = arith.truncf %22 : vector<8x128xf32> to vector<8x128xbf16>
    %cst_28 = arith.constant dense<0.000000e+00> : vector<8x256xf32>
    %31 = tpu.matmul %30, %4, %cst_28 {dimension_numbers = #tpu.dot_dimension_numbers<[1], [0], [0], [1], [0, 0, 1, 1], [], []>} : vector<8x128xbf16>, vector<128x256xbf16>, vector<8x256xf32> -> vector<8x256xf32>
    %32 = arith.addf %31, %7 : vector<8x256xf32>
    %33 = vector.extract_strided_slice %29 {offsets = [0, 0], sizes = [8, 128], strides = [1, 1]} : vector<8x384xf32> to vector<8x128xf32>
    %34 = vector.extract_strided_slice %32 {offsets = [0, 0], sizes = [8, 128], strides = [1, 1]} : vector<8x256xf32> to vector<8x128xf32>
    %35 = arith.addf %33, %34 : vector<8x128xf32>
    %36 = arith.negf %35 : vector<8x128xf32>
    %37 = math.exp %36 : vector<8x128xf32>
    %cst_29 = arith.constant 1.000000e+00 : f32
    %38 = vector.broadcast %cst_29 : f32 to vector<8x128xf32>
    %39 = arith.addf %38, %37 : vector<8x128xf32>
    %40 = arith.divf %38, %39 : vector<8x128xf32>
    %41 = vector.extract_strided_slice %29 {offsets = [0, 128], sizes = [8, 128], strides = [1, 1]} : vector<8x384xf32> to vector<8x128xf32>
    %42 = vector.extract_strided_slice %32 {offsets = [0, 128], sizes = [8, 128], strides = [1, 1]} : vector<8x256xf32> to vector<8x128xf32>
    %43 = arith.addf %41, %42 : vector<8x128xf32>
    %44 = arith.negf %43 : vector<8x128xf32>
    %45 = math.exp %44 : vector<8x128xf32>
    %cst_30 = arith.constant 1.000000e+00 : f32
    %46 = vector.broadcast %cst_30 : f32 to vector<8x128xf32>
    %47 = arith.addf %46, %45 : vector<8x128xf32>
    %48 = arith.divf %46, %47 : vector<8x128xf32>
    %49 = vector.extract_strided_slice %29 {offsets = [0, 256], sizes = [8, 128], strides = [1, 1]} : vector<8x384xf32> to vector<8x128xf32>
    %50 = arith.mulf %48, %22 : vector<8x128xf32>
    %51 = arith.truncf %50 : vector<8x128xf32> to vector<8x128xbf16>
    %cst_31 = arith.constant dense<0.000000e+00> : vector<8x128xf32>
    %52 = tpu.matmul %51, %8, %cst_31 {dimension_numbers = #tpu.dot_dimension_numbers<[1], [0], [0], [1], [0, 0, 1, 1], [], []>} : vector<8x128xbf16>, vector<128x128xbf16>, vector<8x128xf32> -> vector<8x128xf32>
    %53 = arith.addf %49, %52 : vector<8x128xf32>
    %54 = arith.addf %53, %11 : vector<8x128xf32>
    %55 = math.tanh %54 : vector<8x128xf32>
    %56 = arith.mulf %40, %22 : vector<8x128xf32>
    %cst_32 = arith.constant 1.000000e+00 : f32
    %57 = vector.broadcast %cst_32 : f32 to vector<8x128xf32>
    %58 = arith.subf %57, %40 : vector<8x128xf32>
    %59 = arith.mulf %58, %55 : vector<8x128xf32>
    %60 = arith.addf %56, %59 : vector<8x128xf32>
    %61 = arith.truncf %60 : vector<8x128xf32> to vector<8x128xbf16>
    %cst_33 = arith.constant dense<0.000000e+00> : vector<8x384xf32>
    %62 = tpu.matmul %61, %12, %cst_33 {dimension_numbers = #tpu.dot_dimension_numbers<[1], [0], [0], [1], [0, 0, 1, 1], [], []>} : vector<8x128xbf16>, vector<128x384xbf16>, vector<8x384xf32> -> vector<8x384xf32>
    %63 = arith.truncf %24 : vector<8x128xf32> to vector<8x128xbf16>
    %cst_34 = arith.constant dense<0.000000e+00> : vector<8x256xf32>
    %64 = tpu.matmul %63, %13, %cst_34 {dimension_numbers = #tpu.dot_dimension_numbers<[1], [0], [0], [1], [0, 0, 1, 1], [], []>} : vector<8x128xbf16>, vector<128x256xbf16>, vector<8x256xf32> -> vector<8x256xf32>
    %65 = arith.addf %64, %16 : vector<8x256xf32>
    %66 = vector.extract_strided_slice %62 {offsets = [0, 0], sizes = [8, 128], strides = [1, 1]} : vector<8x384xf32> to vector<8x128xf32>
    %67 = vector.extract_strided_slice %65 {offsets = [0, 0], sizes = [8, 128], strides = [1, 1]} : vector<8x256xf32> to vector<8x128xf32>
    %68 = arith.addf %66, %67 : vector<8x128xf32>
    %69 = arith.negf %68 : vector<8x128xf32>
    %70 = math.exp %69 : vector<8x128xf32>
    %cst_35 = arith.constant 1.000000e+00 : f32
    %71 = vector.broadcast %cst_35 : f32 to vector<8x128xf32>
    %72 = arith.addf %71, %70 : vector<8x128xf32>
    %73 = arith.divf %71, %72 : vector<8x128xf32>
    %74 = vector.extract_strided_slice %62 {offsets = [0, 128], sizes = [8, 128], strides = [1, 1]} : vector<8x384xf32> to vector<8x128xf32>
    %75 = vector.extract_strided_slice %65 {offsets = [0, 128], sizes = [8, 128], strides = [1, 1]} : vector<8x256xf32> to vector<8x128xf32>
    %76 = arith.addf %74, %75 : vector<8x128xf32>
    %77 = arith.negf %76 : vector<8x128xf32>
    %78 = math.exp %77 : vector<8x128xf32>
    %cst_36 = arith.constant 1.000000e+00 : f32
    %79 = vector.broadcast %cst_36 : f32 to vector<8x128xf32>
    %80 = arith.addf %79, %78 : vector<8x128xf32>
    %81 = arith.divf %79, %80 : vector<8x128xf32>
    %82 = vector.extract_strided_slice %62 {offsets = [0, 256], sizes = [8, 128], strides = [1, 1]} : vector<8x384xf32> to vector<8x128xf32>
    %83 = arith.mulf %81, %24 : vector<8x128xf32>
    %84 = arith.truncf %83 : vector<8x128xf32> to vector<8x128xbf16>
    %cst_37 = arith.constant dense<0.000000e+00> : vector<8x128xf32>
    %85 = tpu.matmul %84, %17, %cst_37 {dimension_numbers = #tpu.dot_dimension_numbers<[1], [0], [0], [1], [0, 0, 1, 1], [], []>} : vector<8x128xbf16>, vector<128x128xbf16>, vector<8x128xf32> -> vector<8x128xf32>
    %86 = arith.addf %82, %85 : vector<8x128xf32>
    %87 = arith.addf %86, %20 : vector<8x128xf32>
    %88 = math.tanh %87 : vector<8x128xf32>
    %89 = arith.mulf %73, %24 : vector<8x128xf32>
    %cst_38 = arith.constant 1.000000e+00 : f32
    %90 = vector.broadcast %cst_38 : f32 to vector<8x128xf32>
    %91 = arith.subf %90, %73 : vector<8x128xf32>
    %92 = arith.mulf %91, %88 : vector<8x128xf32>
    %93 = arith.addf %89, %92 : vector<8x128xf32>
    %94 = arith.index_cast %c0_i32_25 : i32 to index
    %c0_39 = arith.constant 0 : index
    %c0_40 = arith.constant 0 : index
    %95 = vector.load %arg19[%94, %c0_39, %c0_40] : memref<8x8x128xf32, #tpu.memory_space<vmem>>, vector<1x8x128xf32>
    %96 = vector.shape_cast %95 : vector<1x8x128xf32> to vector<8x128xf32>
    %97 = vector.shape_cast %93 : vector<8x128xf32> to vector<1x8x128xf32>
    tpu.vector_store %arg19[%94, %c0_39, %c0_40], %97 {strides = array<i32>} : memref<8x8x128xf32, #tpu.memory_space<vmem>>, vector<1x8x128xf32>,
    %c1_i32 = arith.constant 1 : i32
    %98 = arith.index_cast %c1_i32 : i32 to index
    %c0_41 = arith.constant 0 : index
    %c0_42 = arith.constant 0 : index
    %99 = vector.load %arg2[%98, %c0_41, %c0_42] : memref<8x8x16xf32, #tpu.memory_space<vmem>>, vector<1x8x16xf32>
    %100 = vector.shape_cast %99 : vector<1x8x16xf32> to vector<8x16xf32>
    %101 = arith.truncf %100 : vector<8x16xf32> to vector<8x16xbf16>
    %cst_43 = arith.constant dense<0.000000e+00> : vector<8x384xf32>
    %102 = tpu.matmul %101, %3, %cst_43 {dimension_numbers = #tpu.dot_dimension_numbers<[1], [0], [0], [1], [0, 0, 1, 1], [], []>} : vector<8x16xbf16>, vector<16x384xbf16>, vector<8x384xf32> -> vector<8x384xf32>
    %103 = arith.truncf %60 : vector<8x128xf32> to vector<8x128xbf16>
    %cst_44 = arith.constant dense<0.000000e+00> : vector<8x256xf32>
    %104 = tpu.matmul %103, %4, %cst_44 {dimension_numbers = #tpu.dot_dimension_numbers<[1], [0], [0], [1], [0, 0, 1, 1], [], []>} : vector<8x128xbf16>, vector<128x256xbf16>, vector<8x256xf32> -> vector<8x256xf32>
    %105 = arith.addf %104, %7 : vector<8x256xf32>
    %106 = vector.extract_strided_slice %102 {offsets = [0, 0], sizes = [8, 128], strides = [1, 1]} : vector<8x384xf32> to vector<8x128xf32>
    %107 = vector.extract_strided_slice %105 {offsets = [0, 0], sizes = [8, 128], strides = [1, 1]} : vector<8x256xf32> to vector<8x128xf32>
    %108 = arith.addf %106, %107 : vector<8x128xf32>
    %109 = arith.negf %108 : vector<8x128xf32>
    %110 = math.exp %109 : vector<8x128xf32>
    %cst_45 = arith.constant 1.000000e+00 : f32
    %111 = vector.broadcast %cst_45 : f32 to vector<8x128xf32>
    %112 = arith.addf %111, %110 : vector<8x128xf32>
    %113 = arith.divf %111, %112 : vector<8x128xf32>
    %114 = vector.extract_strided_slice %102 {offsets = [0, 128], sizes = [8, 128], strides = [1, 1]} : vector<8x384xf32> to vector<8x128xf32>
    %115 = vector.extract_strided_slice %105 {offsets = [0, 128], sizes = [8, 128], strides = [1, 1]} : vector<8x256xf32> to vector<8x128xf32>
    %116 = arith.addf %114, %115 : vector<8x128xf32>
    %117 = arith.negf %116 : vector<8x128xf32>
    %118 = math.exp %117 : vector<8x128xf32>
    %cst_46 = arith.constant 1.000000e+00 : f32
    %119 = vector.broadcast %cst_46 : f32 to vector<8x128xf32>
    %120 = arith.addf %119, %118 : vector<8x128xf32>
    %121 = arith.divf %119, %120 : vector<8x128xf32>
    %122 = vector.extract_strided_slice %102 {offsets = [0, 256], sizes = [8, 128], strides = [1, 1]} : vector<8x384xf32> to vector<8x128xf32>
    %123 = arith.mulf %121, %60 : vector<8x128xf32>
    %124 = arith.truncf %123 : vector<8x128xf32> to vector<8x128xbf16>
    %cst_47 = arith.constant dense<0.000000e+00> : vector<8x128xf32>
    %125 = tpu.matmul %124, %8, %cst_47 {dimension_numbers = #tpu.dot_dimension_numbers<[1], [0], [0], [1], [0, 0, 1, 1], [], []>} : vector<8x128xbf16>, vector<128x128xbf16>, vector<8x128xf32> -> vector<8x128xf32>
    %126 = arith.addf %122, %125 : vector<8x128xf32>
    %127 = arith.addf %126, %11 : vector<8x128xf32>
    %128 = math.tanh %127 : vector<8x128xf32>
    %129 = arith.mulf %113, %60 : vector<8x128xf32>
    %cst_48 = arith.constant 1.000000e+00 : f32
    %130 = vector.broadcast %cst_48 : f32 to vector<8x128xf32>
    %131 = arith.subf %130, %113 : vector<8x128xf32>
    %132 = arith.mulf %131, %128 : vector<8x128xf32>
    %133 = arith.addf %129, %132 : vector<8x128xf32>
    %134 = arith.truncf %133 : vector<8x128xf32> to vector<8x128xbf16>
    %cst_49 = arith.constant dense<0.000000e+00> : vector<8x384xf32>
    %135 = tpu.matmul %134, %12, %cst_49 {dimension_numbers = #tpu.dot_dimension_numbers<[1], [0], [0], [1], [0, 0, 1, 1], [], []>} : vector<8x128xbf16>, vector<128x384xbf16>, vector<8x384xf32> -> vector<8x384xf32>
    %136 = arith.truncf %93 : vector<8x128xf32> to vector<8x128xbf16>
    %cst_50 = arith.constant dense<0.000000e+00> : vector<8x256xf32>
    %137 = tpu.matmul %136, %13, %cst_50 {dimension_numbers = #tpu.dot_dimension_numbers<[1], [0], [0], [1], [0, 0, 1, 1], [], []>} : vector<8x128xbf16>, vector<128x256xbf16>, vector<8x256xf32> -> vector<8x256xf32>
    %138 = arith.addf %137, %16 : vector<8x256xf32>
    %139 = vector.extract_strided_slice %135 {offsets = [0, 0], sizes = [8, 128], strides = [1, 1]} : vector<8x384xf32> to vector<8x128xf32>
    %140 = vector.extract_strided_slice %138 {offsets = [0, 0], sizes = [8, 128], strides = [1, 1]} : vector<8x256xf32> to vector<8x128xf32>
    %141 = arith.addf %139, %140 : vector<8x128xf32>
    %142 = arith.negf %141 : vector<8x128xf32>
    %143 = math.exp %142 : vector<8x128xf32>
    %cst_51 = arith.constant 1.000000e+00 : f32
    %144 = vector.broadcast %cst_51 : f32 to vector<8x128xf32>
    %145 = arith.addf %144, %143 : vector<8x128xf32>
    %146 = arith.divf %144, %145 : vector<8x128xf32>
    %147 = vector.extract_strided_slice %135 {offsets = [0, 128], sizes = [8, 128], strides = [1, 1]} : vector<8x384xf32> to vector<8x128xf32>
    %148 = vector.extract_strided_slice %138 {offsets = [0, 128], sizes = [8, 128], strides = [1, 1]} : vector<8x256xf32> to vector<8x128xf32>
    %149 = arith.addf %147, %148 : vector<8x128xf32>
    %150 = arith.negf %149 : vector<8x128xf32>
    %151 = math.exp %150 : vector<8x128xf32>
    %cst_52 = arith.constant 1.000000e+00 : f32
    %152 = vector.broadcast %cst_52 : f32 to vector<8x128xf32>
    %153 = arith.addf %152, %151 : vector<8x128xf32>
    %154 = arith.divf %152, %153 : vector<8x128xf32>
    %155 = vector.extract_strided_slice %135 {offsets = [0, 256], sizes = [8, 128], strides = [1, 1]} : vector<8x384xf32> to vector<8x128xf32>
    %156 = arith.mulf %154, %93 : vector<8x128xf32>
    %157 = arith.truncf %156 : vector<8x128xf32> to vector<8x128xbf16>
    %cst_53 = arith.constant dense<0.000000e+00> : vector<8x128xf32>
    %158 = tpu.matmul %157, %17, %cst_53 {dimension_numbers = #tpu.dot_dimension_numbers<[1], [0], [0], [1], [0, 0, 1, 1], [], []>} : vector<8x128xbf16>, vector<128x128xbf16>, vector<8x128xf32> -> vector<8x128xf32>
    %159 = arith.addf %155, %158 : vector<8x128xf32>
    %160 = arith.addf %159, %20 : vector<8x128xf32>
    %161 = math.tanh %160 : vector<8x128xf32>
    %162 = arith.mulf %146, %93 : vector<8x128xf32>
    %cst_54 = arith.constant 1.000000e+00 : f32
    %163 = vector.broadcast %cst_54 : f32 to vector<8x128xf32>
    %164 = arith.subf %163, %146 : vector<8x128xf32>
    %165 = arith.mulf %164, %161 : vector<8x128xf32>
    %166 = arith.addf %162, %165 : vector<8x128xf32>
    %167 = arith.index_cast %c1_i32 : i32 to index
    %c0_55 = arith.constant 0 : index
    %c0_56 = arith.constant 0 : index
    %168 = vector.load %arg19[%167, %c0_55, %c0_56] : memref<8x8x128xf32, #tpu.memory_space<vmem>>, vector<1x8x128xf32>
    %169 = vector.shape_cast %168 : vector<1x8x128xf32> to vector<8x128xf32>
    %170 = vector.shape_cast %166 : vector<8x128xf32> to vector<1x8x128xf32>
    tpu.vector_store %arg19[%167, %c0_55, %c0_56], %170 {strides = array<i32>} : memref<8x8x128xf32, #tpu.memory_space<vmem>>, vector<1x8x128xf32>,
    %c2_i32 = arith.constant 2 : i32
    %171 = arith.index_cast %c2_i32 : i32 to index
    %c0_57 = arith.constant 0 : index
    %c0_58 = arith.constant 0 : index
    %172 = vector.load %arg2[%171, %c0_57, %c0_58] : memref<8x8x16xf32, #tpu.memory_space<vmem>>, vector<1x8x16xf32>
    %173 = vector.shape_cast %172 : vector<1x8x16xf32> to vector<8x16xf32>
    %174 = arith.truncf %173 : vector<8x16xf32> to vector<8x16xbf16>
    %cst_59 = arith.constant dense<0.000000e+00> : vector<8x384xf32>
    %175 = tpu.matmul %174, %3, %cst_59 {dimension_numbers = #tpu.dot_dimension_numbers<[1], [0], [0], [1], [0, 0, 1, 1], [], []>} : vector<8x16xbf16>, vector<16x384xbf16>, vector<8x384xf32> -> vector<8x384xf32>
    %176 = arith.truncf %133 : vector<8x128xf32> to vector<8x128xbf16>
    %cst_60 = arith.constant dense<0.000000e+00> : vector<8x256xf32>
    %177 = tpu.matmul %176, %4, %cst_60 {dimension_numbers = #tpu.dot_dimension_numbers<[1], [0], [0], [1], [0, 0, 1, 1], [], []>} : vector<8x128xbf16>, vector<128x256xbf16>, vector<8x256xf32> -> vector<8x256xf32>
    %178 = arith.addf %177, %7 : vector<8x256xf32>
    %179 = vector.extract_strided_slice %175 {offsets = [0, 0], sizes = [8, 128], strides = [1, 1]} : vector<8x384xf32> to vector<8x128xf32>
    %180 = vector.extract_strided_slice %178 {offsets = [0, 0], sizes = [8, 128], strides = [1, 1]} : vector<8x256xf32> to vector<8x128xf32>
    %181 = arith.addf %179, %180 : vector<8x128xf32>
    %182 = arith.negf %181 : vector<8x128xf32>
    %183 = math.exp %182 : vector<8x128xf32>
    %cst_61 = arith.constant 1.000000e+00 : f32
    %184 = vector.broadcast %cst_61 : f32 to vector<8x128xf32>
    %185 = arith.addf %184, %183 : vector<8x128xf32>
    %186 = arith.divf %184, %185 : vector<8x128xf32>
    %187 = vector.extract_strided_slice %175 {offsets = [0, 128], sizes = [8, 128], strides = [1, 1]} : vector<8x384xf32> to vector<8x128xf32>
    %188 = vector.extract_strided_slice %178 {offsets = [0, 128], sizes = [8, 128], strides = [1, 1]} : vector<8x256xf32> to vector<8x128xf32>
    %189 = arith.addf %187, %188 : vector<8x128xf32>
    %190 = arith.negf %189 : vector<8x128xf32>
    %191 = math.exp %190 : vector<8x128xf32>
    %cst_62 = arith.constant 1.000000e+00 : f32
    %192 = vector.broadcast %cst_62 : f32 to vector<8x128xf32>
    %193 = arith.addf %192, %191 : vector<8x128xf32>
    %194 = arith.divf %192, %193 : vector<8x128xf32>
    %195 = vector.extract_strided_slice %175 {offsets = [0, 256], sizes = [8, 128], strides = [1, 1]} : vector<8x384xf32> to vector<8x128xf32>
    %196 = arith.mulf %194, %133 : vector<8x128xf32>
    %197 = arith.truncf %196 : vector<8x128xf32> to vector<8x128xbf16>
    %cst_63 = arith.constant dense<0.000000e+00> : vector<8x128xf32>
    %198 = tpu.matmul %197, %8, %cst_63 {dimension_numbers = #tpu.dot_dimension_numbers<[1], [0], [0], [1], [0, 0, 1, 1], [], []>} : vector<8x128xbf16>, vector<128x128xbf16>, vector<8x128xf32> -> vector<8x128xf32>
    %199 = arith.addf %195, %198 : vector<8x128xf32>
    %200 = arith.addf %199, %11 : vector<8x128xf32>
    %201 = math.tanh %200 : vector<8x128xf32>
    %202 = arith.mulf %186, %133 : vector<8x128xf32>
    %cst_64 = arith.constant 1.000000e+00 : f32
    %203 = vector.broadcast %cst_64 : f32 to vector<8x128xf32>
    %204 = arith.subf %203, %186 : vector<8x128xf32>
    %205 = arith.mulf %204, %201 : vector<8x128xf32>
    %206 = arith.addf %202, %205 : vector<8x128xf32>
    %207 = arith.truncf %206 : vector<8x128xf32> to vector<8x128xbf16>
    %cst_65 = arith.constant dense<0.000000e+00> : vector<8x384xf32>
    %208 = tpu.matmul %207, %12, %cst_65 {dimension_numbers = #tpu.dot_dimension_numbers<[1], [0], [0], [1], [0, 0, 1, 1], [], []>} : vector<8x128xbf16>, vector<128x384xbf16>, vector<8x384xf32> -> vector<8x384xf32>
    %209 = arith.truncf %166 : vector<8x128xf32> to vector<8x128xbf16>
    %cst_66 = arith.constant dense<0.000000e+00> : vector<8x256xf32>
    %210 = tpu.matmul %209, %13, %cst_66 {dimension_numbers = #tpu.dot_dimension_numbers<[1], [0], [0], [1], [0, 0, 1, 1], [], []>} : vector<8x128xbf16>, vector<128x256xbf16>, vector<8x256xf32> -> vector<8x256xf32>
    %211 = arith.addf %210, %16 : vector<8x256xf32>
    %212 = vector.extract_strided_slice %208 {offsets = [0, 0], sizes = [8, 128], strides = [1, 1]} : vector<8x384xf32> to vector<8x128xf32>
    %213 = vector.extract_strided_slice %211 {offsets = [0, 0], sizes = [8, 128], strides = [1, 1]} : vector<8x256xf32> to vector<8x128xf32>
    %214 = arith.addf %212, %213 : vector<8x128xf32>
    %215 = arith.negf %214 : vector<8x128xf32>
    %216 = math.exp %215 : vector<8x128xf32>
    %cst_67 = arith.constant 1.000000e+00 : f32
    %217 = vector.broadcast %cst_67 : f32 to vector<8x128xf32>
    %218 = arith.addf %217, %216 : vector<8x128xf32>
    %219 = arith.divf %217, %218 : vector<8x128xf32>
    %220 = vector.extract_strided_slice %208 {offsets = [0, 128], sizes = [8, 128], strides = [1, 1]} : vector<8x384xf32> to vector<8x128xf32>
    %221 = vector.extract_strided_slice %211 {offsets = [0, 128], sizes = [8, 128], strides = [1, 1]} : vector<8x256xf32> to vector<8x128xf32>
    %222 = arith.addf %220, %221 : vector<8x128xf32>
    %223 = arith.negf %222 : vector<8x128xf32>
    %224 = math.exp %223 : vector<8x128xf32>
    %cst_68 = arith.constant 1.000000e+00 : f32
    %225 = vector.broadcast %cst_68 : f32 to vector<8x128xf32>
    %226 = arith.addf %225, %224 : vector<8x128xf32>
    %227 = arith.divf %225, %226 : vector<8x128xf32>
    %228 = vector.extract_strided_slice %208 {offsets = [0, 256], sizes = [8, 128], strides = [1, 1]} : vector<8x384xf32> to vector<8x128xf32>
    %229 = arith.mulf %227, %166 : vector<8x128xf32>
    %230 = arith.truncf %229 : vector<8x128xf32> to vector<8x128xbf16>
    %cst_69 = arith.constant dense<0.000000e+00> : vector<8x128xf32>
    %231 = tpu.matmul %230, %17, %cst_69 {dimension_numbers = #tpu.dot_dimension_numbers<[1], [0], [0], [1], [0, 0, 1, 1], [], []>} : vector<8x128xbf16>, vector<128x128xbf16>, vector<8x128xf32> -> vector<8x128xf32>
    %232 = arith.addf %228, %231 : vector<8x128xf32>
    %233 = arith.addf %232, %20 : vector<8x128xf32>
    %234 = math.tanh %233 : vector<8x128xf32>
    %235 = arith.mulf %219, %166 : vector<8x128xf32>
    %cst_70 = arith.constant 1.000000e+00 : f32
    %236 = vector.broadcast %cst_70 : f32 to vector<8x128xf32>
    %237 = arith.subf %236, %219 : vector<8x128xf32>
    %238 = arith.mulf %237, %234 : vector<8x128xf32>
    %239 = arith.addf %235, %238 : vector<8x128xf32>
    %240 = arith.index_cast %c2_i32 : i32 to index
    %c0_71 = arith.constant 0 : index
    %c0_72 = arith.constant 0 : index
    %241 = vector.load %arg19[%240, %c0_71, %c0_72] : memref<8x8x128xf32, #tpu.memory_space<vmem>>, vector<1x8x128xf32>
    %242 = vector.shape_cast %241 : vector<1x8x128xf32> to vector<8x128xf32>
    %243 = vector.shape_cast %239 : vector<8x128xf32> to vector<1x8x128xf32>
    tpu.vector_store %arg19[%240, %c0_71, %c0_72], %243 {strides = array<i32>} : memref<8x8x128xf32, #tpu.memory_space<vmem>>, vector<1x8x128xf32>,
    %c3_i32 = arith.constant 3 : i32
    %244 = arith.index_cast %c3_i32 : i32 to index
    %c0_73 = arith.constant 0 : index
    %c0_74 = arith.constant 0 : index
    %245 = vector.load %arg2[%244, %c0_73, %c0_74] : memref<8x8x16xf32, #tpu.memory_space<vmem>>, vector<1x8x16xf32>
    %246 = vector.shape_cast %245 : vector<1x8x16xf32> to vector<8x16xf32>
    %247 = arith.truncf %246 : vector<8x16xf32> to vector<8x16xbf16>
    %cst_75 = arith.constant dense<0.000000e+00> : vector<8x384xf32>
    %248 = tpu.matmul %247, %3, %cst_75 {dimension_numbers = #tpu.dot_dimension_numbers<[1], [0], [0], [1], [0, 0, 1, 1], [], []>} : vector<8x16xbf16>, vector<16x384xbf16>, vector<8x384xf32> -> vector<8x384xf32>
    %249 = arith.truncf %206 : vector<8x128xf32> to vector<8x128xbf16>
    %cst_76 = arith.constant dense<0.000000e+00> : vector<8x256xf32>
    %250 = tpu.matmul %249, %4, %cst_76 {dimension_numbers = #tpu.dot_dimension_numbers<[1], [0], [0], [1], [0, 0, 1, 1], [], []>} : vector<8x128xbf16>, vector<128x256xbf16>, vector<8x256xf32> -> vector<8x256xf32>
    %251 = arith.addf %250, %7 : vector<8x256xf32>
    %252 = vector.extract_strided_slice %248 {offsets = [0, 0], sizes = [8, 128], strides = [1, 1]} : vector<8x384xf32> to vector<8x128xf32>
    %253 = vector.extract_strided_slice %251 {offsets = [0, 0], sizes = [8, 128], strides = [1, 1]} : vector<8x256xf32> to vector<8x128xf32>
    %254 = arith.addf %252, %253 : vector<8x128xf32>
    %255 = arith.negf %254 : vector<8x128xf32>
    %256 = math.exp %255 : vector<8x128xf32>
    %cst_77 = arith.constant 1.000000e+00 : f32
    %257 = vector.broadcast %cst_77 : f32 to vector<8x128xf32>
    %258 = arith.addf %257, %256 : vector<8x128xf32>
    %259 = arith.divf %257, %258 : vector<8x128xf32>
    %260 = vector.extract_strided_slice %248 {offsets = [0, 128], sizes = [8, 128], strides = [1, 1]} : vector<8x384xf32> to vector<8x128xf32>
    %261 = vector.extract_strided_slice %251 {offsets = [0, 128], sizes = [8, 128], strides = [1, 1]} : vector<8x256xf32> to vector<8x128xf32>
    %262 = arith.addf %260, %261 : vector<8x128xf32>
    %263 = arith.negf %262 : vector<8x128xf32>
    %264 = math.exp %263 : vector<8x128xf32>
    %cst_78 = arith.constant 1.000000e+00 : f32
    %265 = vector.broadcast %cst_78 : f32 to vector<8x128xf32>
    %266 = arith.addf %265, %264 : vector<8x128xf32>
    %267 = arith.divf %265, %266 : vector<8x128xf32>
    %268 = vector.extract_strided_slice %248 {offsets = [0, 256], sizes = [8, 128], strides = [1, 1]} : vector<8x384xf32> to vector<8x128xf32>
    %269 = arith.mulf %267, %206 : vector<8x128xf32>
    %270 = arith.truncf %269 : vector<8x128xf32> to vector<8x128xbf16>
    %cst_79 = arith.constant dense<0.000000e+00> : vector<8x128xf32>
    %271 = tpu.matmul %270, %8, %cst_79 {dimension_numbers = #tpu.dot_dimension_numbers<[1], [0], [0], [1], [0, 0, 1, 1], [], []>} : vector<8x128xbf16>, vector<128x128xbf16>, vector<8x128xf32> -> vector<8x128xf32>
    %272 = arith.addf %268, %271 : vector<8x128xf32>
    %273 = arith.addf %272, %11 : vector<8x128xf32>
    %274 = math.tanh %273 : vector<8x128xf32>
    %275 = arith.mulf %259, %206 : vector<8x128xf32>
    %cst_80 = arith.constant 1.000000e+00 : f32
    %276 = vector.broadcast %cst_80 : f32 to vector<8x128xf32>
    %277 = arith.subf %276, %259 : vector<8x128xf32>
    %278 = arith.mulf %277, %274 : vector<8x128xf32>
    %279 = arith.addf %275, %278 : vector<8x128xf32>
    %280 = arith.truncf %279 : vector<8x128xf32> to vector<8x128xbf16>
    %cst_81 = arith.constant dense<0.000000e+00> : vector<8x384xf32>
    %281 = tpu.matmul %280, %12, %cst_81 {dimension_numbers = #tpu.dot_dimension_numbers<[1], [0], [0], [1], [0, 0, 1, 1], [], []>} : vector<8x128xbf16>, vector<128x384xbf16>, vector<8x384xf32> -> vector<8x384xf32>
    %282 = arith.truncf %239 : vector<8x128xf32> to vector<8x128xbf16>
    %cst_82 = arith.constant dense<0.000000e+00> : vector<8x256xf32>
    %283 = tpu.matmul %282, %13, %cst_82 {dimension_numbers = #tpu.dot_dimension_numbers<[1], [0], [0], [1], [0, 0, 1, 1], [], []>} : vector<8x128xbf16>, vector<128x256xbf16>, vector<8x256xf32> -> vector<8x256xf32>
    %284 = arith.addf %283, %16 : vector<8x256xf32>
    %285 = vector.extract_strided_slice %281 {offsets = [0, 0], sizes = [8, 128], strides = [1, 1]} : vector<8x384xf32> to vector<8x128xf32>
    %286 = vector.extract_strided_slice %284 {offsets = [0, 0], sizes = [8, 128], strides = [1, 1]} : vector<8x256xf32> to vector<8x128xf32>
    %287 = arith.addf %285, %286 : vector<8x128xf32>
    %288 = arith.negf %287 : vector<8x128xf32>
    %289 = math.exp %288 : vector<8x128xf32>
    %cst_83 = arith.constant 1.000000e+00 : f32
    %290 = vector.broadcast %cst_83 : f32 to vector<8x128xf32>
    %291 = arith.addf %290, %289 : vector<8x128xf32>
    %292 = arith.divf %290, %291 : vector<8x128xf32>
    %293 = vector.extract_strided_slice %281 {offsets = [0, 128], sizes = [8, 128], strides = [1, 1]} : vector<8x384xf32> to vector<8x128xf32>
    %294 = vector.extract_strided_slice %284 {offsets = [0, 128], sizes = [8, 128], strides = [1, 1]} : vector<8x256xf32> to vector<8x128xf32>
    %295 = arith.addf %293, %294 : vector<8x128xf32>
    %296 = arith.negf %295 : vector<8x128xf32>
    %297 = math.exp %296 : vector<8x128xf32>
    %cst_84 = arith.constant 1.000000e+00 : f32
    %298 = vector.broadcast %cst_84 : f32 to vector<8x128xf32>
    %299 = arith.addf %298, %297 : vector<8x128xf32>
    %300 = arith.divf %298, %299 : vector<8x128xf32>
    %301 = vector.extract_strided_slice %281 {offsets = [0, 256], sizes = [8, 128], strides = [1, 1]} : vector<8x384xf32> to vector<8x128xf32>
    %302 = arith.mulf %300, %239 : vector<8x128xf32>
    %303 = arith.truncf %302 : vector<8x128xf32> to vector<8x128xbf16>
    %cst_85 = arith.constant dense<0.000000e+00> : vector<8x128xf32>
    %304 = tpu.matmul %303, %17, %cst_85 {dimension_numbers = #tpu.dot_dimension_numbers<[1], [0], [0], [1], [0, 0, 1, 1], [], []>} : vector<8x128xbf16>, vector<128x128xbf16>, vector<8x128xf32> -> vector<8x128xf32>
    %305 = arith.addf %301, %304 : vector<8x128xf32>
    %306 = arith.addf %305, %20 : vector<8x128xf32>
    %307 = math.tanh %306 : vector<8x128xf32>
    %308 = arith.mulf %292, %239 : vector<8x128xf32>
    %cst_86 = arith.constant 1.000000e+00 : f32
    %309 = vector.broadcast %cst_86 : f32 to vector<8x128xf32>
    %310 = arith.subf %309, %292 : vector<8x128xf32>
    %311 = arith.mulf %310, %307 : vector<8x128xf32>
    %312 = arith.addf %308, %311 : vector<8x128xf32>
    %313 = arith.index_cast %c3_i32 : i32 to index
    %c0_87 = arith.constant 0 : index
    %c0_88 = arith.constant 0 : index
    %314 = vector.load %arg19[%313, %c0_87, %c0_88] : memref<8x8x128xf32, #tpu.memory_space<vmem>>, vector<1x8x128xf32>
    %315 = vector.shape_cast %314 : vector<1x8x128xf32> to vector<8x128xf32>
    %316 = vector.shape_cast %312 : vector<8x128xf32> to vector<1x8x128xf32>
    tpu.vector_store %arg19[%313, %c0_87, %c0_88], %316 {strides = array<i32>} : memref<8x8x128xf32, #tpu.memory_space<vmem>>, vector<1x8x128xf32>,
    %c4_i32 = arith.constant 4 : i32
    %317 = arith.index_cast %c4_i32 : i32 to index
    %c0_89 = arith.constant 0 : index
    %c0_90 = arith.constant 0 : index
    %318 = vector.load %arg2[%317, %c0_89, %c0_90] : memref<8x8x16xf32, #tpu.memory_space<vmem>>, vector<1x8x16xf32>
    %319 = vector.shape_cast %318 : vector<1x8x16xf32> to vector<8x16xf32>
    %320 = arith.truncf %319 : vector<8x16xf32> to vector<8x16xbf16>
    %cst_91 = arith.constant dense<0.000000e+00> : vector<8x384xf32>
    %321 = tpu.matmul %320, %3, %cst_91 {dimension_numbers = #tpu.dot_dimension_numbers<[1], [0], [0], [1], [0, 0, 1, 1], [], []>} : vector<8x16xbf16>, vector<16x384xbf16>, vector<8x384xf32> -> vector<8x384xf32>
    %322 = arith.truncf %279 : vector<8x128xf32> to vector<8x128xbf16>
    %cst_92 = arith.constant dense<0.000000e+00> : vector<8x256xf32>
    %323 = tpu.matmul %322, %4, %cst_92 {dimension_numbers = #tpu.dot_dimension_numbers<[1], [0], [0], [1], [0, 0, 1, 1], [], []>} : vector<8x128xbf16>, vector<128x256xbf16>, vector<8x256xf32> -> vector<8x256xf32>
    %324 = arith.addf %323, %7 : vector<8x256xf32>
    %325 = vector.extract_strided_slice %321 {offsets = [0, 0], sizes = [8, 128], strides = [1, 1]} : vector<8x384xf32> to vector<8x128xf32>
    %326 = vector.extract_strided_slice %324 {offsets = [0, 0], sizes = [8, 128], strides = [1, 1]} : vector<8x256xf32> to vector<8x128xf32>
    %327 = arith.addf %325, %326 : vector<8x128xf32>
    %328 = arith.negf %327 : vector<8x128xf32>
    %329 = math.exp %328 : vector<8x128xf32>
    %cst_93 = arith.constant 1.000000e+00 : f32
    %330 = vector.broadcast %cst_93 : f32 to vector<8x128xf32>
    %331 = arith.addf %330, %329 : vector<8x128xf32>
    %332 = arith.divf %330, %331 : vector<8x128xf32>
    %333 = vector.extract_strided_slice %321 {offsets = [0, 128], sizes = [8, 128], strides = [1, 1]} : vector<8x384xf32> to vector<8x128xf32>
    %334 = vector.extract_strided_slice %324 {offsets = [0, 128], sizes = [8, 128], strides = [1, 1]} : vector<8x256xf32> to vector<8x128xf32>
    %335 = arith.addf %333, %334 : vector<8x128xf32>
    %336 = arith.negf %335 : vector<8x128xf32>
    %337 = math.exp %336 : vector<8x128xf32>
    %cst_94 = arith.constant 1.000000e+00 : f32
    %338 = vector.broadcast %cst_94 : f32 to vector<8x128xf32>
    %339 = arith.addf %338, %337 : vector<8x128xf32>
    %340 = arith.divf %338, %339 : vector<8x128xf32>
    %341 = vector.extract_strided_slice %321 {offsets = [0, 256], sizes = [8, 128], strides = [1, 1]} : vector<8x384xf32> to vector<8x128xf32>
    %342 = arith.mulf %340, %279 : vector<8x128xf32>
    %343 = arith.truncf %342 : vector<8x128xf32> to vector<8x128xbf16>
    %cst_95 = arith.constant dense<0.000000e+00> : vector<8x128xf32>
    %344 = tpu.matmul %343, %8, %cst_95 {dimension_numbers = #tpu.dot_dimension_numbers<[1], [0], [0], [1], [0, 0, 1, 1], [], []>} : vector<8x128xbf16>, vector<128x128xbf16>, vector<8x128xf32> -> vector<8x128xf32>
    %345 = arith.addf %341, %344 : vector<8x128xf32>
    %346 = arith.addf %345, %11 : vector<8x128xf32>
    %347 = math.tanh %346 : vector<8x128xf32>
    %348 = arith.mulf %332, %279 : vector<8x128xf32>
    %cst_96 = arith.constant 1.000000e+00 : f32
    %349 = vector.broadcast %cst_96 : f32 to vector<8x128xf32>
    %350 = arith.subf %349, %332 : vector<8x128xf32>
    %351 = arith.mulf %350, %347 : vector<8x128xf32>
    %352 = arith.addf %348, %351 : vector<8x128xf32>
    %353 = arith.truncf %352 : vector<8x128xf32> to vector<8x128xbf16>
    %cst_97 = arith.constant dense<0.000000e+00> : vector<8x384xf32>
    %354 = tpu.matmul %353, %12, %cst_97 {dimension_numbers = #tpu.dot_dimension_numbers<[1], [0], [0], [1], [0, 0, 1, 1], [], []>} : vector<8x128xbf16>, vector<128x384xbf16>, vector<8x384xf32> -> vector<8x384xf32>
    %355 = arith.truncf %312 : vector<8x128xf32> to vector<8x128xbf16>
    %cst_98 = arith.constant dense<0.000000e+00> : vector<8x256xf32>
    %356 = tpu.matmul %355, %13, %cst_98 {dimension_numbers = #tpu.dot_dimension_numbers<[1], [0], [0], [1], [0, 0, 1, 1], [], []>} : vector<8x128xbf16>, vector<128x256xbf16>, vector<8x256xf32> -> vector<8x256xf32>
    %357 = arith.addf %356, %16 : vector<8x256xf32>
    %358 = vector.extract_strided_slice %354 {offsets = [0, 0], sizes = [8, 128], strides = [1, 1]} : vector<8x384xf32> to vector<8x128xf32>
    %359 = vector.extract_strided_slice %357 {offsets = [0, 0], sizes = [8, 128], strides = [1, 1]} : vector<8x256xf32> to vector<8x128xf32>
    %360 = arith.addf %358, %359 : vector<8x128xf32>
    %361 = arith.negf %360 : vector<8x128xf32>
    %362 = math.exp %361 : vector<8x128xf32>
    %cst_99 = arith.constant 1.000000e+00 : f32
    %363 = vector.broadcast %cst_99 : f32 to vector<8x128xf32>
    %364 = arith.addf %363, %362 : vector<8x128xf32>
    %365 = arith.divf %363, %364 : vector<8x128xf32>
    %366 = vector.extract_strided_slice %354 {offsets = [0, 128], sizes = [8, 128], strides = [1, 1]} : vector<8x384xf32> to vector<8x128xf32>
    %367 = vector.extract_strided_slice %357 {offsets = [0, 128], sizes = [8, 128], strides = [1, 1]} : vector<8x256xf32> to vector<8x128xf32>
    %368 = arith.addf %366, %367 : vector<8x128xf32>
    %369 = arith.negf %368 : vector<8x128xf32>
    %370 = math.exp %369 : vector<8x128xf32>
    %cst_100 = arith.constant 1.000000e+00 : f32
    %371 = vector.broadcast %cst_100 : f32 to vector<8x128xf32>
    %372 = arith.addf %371, %370 : vector<8x128xf32>
    %373 = arith.divf %371, %372 : vector<8x128xf32>
    %374 = vector.extract_strided_slice %354 {offsets = [0, 256], sizes = [8, 128], strides = [1, 1]} : vector<8x384xf32> to vector<8x128xf32>
    %375 = arith.mulf %373, %312 : vector<8x128xf32>
    %376 = arith.truncf %375 : vector<8x128xf32> to vector<8x128xbf16>
    %cst_101 = arith.constant dense<0.000000e+00> : vector<8x128xf32>
    %377 = tpu.matmul %376, %17, %cst_101 {dimension_numbers = #tpu.dot_dimension_numbers<[1], [0], [0], [1], [0, 0, 1, 1], [], []>} : vector<8x128xbf16>, vector<128x128xbf16>, vector<8x128xf32> -> vector<8x128xf32>
    %378 = arith.addf %374, %377 : vector<8x128xf32>
    %379 = arith.addf %378, %20 : vector<8x128xf32>
    %380 = math.tanh %379 : vector<8x128xf32>
    %381 = arith.mulf %365, %312 : vector<8x128xf32>
    %cst_102 = arith.constant 1.000000e+00 : f32
    %382 = vector.broadcast %cst_102 : f32 to vector<8x128xf32>
    %383 = arith.subf %382, %365 : vector<8x128xf32>
    %384 = arith.mulf %383, %380 : vector<8x128xf32>
    %385 = arith.addf %381, %384 : vector<8x128xf32>
    %386 = arith.index_cast %c4_i32 : i32 to index
    %c0_103 = arith.constant 0 : index
    %c0_104 = arith.constant 0 : index
    %387 = vector.load %arg19[%386, %c0_103, %c0_104] : memref<8x8x128xf32, #tpu.memory_space<vmem>>, vector<1x8x128xf32>
    %388 = vector.shape_cast %387 : vector<1x8x128xf32> to vector<8x128xf32>
    %389 = vector.shape_cast %385 : vector<8x128xf32> to vector<1x8x128xf32>
    tpu.vector_store %arg19[%386, %c0_103, %c0_104], %389 {strides = array<i32>} : memref<8x8x128xf32, #tpu.memory_space<vmem>>, vector<1x8x128xf32>,
    %c5_i32 = arith.constant 5 : i32
    %390 = arith.index_cast %c5_i32 : i32 to index
    %c0_105 = arith.constant 0 : index
    %c0_106 = arith.constant 0 : index
    %391 = vector.load %arg2[%390, %c0_105, %c0_106] : memref<8x8x16xf32, #tpu.memory_space<vmem>>, vector<1x8x16xf32>
    %392 = vector.shape_cast %391 : vector<1x8x16xf32> to vector<8x16xf32>
    %393 = arith.truncf %392 : vector<8x16xf32> to vector<8x16xbf16>
    %cst_107 = arith.constant dense<0.000000e+00> : vector<8x384xf32>
    %394 = tpu.matmul %393, %3, %cst_107 {dimension_numbers = #tpu.dot_dimension_numbers<[1], [0], [0], [1], [0, 0, 1, 1], [], []>} : vector<8x16xbf16>, vector<16x384xbf16>, vector<8x384xf32> -> vector<8x384xf32>
    %395 = arith.truncf %352 : vector<8x128xf32> to vector<8x128xbf16>
    %cst_108 = arith.constant dense<0.000000e+00> : vector<8x256xf32>
    %396 = tpu.matmul %395, %4, %cst_108 {dimension_numbers = #tpu.dot_dimension_numbers<[1], [0], [0], [1], [0, 0, 1, 1], [], []>} : vector<8x128xbf16>, vector<128x256xbf16>, vector<8x256xf32> -> vector<8x256xf32>
    %397 = arith.addf %396, %7 : vector<8x256xf32>
    %398 = vector.extract_strided_slice %394 {offsets = [0, 0], sizes = [8, 128], strides = [1, 1]} : vector<8x384xf32> to vector<8x128xf32>
    %399 = vector.extract_strided_slice %397 {offsets = [0, 0], sizes = [8, 128], strides = [1, 1]} : vector<8x256xf32> to vector<8x128xf32>
    %400 = arith.addf %398, %399 : vector<8x128xf32>
    %401 = arith.negf %400 : vector<8x128xf32>
    %402 = math.exp %401 : vector<8x128xf32>
    %cst_109 = arith.constant 1.000000e+00 : f32
    %403 = vector.broadcast %cst_109 : f32 to vector<8x128xf32>
    %404 = arith.addf %403, %402 : vector<8x128xf32>
    %405 = arith.divf %403, %404 : vector<8x128xf32>
    %406 = vector.extract_strided_slice %394 {offsets = [0, 128], sizes = [8, 128], strides = [1, 1]} : vector<8x384xf32> to vector<8x128xf32>
    %407 = vector.extract_strided_slice %397 {offsets = [0, 128], sizes = [8, 128], strides = [1, 1]} : vector<8x256xf32> to vector<8x128xf32>
    %408 = arith.addf %406, %407 : vector<8x128xf32>
    %409 = arith.negf %408 : vector<8x128xf32>
    %410 = math.exp %409 : vector<8x128xf32>
    %cst_110 = arith.constant 1.000000e+00 : f32
    %411 = vector.broadcast %cst_110 : f32 to vector<8x128xf32>
    %412 = arith.addf %411, %410 : vector<8x128xf32>
    %413 = arith.divf %411, %412 : vector<8x128xf32>
    %414 = vector.extract_strided_slice %394 {offsets = [0, 256], sizes = [8, 128], strides = [1, 1]} : vector<8x384xf32> to vector<8x128xf32>
    %415 = arith.mulf %413, %352 : vector<8x128xf32>
    %416 = arith.truncf %415 : vector<8x128xf32> to vector<8x128xbf16>
    %cst_111 = arith.constant dense<0.000000e+00> : vector<8x128xf32>
    %417 = tpu.matmul %416, %8, %cst_111 {dimension_numbers = #tpu.dot_dimension_numbers<[1], [0], [0], [1], [0, 0, 1, 1], [], []>} : vector<8x128xbf16>, vector<128x128xbf16>, vector<8x128xf32> -> vector<8x128xf32>
    %418 = arith.addf %414, %417 : vector<8x128xf32>
    %419 = arith.addf %418, %11 : vector<8x128xf32>
    %420 = math.tanh %419 : vector<8x128xf32>
    %421 = arith.mulf %405, %352 : vector<8x128xf32>
    %cst_112 = arith.constant 1.000000e+00 : f32
    %422 = vector.broadcast %cst_112 : f32 to vector<8x128xf32>
    %423 = arith.subf %422, %405 : vector<8x128xf32>
    %424 = arith.mulf %423, %420 : vector<8x128xf32>
    %425 = arith.addf %421, %424 : vector<8x128xf32>
    %426 = arith.truncf %425 : vector<8x128xf32> to vector<8x128xbf16>
    %cst_113 = arith.constant dense<0.000000e+00> : vector<8x384xf32>
    %427 = tpu.matmul %426, %12, %cst_113 {dimension_numbers = #tpu.dot_dimension_numbers<[1], [0], [0], [1], [0, 0, 1, 1], [], []>} : vector<8x128xbf16>, vector<128x384xbf16>, vector<8x384xf32> -> vector<8x384xf32>
    %428 = arith.truncf %385 : vector<8x128xf32> to vector<8x128xbf16>
    %cst_114 = arith.constant dense<0.000000e+00> : vector<8x256xf32>
    %429 = tpu.matmul %428, %13, %cst_114 {dimension_numbers = #tpu.dot_dimension_numbers<[1], [0], [0], [1], [0, 0, 1, 1], [], []>} : vector<8x128xbf16>, vector<128x256xbf16>, vector<8x256xf32> -> vector<8x256xf32>
    %430 = arith.addf %429, %16 : vector<8x256xf32>
    %431 = vector.extract_strided_slice %427 {offsets = [0, 0], sizes = [8, 128], strides = [1, 1]} : vector<8x384xf32> to vector<8x128xf32>
    %432 = vector.extract_strided_slice %430 {offsets = [0, 0], sizes = [8, 128], strides = [1, 1]} : vector<8x256xf32> to vector<8x128xf32>
    %433 = arith.addf %431, %432 : vector<8x128xf32>
    %434 = arith.negf %433 : vector<8x128xf32>
    %435 = math.exp %434 : vector<8x128xf32>
    %cst_115 = arith.constant 1.000000e+00 : f32
    %436 = vector.broadcast %cst_115 : f32 to vector<8x128xf32>
    %437 = arith.addf %436, %435 : vector<8x128xf32>
    %438 = arith.divf %436, %437 : vector<8x128xf32>
    %439 = vector.extract_strided_slice %427 {offsets = [0, 128], sizes = [8, 128], strides = [1, 1]} : vector<8x384xf32> to vector<8x128xf32>
    %440 = vector.extract_strided_slice %430 {offsets = [0, 128], sizes = [8, 128], strides = [1, 1]} : vector<8x256xf32> to vector<8x128xf32>
    %441 = arith.addf %439, %440 : vector<8x128xf32>
    %442 = arith.negf %441 : vector<8x128xf32>
    %443 = math.exp %442 : vector<8x128xf32>
    %cst_116 = arith.constant 1.000000e+00 : f32
    %444 = vector.broadcast %cst_116 : f32 to vector<8x128xf32>
    %445 = arith.addf %444, %443 : vector<8x128xf32>
    %446 = arith.divf %444, %445 : vector<8x128xf32>
    %447 = vector.extract_strided_slice %427 {offsets = [0, 256], sizes = [8, 128], strides = [1, 1]} : vector<8x384xf32> to vector<8x128xf32>
    %448 = arith.mulf %446, %385 : vector<8x128xf32>
    %449 = arith.truncf %448 : vector<8x128xf32> to vector<8x128xbf16>
    %cst_117 = arith.constant dense<0.000000e+00> : vector<8x128xf32>
    %450 = tpu.matmul %449, %17, %cst_117 {dimension_numbers = #tpu.dot_dimension_numbers<[1], [0], [0], [1], [0, 0, 1, 1], [], []>} : vector<8x128xbf16>, vector<128x128xbf16>, vector<8x128xf32> -> vector<8x128xf32>
    %451 = arith.addf %447, %450 : vector<8x128xf32>
    %452 = arith.addf %451, %20 : vector<8x128xf32>
    %453 = math.tanh %452 : vector<8x128xf32>
    %454 = arith.mulf %438, %385 : vector<8x128xf32>
    %cst_118 = arith.constant 1.000000e+00 : f32
    %455 = vector.broadcast %cst_118 : f32 to vector<8x128xf32>
    %456 = arith.subf %455, %438 : vector<8x128xf32>
    %457 = arith.mulf %456, %453 : vector<8x128xf32>
    %458 = arith.addf %454, %457 : vector<8x128xf32>
    %459 = arith.index_cast %c5_i32 : i32 to index
    %c0_119 = arith.constant 0 : index
    %c0_120 = arith.constant 0 : index
    %460 = vector.load %arg19[%459, %c0_119, %c0_120] : memref<8x8x128xf32, #tpu.memory_space<vmem>>, vector<1x8x128xf32>
    %461 = vector.shape_cast %460 : vector<1x8x128xf32> to vector<8x128xf32>
    %462 = vector.shape_cast %458 : vector<8x128xf32> to vector<1x8x128xf32>
    tpu.vector_store %arg19[%459, %c0_119, %c0_120], %462 {strides = array<i32>} : memref<8x8x128xf32, #tpu.memory_space<vmem>>, vector<1x8x128xf32>,
    %c6_i32 = arith.constant 6 : i32
    %463 = arith.index_cast %c6_i32 : i32 to index
    %c0_121 = arith.constant 0 : index
    %c0_122 = arith.constant 0 : index
    %464 = vector.load %arg2[%463, %c0_121, %c0_122] : memref<8x8x16xf32, #tpu.memory_space<vmem>>, vector<1x8x16xf32>
    %465 = vector.shape_cast %464 : vector<1x8x16xf32> to vector<8x16xf32>
    %466 = arith.truncf %465 : vector<8x16xf32> to vector<8x16xbf16>
    %cst_123 = arith.constant dense<0.000000e+00> : vector<8x384xf32>
    %467 = tpu.matmul %466, %3, %cst_123 {dimension_numbers = #tpu.dot_dimension_numbers<[1], [0], [0], [1], [0, 0, 1, 1], [], []>} : vector<8x16xbf16>, vector<16x384xbf16>, vector<8x384xf32> -> vector<8x384xf32>
    %468 = arith.truncf %425 : vector<8x128xf32> to vector<8x128xbf16>
    %cst_124 = arith.constant dense<0.000000e+00> : vector<8x256xf32>
    %469 = tpu.matmul %468, %4, %cst_124 {dimension_numbers = #tpu.dot_dimension_numbers<[1], [0], [0], [1], [0, 0, 1, 1], [], []>} : vector<8x128xbf16>, vector<128x256xbf16>, vector<8x256xf32> -> vector<8x256xf32>
    %470 = arith.addf %469, %7 : vector<8x256xf32>
    %471 = vector.extract_strided_slice %467 {offsets = [0, 0], sizes = [8, 128], strides = [1, 1]} : vector<8x384xf32> to vector<8x128xf32>
    %472 = vector.extract_strided_slice %470 {offsets = [0, 0], sizes = [8, 128], strides = [1, 1]} : vector<8x256xf32> to vector<8x128xf32>
    %473 = arith.addf %471, %472 : vector<8x128xf32>
    %474 = arith.negf %473 : vector<8x128xf32>
    %475 = math.exp %474 : vector<8x128xf32>
    %cst_125 = arith.constant 1.000000e+00 : f32
    %476 = vector.broadcast %cst_125 : f32 to vector<8x128xf32>
    %477 = arith.addf %476, %475 : vector<8x128xf32>
    %478 = arith.divf %476, %477 : vector<8x128xf32>
    %479 = vector.extract_strided_slice %467 {offsets = [0, 128], sizes = [8, 128], strides = [1, 1]} : vector<8x384xf32> to vector<8x128xf32>
    %480 = vector.extract_strided_slice %470 {offsets = [0, 128], sizes = [8, 128], strides = [1, 1]} : vector<8x256xf32> to vector<8x128xf32>
    %481 = arith.addf %479, %480 : vector<8x128xf32>
    %482 = arith.negf %481 : vector<8x128xf32>
    %483 = math.exp %482 : vector<8x128xf32>
    %cst_126 = arith.constant 1.000000e+00 : f32
    %484 = vector.broadcast %cst_126 : f32 to vector<8x128xf32>
    %485 = arith.addf %484, %483 : vector<8x128xf32>
    %486 = arith.divf %484, %485 : vector<8x128xf32>
    %487 = vector.extract_strided_slice %467 {offsets = [0, 256], sizes = [8, 128], strides = [1, 1]} : vector<8x384xf32> to vector<8x128xf32>
    %488 = arith.mulf %486, %425 : vector<8x128xf32>
    %489 = arith.truncf %488 : vector<8x128xf32> to vector<8x128xbf16>
    %cst_127 = arith.constant dense<0.000000e+00> : vector<8x128xf32>
    %490 = tpu.matmul %489, %8, %cst_127 {dimension_numbers = #tpu.dot_dimension_numbers<[1], [0], [0], [1], [0, 0, 1, 1], [], []>} : vector<8x128xbf16>, vector<128x128xbf16>, vector<8x128xf32> -> vector<8x128xf32>
    %491 = arith.addf %487, %490 : vector<8x128xf32>
    %492 = arith.addf %491, %11 : vector<8x128xf32>
    %493 = math.tanh %492 : vector<8x128xf32>
    %494 = arith.mulf %478, %425 : vector<8x128xf32>
    %cst_128 = arith.constant 1.000000e+00 : f32
    %495 = vector.broadcast %cst_128 : f32 to vector<8x128xf32>
    %496 = arith.subf %495, %478 : vector<8x128xf32>
    %497 = arith.mulf %496, %493 : vector<8x128xf32>
    %498 = arith.addf %494, %497 : vector<8x128xf32>
    %499 = arith.truncf %498 : vector<8x128xf32> to vector<8x128xbf16>
    %cst_129 = arith.constant dense<0.000000e+00> : vector<8x384xf32>
    %500 = tpu.matmul %499, %12, %cst_129 {dimension_numbers = #tpu.dot_dimension_numbers<[1], [0], [0], [1], [0, 0, 1, 1], [], []>} : vector<8x128xbf16>, vector<128x384xbf16>, vector<8x384xf32> -> vector<8x384xf32>
    %501 = arith.truncf %458 : vector<8x128xf32> to vector<8x128xbf16>
    %cst_130 = arith.constant dense<0.000000e+00> : vector<8x256xf32>
    %502 = tpu.matmul %501, %13, %cst_130 {dimension_numbers = #tpu.dot_dimension_numbers<[1], [0], [0], [1], [0, 0, 1, 1], [], []>} : vector<8x128xbf16>, vector<128x256xbf16>, vector<8x256xf32> -> vector<8x256xf32>
    %503 = arith.addf %502, %16 : vector<8x256xf32>
    %504 = vector.extract_strided_slice %500 {offsets = [0, 0], sizes = [8, 128], strides = [1, 1]} : vector<8x384xf32> to vector<8x128xf32>
    %505 = vector.extract_strided_slice %503 {offsets = [0, 0], sizes = [8, 128], strides = [1, 1]} : vector<8x256xf32> to vector<8x128xf32>
    %506 = arith.addf %504, %505 : vector<8x128xf32>
    %507 = arith.negf %506 : vector<8x128xf32>
    %508 = math.exp %507 : vector<8x128xf32>
    %cst_131 = arith.constant 1.000000e+00 : f32
    %509 = vector.broadcast %cst_131 : f32 to vector<8x128xf32>
    %510 = arith.addf %509, %508 : vector<8x128xf32>
    %511 = arith.divf %509, %510 : vector<8x128xf32>
    %512 = vector.extract_strided_slice %500 {offsets = [0, 128], sizes = [8, 128], strides = [1, 1]} : vector<8x384xf32> to vector<8x128xf32>
    %513 = vector.extract_strided_slice %503 {offsets = [0, 128], sizes = [8, 128], strides = [1, 1]} : vector<8x256xf32> to vector<8x128xf32>
    %514 = arith.addf %512, %513 : vector<8x128xf32>
    %515 = arith.negf %514 : vector<8x128xf32>
    %516 = math.exp %515 : vector<8x128xf32>
    %cst_132 = arith.constant 1.000000e+00 : f32
    %517 = vector.broadcast %cst_132 : f32 to vector<8x128xf32>
    %518 = arith.addf %517, %516 : vector<8x128xf32>
    %519 = arith.divf %517, %518 : vector<8x128xf32>
    %520 = vector.extract_strided_slice %500 {offsets = [0, 256], sizes = [8, 128], strides = [1, 1]} : vector<8x384xf32> to vector<8x128xf32>
    %521 = arith.mulf %519, %458 : vector<8x128xf32>
    %522 = arith.truncf %521 : vector<8x128xf32> to vector<8x128xbf16>
    %cst_133 = arith.constant dense<0.000000e+00> : vector<8x128xf32>
    %523 = tpu.matmul %522, %17, %cst_133 {dimension_numbers = #tpu.dot_dimension_numbers<[1], [0], [0], [1], [0, 0, 1, 1], [], []>} : vector<8x128xbf16>, vector<128x128xbf16>, vector<8x128xf32> -> vector<8x128xf32>
    %524 = arith.addf %520, %523 : vector<8x128xf32>
    %525 = arith.addf %524, %20 : vector<8x128xf32>
    %526 = math.tanh %525 : vector<8x128xf32>
    %527 = arith.mulf %511, %458 : vector<8x128xf32>
    %cst_134 = arith.constant 1.000000e+00 : f32
    %528 = vector.broadcast %cst_134 : f32 to vector<8x128xf32>
    %529 = arith.subf %528, %511 : vector<8x128xf32>
    %530 = arith.mulf %529, %526 : vector<8x128xf32>
    %531 = arith.addf %527, %530 : vector<8x128xf32>
    %532 = arith.index_cast %c6_i32 : i32 to index
    %c0_135 = arith.constant 0 : index
    %c0_136 = arith.constant 0 : index
    %533 = vector.load %arg19[%532, %c0_135, %c0_136] : memref<8x8x128xf32, #tpu.memory_space<vmem>>, vector<1x8x128xf32>
    %534 = vector.shape_cast %533 : vector<1x8x128xf32> to vector<8x128xf32>
    %535 = vector.shape_cast %531 : vector<8x128xf32> to vector<1x8x128xf32>
    tpu.vector_store %arg19[%532, %c0_135, %c0_136], %535 {strides = array<i32>} : memref<8x8x128xf32, #tpu.memory_space<vmem>>, vector<1x8x128xf32>,
    %c7_i32 = arith.constant 7 : i32
    %536 = arith.index_cast %c7_i32 : i32 to index
    %c0_137 = arith.constant 0 : index
    %c0_138 = arith.constant 0 : index
    %537 = vector.load %arg2[%536, %c0_137, %c0_138] : memref<8x8x16xf32, #tpu.memory_space<vmem>>, vector<1x8x16xf32>
    %538 = vector.shape_cast %537 : vector<1x8x16xf32> to vector<8x16xf32>
    %539 = arith.truncf %538 : vector<8x16xf32> to vector<8x16xbf16>
    %cst_139 = arith.constant dense<0.000000e+00> : vector<8x384xf32>
    %540 = tpu.matmul %539, %3, %cst_139 {dimension_numbers = #tpu.dot_dimension_numbers<[1], [0], [0], [1], [0, 0, 1, 1], [], []>} : vector<8x16xbf16>, vector<16x384xbf16>, vector<8x384xf32> -> vector<8x384xf32>
    %541 = arith.truncf %498 : vector<8x128xf32> to vector<8x128xbf16>
    %cst_140 = arith.constant dense<0.000000e+00> : vector<8x256xf32>
    %542 = tpu.matmul %541, %4, %cst_140 {dimension_numbers = #tpu.dot_dimension_numbers<[1], [0], [0], [1], [0, 0, 1, 1], [], []>} : vector<8x128xbf16>, vector<128x256xbf16>, vector<8x256xf32> -> vector<8x256xf32>
    %543 = arith.addf %542, %7 : vector<8x256xf32>
    %544 = vector.extract_strided_slice %540 {offsets = [0, 0], sizes = [8, 128], strides = [1, 1]} : vector<8x384xf32> to vector<8x128xf32>
    %545 = vector.extract_strided_slice %543 {offsets = [0, 0], sizes = [8, 128], strides = [1, 1]} : vector<8x256xf32> to vector<8x128xf32>
    %546 = arith.addf %544, %545 : vector<8x128xf32>
    %547 = arith.negf %546 : vector<8x128xf32>
    %548 = math.exp %547 : vector<8x128xf32>
    %cst_141 = arith.constant 1.000000e+00 : f32
    %549 = vector.broadcast %cst_141 : f32 to vector<8x128xf32>
    %550 = arith.addf %549, %548 : vector<8x128xf32>
    %551 = arith.divf %549, %550 : vector<8x128xf32>
    %552 = vector.extract_strided_slice %540 {offsets = [0, 128], sizes = [8, 128], strides = [1, 1]} : vector<8x384xf32> to vector<8x128xf32>
    %553 = vector.extract_strided_slice %543 {offsets = [0, 128], sizes = [8, 128], strides = [1, 1]} : vector<8x256xf32> to vector<8x128xf32>
    %554 = arith.addf %552, %553 : vector<8x128xf32>
    %555 = arith.negf %554 : vector<8x128xf32>
    %556 = math.exp %555 : vector<8x128xf32>
    %cst_142 = arith.constant 1.000000e+00 : f32
    %557 = vector.broadcast %cst_142 : f32 to vector<8x128xf32>
    %558 = arith.addf %557, %556 : vector<8x128xf32>
    %559 = arith.divf %557, %558 : vector<8x128xf32>
    %560 = vector.extract_strided_slice %540 {offsets = [0, 256], sizes = [8, 128], strides = [1, 1]} : vector<8x384xf32> to vector<8x128xf32>
    %561 = arith.mulf %559, %498 : vector<8x128xf32>
    %562 = arith.truncf %561 : vector<8x128xf32> to vector<8x128xbf16>
    %cst_143 = arith.constant dense<0.000000e+00> : vector<8x128xf32>
    %563 = tpu.matmul %562, %8, %cst_143 {dimension_numbers = #tpu.dot_dimension_numbers<[1], [0], [0], [1], [0, 0, 1, 1], [], []>} : vector<8x128xbf16>, vector<128x128xbf16>, vector<8x128xf32> -> vector<8x128xf32>
    %564 = arith.addf %560, %563 : vector<8x128xf32>
    %565 = arith.addf %564, %11 : vector<8x128xf32>
    %566 = math.tanh %565 : vector<8x128xf32>
    %567 = arith.mulf %551, %498 : vector<8x128xf32>
    %cst_144 = arith.constant 1.000000e+00 : f32
    %568 = vector.broadcast %cst_144 : f32 to vector<8x128xf32>
    %569 = arith.subf %568, %551 : vector<8x128xf32>
    %570 = arith.mulf %569, %566 : vector<8x128xf32>
    %571 = arith.addf %567, %570 : vector<8x128xf32>
    %572 = arith.truncf %571 : vector<8x128xf32> to vector<8x128xbf16>
    %cst_145 = arith.constant dense<0.000000e+00> : vector<8x384xf32>
    %573 = tpu.matmul %572, %12, %cst_145 {dimension_numbers = #tpu.dot_dimension_numbers<[1], [0], [0], [1], [0, 0, 1, 1], [], []>} : vector<8x128xbf16>, vector<128x384xbf16>, vector<8x384xf32> -> vector<8x384xf32>
    %574 = arith.truncf %531 : vector<8x128xf32> to vector<8x128xbf16>
    %cst_146 = arith.constant dense<0.000000e+00> : vector<8x256xf32>
    %575 = tpu.matmul %574, %13, %cst_146 {dimension_numbers = #tpu.dot_dimension_numbers<[1], [0], [0], [1], [0, 0, 1, 1], [], []>} : vector<8x128xbf16>, vector<128x256xbf16>, vector<8x256xf32> -> vector<8x256xf32>
    %576 = arith.addf %575, %16 : vector<8x256xf32>
    %577 = vector.extract_strided_slice %573 {offsets = [0, 0], sizes = [8, 128], strides = [1, 1]} : vector<8x384xf32> to vector<8x128xf32>
    %578 = vector.extract_strided_slice %576 {offsets = [0, 0], sizes = [8, 128], strides = [1, 1]} : vector<8x256xf32> to vector<8x128xf32>
    %579 = arith.addf %577, %578 : vector<8x128xf32>
    %580 = arith.negf %579 : vector<8x128xf32>
    %581 = math.exp %580 : vector<8x128xf32>
    %cst_147 = arith.constant 1.000000e+00 : f32
    %582 = vector.broadcast %cst_147 : f32 to vector<8x128xf32>
    %583 = arith.addf %582, %581 : vector<8x128xf32>
    %584 = arith.divf %582, %583 : vector<8x128xf32>
    %585 = vector.extract_strided_slice %573 {offsets = [0, 128], sizes = [8, 128], strides = [1, 1]} : vector<8x384xf32> to vector<8x128xf32>
    %586 = vector.extract_strided_slice %576 {offsets = [0, 128], sizes = [8, 128], strides = [1, 1]} : vector<8x256xf32> to vector<8x128xf32>
    %587 = arith.addf %585, %586 : vector<8x128xf32>
    %588 = arith.negf %587 : vector<8x128xf32>
    %589 = math.exp %588 : vector<8x128xf32>
    %cst_148 = arith.constant 1.000000e+00 : f32
    %590 = vector.broadcast %cst_148 : f32 to vector<8x128xf32>
    %591 = arith.addf %590, %589 : vector<8x128xf32>
    %592 = arith.divf %590, %591 : vector<8x128xf32>
    %593 = vector.extract_strided_slice %573 {offsets = [0, 256], sizes = [8, 128], strides = [1, 1]} : vector<8x384xf32> to vector<8x128xf32>
    %594 = arith.mulf %592, %531 : vector<8x128xf32>
    %595 = arith.truncf %594 : vector<8x128xf32> to vector<8x128xbf16>
    %cst_149 = arith.constant dense<0.000000e+00> : vector<8x128xf32>
    %596 = tpu.matmul %595, %17, %cst_149 {dimension_numbers = #tpu.dot_dimension_numbers<[1], [0], [0], [1], [0, 0, 1, 1], [], []>} : vector<8x128xbf16>, vector<128x128xbf16>, vector<8x128xf32> -> vector<8x128xf32>
    %597 = arith.addf %593, %596 : vector<8x128xf32>
    %598 = arith.addf %597, %20 : vector<8x128xf32>
    %599 = math.tanh %598 : vector<8x128xf32>
    %600 = arith.mulf %584, %531 : vector<8x128xf32>
    %cst_150 = arith.constant 1.000000e+00 : f32
    %601 = vector.broadcast %cst_150 : f32 to vector<8x128xf32>
    %602 = arith.subf %601, %584 : vector<8x128xf32>
    %603 = arith.mulf %602, %599 : vector<8x128xf32>
    %604 = arith.addf %600, %603 : vector<8x128xf32>
    %605 = arith.index_cast %c7_i32 : i32 to index
    %c0_151 = arith.constant 0 : index
    %c0_152 = arith.constant 0 : index
    %606 = vector.load %arg19[%605, %c0_151, %c0_152] : memref<8x8x128xf32, #tpu.memory_space<vmem>>, vector<1x8x128xf32>
    %607 = vector.shape_cast %606 : vector<1x8x128xf32> to vector<8x128xf32>
    %608 = vector.shape_cast %604 : vector<8x128xf32> to vector<1x8x128xf32>
    tpu.vector_store %arg19[%605, %c0_151, %c0_152], %608 {strides = array<i32>} : memref<8x8x128xf32, #tpu.memory_space<vmem>>, vector<1x8x128xf32>,
    %c8_i32 = arith.constant 8 : i32
    %c0_153 = arith.constant 0 : index
    %c0_154 = arith.constant 0 : index
    %c0_155 = arith.constant 0 : index
    %609 = vector.load %arg18[%c0_153, %c0_154, %c0_155] : memref<2x8x128xf32, #tpu.memory_space<vmem>>, vector<1x8x128xf32>
    %610 = vector.shape_cast %609 : vector<1x8x128xf32> to vector<8x128xf32>
    %611 = vector.shape_cast %571 : vector<8x128xf32> to vector<1x8x128xf32>
    tpu.vector_store %arg18[%c0_153, %c0_154, %c0_155], %611 {strides = array<i32>} : memref<2x8x128xf32, #tpu.memory_space<vmem>>, vector<1x8x128xf32>,
    %c1_156 = arith.constant 1 : index
    %c0_157 = arith.constant 0 : index
    %c0_158 = arith.constant 0 : index
    %612 = vector.load %arg18[%c1_156, %c0_157, %c0_158] : memref<2x8x128xf32, #tpu.memory_space<vmem>>, vector<1x8x128xf32>
    %613 = vector.shape_cast %612 : vector<1x8x128xf32> to vector<8x128xf32>
    %614 = vector.shape_cast %604 : vector<8x128xf32> to vector<1x8x128xf32>
    tpu.vector_store %arg18[%c1_156, %c0_157, %c0_158], %614 {strides = array<i32>} : memref<2x8x128xf32, #tpu.memory_space<vmem>>, vector<1x8x128xf32>,
    %c0_159 = arith.constant 0 : index
    %c0_160 = arith.constant 0 : index
    %c0_161 = arith.constant 0 : index
    %615 = vector.load %arg19[%c0_159, %c0_160, %c0_161] : memref<8x8x128xf32, #tpu.memory_space<vmem>>, vector<8x8x128xf32>
    %616 = arith.truncf %615 : vector<8x8x128xf32> to vector<8x8x128xbf16>
    %617 = vector.shape_cast %616 : vector<8x8x128xbf16> to vector<64x128xbf16>
    %c0_162 = arith.constant 0 : index
    %c0_163 = arith.constant 0 : index
    %618 = vector.load %arg14[%c0_162, %c0_163] : memref<128x128xbf16, #tpu.memory_space<vmem>>, vector<128x128xbf16>
    %cst_164 = arith.constant dense<0.000000e+00> : vector<64x128xf32>
    %619 = tpu.matmul %617, %618, %cst_164 {dimension_numbers = #tpu.dot_dimension_numbers<[1], [0], [0], [1], [0, 0, 1, 1], [], []>} : vector<64x128xbf16>, vector<128x128xbf16>, vector<64x128xf32> -> vector<64x128xf32>
    %c0_165 = arith.constant 0 : index
    %c0_166 = arith.constant 0 : index
    %620 = vector.load %arg15[%c0_165, %c0_166] : memref<1x128xf32, #tpu.memory_space<vmem>>, vector<1x128xf32>
    %621 = vector.shape_cast %620 : vector<1x128xf32> to vector<1x128xf32>
    %622 = vector.broadcast %621 : vector<1x128xf32> to vector<64x128xf32>
    %623 = arith.addf %619, %622 : vector<64x128xf32>
    %624 = vector.shape_cast %623 : vector<64x128xf32> to vector<8x8x128xf32>
    %c0_167 = arith.constant 0 : index
    %c0_168 = arith.constant 0 : index
    %c0_169 = arith.constant 0 : index
    %625 = vector.load %arg16[%c0_167, %c0_168, %c0_169] : memref<8x8x128xf32, #tpu.memory_space<vmem>>, vector<8x8x128xf32>
    tpu.vector_store %arg16[%c0_167, %c0_168, %c0_169], %624 {strides = array<i32>} : memref<8x8x128xf32, #tpu.memory_space<vmem>>, vector<8x8x128xf32>,
    %c0_i32_170 = arith.constant 0 : i32
    %626 = arith.cmpi eq, %arg1, %c0_i32_170 : i32
    %627 = arith.extui %626 : i1 to i32
    %c0_i32_171 = arith.constant 0 : i32
    %628 = arith.cmpi ne, %627, %c0_i32_171 : i32
    scf.if %628 {
      %c0_172 = arith.constant 0 : index
      %c0_173 = arith.constant 0 : index
      %c0_174 = arith.constant 0 : index
      %629 = vector.load %arg18[%c0_172, %c0_173, %c0_174] : memref<2x8x128xf32, #tpu.memory_space<vmem>>, vector<2x8x128xf32>
      %c0_175 = arith.constant 0 : index
      %c0_176 = arith.constant 0 : index
      %c0_177 = arith.constant 0 : index
      %630 = vector.load %arg17[%c0_175, %c0_176, %c0_177] : memref<2x8x128xf32, #tpu.memory_space<vmem>>, vector<2x8x128xf32>
      tpu.vector_store %arg17[%c0_175, %c0_176, %c0_177], %629 {strides = array<i32>} : memref<2x8x128xf32, #tpu.memory_space<vmem>>, vector<2x8x128xf32>,
    } else {
    }
    return
  }
  func.func @transform_0(%arg0: i32, %arg1: i32) -> (i32, i32, i32) {
    %c0_i32 = arith.constant 0 : i32
    %c0_i32_0 = arith.constant 0 : i32
    return %arg1, %arg0, %c0_i32 : i32, i32, i32
  }
  func.func @transform_1(%arg0: i32, %arg1: i32) -> (i32, i32, i32) {
    %c0_i32 = arith.constant 0 : i32
    %c0_i32_0 = arith.constant 0 : i32
    %c0_i32_1 = arith.constant 0 : i32
    return %c0_i32, %arg0, %c0_i32_0 : i32, i32, i32
  }
  func.func @transform_2(%arg0: i32, %arg1: i32) -> (i32, i32) {
    %c0_i32 = arith.constant 0 : i32
    %c0_i32_0 = arith.constant 0 : i32
    %c0_i32_1 = arith.constant 0 : i32
    return %c0_i32, %c0_i32_0 : i32, i32
  }
  func.func @transform_3(%arg0: i32, %arg1: i32) -> (i32, i32) {
    %c0_i32 = arith.constant 0 : i32
    %c0_i32_0 = arith.constant 0 : i32
    %c0_i32_1 = arith.constant 0 : i32
    return %c0_i32, %c0_i32_0 : i32, i32
  }
  func.func @transform_4(%arg0: i32, %arg1: i32) -> (i32, i32) {
    %c0_i32 = arith.constant 0 : i32
    %c0_i32_0 = arith.constant 0 : i32
    %c0_i32_1 = arith.constant 0 : i32
    return %c0_i32, %c0_i32_0 : i32, i32
  }
  func.func @transform_5(%arg0: i32, %arg1: i32) -> (i32, i32) {
    %c0_i32 = arith.constant 0 : i32
    %c0_i32_0 = arith.constant 0 : i32
    %c0_i32_1 = arith.constant 0 : i32
    return %c0_i32, %c0_i32_0 : i32, i32
  }
  func.func @transform_6(%arg0: i32, %arg1: i32) -> (i32, i32) {
    %c0_i32 = arith.constant 0 : i32
    %c0_i32_0 = arith.constant 0 : i32
    %c0_i32_1 = arith.constant 0 : i32
    return %c0_i32, %c0_i32_0 : i32, i32
  }
  func.func @transform_7(%arg0: i32, %arg1: i32) -> (i32, i32) {
    %c0_i32 = arith.constant 0 : i32
    %c0_i32_0 = arith.constant 0 : i32
    %c0_i32_1 = arith.constant 0 : i32
    return %c0_i32, %c0_i32_0 : i32, i32
  }
  func.func @transform_8(%arg0: i32, %arg1: i32) -> (i32, i32) {
    %c0_i32 = arith.constant 0 : i32
    %c0_i32_0 = arith.constant 0 : i32
    %c0_i32_1 = arith.constant 0 : i32
    return %c0_i32, %c0_i32_0 : i32, i32
  }
  func.func @transform_9(%arg0: i32, %arg1: i32) -> (i32, i32) {
    %c0_i32 = arith.constant 0 : i32
    %c0_i32_0 = arith.constant 0 : i32
    %c0_i32_1 = arith.constant 0 : i32
    return %c0_i32, %c0_i32_0 : i32, i32
  }
  func.func @transform_10(%arg0: i32, %arg1: i32) -> (i32, i32) {
    %c0_i32 = arith.constant 0 : i32
    %c0_i32_0 = arith.constant 0 : i32
    %c0_i32_1 = arith.constant 0 : i32
    return %c0_i32, %c0_i32_0 : i32, i32
  }
  func.func @transform_11(%arg0: i32, %arg1: i32) -> (i32, i32) {
    %c0_i32 = arith.constant 0 : i32
    %c0_i32_0 = arith.constant 0 : i32
    %c0_i32_1 = arith.constant 0 : i32
    return %c0_i32, %c0_i32_0 : i32, i32
  }
  func.func @transform_12(%arg0: i32, %arg1: i32) -> (i32, i32) {
    %c0_i32 = arith.constant 0 : i32
    %c0_i32_0 = arith.constant 0 : i32
    %c0_i32_1 = arith.constant 0 : i32
    return %c0_i32, %c0_i32_0 : i32, i32
  }
  func.func @transform_13(%arg0: i32, %arg1: i32) -> (i32, i32) {
    %c0_i32 = arith.constant 0 : i32
    %c0_i32_0 = arith.constant 0 : i32
    %c0_i32_1 = arith.constant 0 : i32
    return %c0_i32, %c0_i32_0 : i32, i32
  }
  func.func @transform_14(%arg0: i32, %arg1: i32) -> (i32, i32, i32) {
    %c0_i32 = arith.constant 0 : i32
    %c0_i32_0 = arith.constant 0 : i32
    return %arg1, %arg0, %c0_i32 : i32, i32, i32
  }
  func.func @transform_15(%arg0: i32, %arg1: i32) -> (i32, i32, i32) {
    %c0_i32 = arith.constant 0 : i32
    %c0_i32_0 = arith.constant 0 : i32
    %c0_i32_1 = arith.constant 0 : i32
    return %c0_i32, %arg0, %c0_i32_0 : i32, i32, i32
  }
}

</mosaic_0001>

<llo_original>
// kernel: tpu_custom_call.1
$region0: #{tpu_custom_call.1}
  #allocation0 [shape = 'u32[]', space=smem, size = 0x4, offset = 0x4, fixed_abs, tag = 'smem constant byte address 0x4 - core index']
  #allocation1 [shape = 'u32[144,128]{1,0:T(1,128)}', space=vmem, size = 0x12000, scoped, tag = 'internal scratch']
  #allocation2 [shape = 'f32[2,8,128]{2,1,0:T(8,128)}', space=vmem, size = 0x2000, scoped, tag = 'scratch operand']
  #allocation3 [shape = 'f32[8,8,128]{2,1,0:T(8,128)}', space=vmem, size = 0x8000, scoped, tag = 'scratch operand']
  %s0 = inlined_call_operand.hbm [shape: f32[8,8,16], index: 0, kind: input, shape index: {}]
  %s1 = inlined_call_operand.hbm [shape: f32[2,8,128], index: 1, kind: input, shape index: {}]
  %s2 = inlined_call_operand.hbm [shape: bf16[16,384], index: 2, kind: input, shape index: {}]
  %s3 = inlined_call_operand.hbm [shape: bf16[128,256], index: 3, kind: input, shape index: {}]
  %s4 = inlined_call_operand.vmem [shape: f32[1,256], index: 4, kind: input, shape index: {}]
  %s5 = inlined_call_operand.hbm [shape: bf16[128,128], index: 5, kind: input, shape index: {}]
  %s6 = inlined_call_operand.vmem [shape: f32[1,128], index: 6, kind: input, shape index: {}]
  %s7 = inlined_call_operand.hbm [shape: bf16[128,384], index: 7, kind: input, shape index: {}]
  %s8 = inlined_call_operand.hbm [shape: bf16[128,256], index: 8, kind: input, shape index: {}]
  %s9 = inlined_call_operand.vmem [shape: f32[1,256], index: 9, kind: input, shape index: {}]
  %s10 = inlined_call_operand.hbm [shape: bf16[128,128], index: 10, kind: input, shape index: {}]
  %s11 = inlined_call_operand.vmem [shape: f32[1,128], index: 11, kind: input, shape index: {}]
  %s12 = inlined_call_operand.hbm [shape: bf16[128,128], index: 12, kind: input, shape index: {}]
  %s13 = inlined_call_operand.vmem [shape: f32[1,128], index: 13, kind: input, shape index: {}]
  %s14 = inlined_call_operand.hbm [shape: f32[8,8,128], index: 14, kind: output, shape index: {0}]
  %s15 = inlined_call_operand.hbm [shape: f32[2,8,128], index: 15, kind: output, shape index: {1}]
  %16 = xla_tuple %s14, %s15
  %s17 = sld [smem:[#allocation0]]
  $region118: #{tpu_custom_call.1} parent=0
    _
  %s19 = ssub.s32 1, %s17
  %s20 = scalar_select 0, %s19, %s17
  $region1: #{tpu_custom_call.1} parent=0
    #allocation4 [shape = 'u8[32768]{0}', space=vmem, size = 0x8000, scoped, tag = 'input window, operand 0, single buffered']
    #allocation5 [shape = 's32[1]{0}', space=sflag, size = 0x4, scoped, tag = 'scoped memory for tpu_custom_call.1']
    #allocation6 [shape = 's32[1]{0}', space=sflag, size = 0x4, scoped, tag = 'scoped memory for tpu_custom_call.1']
    #allocation7 [shape = 'u8[8192]{0}', space=vmem, size = 0x2000, scoped, tag = 'input window, operand 1, single buffered']
    #allocation8 [shape = 's32[1]{0}', space=sflag, size = 0x4, scoped, tag = 'scoped memory for tpu_custom_call.1']
    #allocation9 [shape = 'u8[12288]{0}', space=vmem, size = 0x3000, scoped, tag = 'input window, operand 2, single buffered']
    #allocation10 [shape = 'u8[65536]{0}', space=vmem, size = 0x10000, scoped, tag = 'input window, operand 3, single buffered']
    #allocation11 [shape = 's32[1]{0}', space=sflag, size = 0x4, scoped, tag = 'scoped memory for tpu_custom_call.1']
    #allocation12 [shape = 'u8[32768]{0}', space=vmem, size = 0x8000, scoped, tag = 'input window, operand 5, single buffered']
    #allocation13 [shape = 'u8[98304]{0}', space=vmem, size = 0x18000, scoped, tag = 'input window, operand 7, single buffered']
    #allocation14 [shape = 's32[1]{0}', space=sflag, size = 0x4, scoped, tag = 'scoped memory for tpu_custom_call.1']
    #allocation15 [shape = 'u8[65536]{0}', space=vmem, size = 0x10000, scoped, tag = 'input window, operand 8, single buffered']
    #allocation16 [shape = 'u8[32768]{0}', space=vmem, size = 0x8000, scoped, tag = 'input window, operand 10, single buffered']
    #allocation17 [shape = 's32[1]{0}', space=sflag, size = 0x4, scoped, tag = 'scoped memory for tpu_custom_call.1']
    #allocation18 [shape = 'u8[32768]{0}', space=vmem, size = 0x8000, scoped, tag = 'input window, operand 12, single buffered']
    #allocation19 [shape = 'u8[32768]{0}', space=vmem, size = 0x8000, scoped, tag = 'output window, operand 0, single buffered']
    #allocation20 [shape = 'u8[8192]{0}', space=vmem, size = 0x2000, scoped, tag = 'output window, operand 1, single buffered']
    #allocation21 [shape = 's32[1]{0}', space=sflag, size = 0x4, scoped, tag = 'scoped memory for tpu_custom_call.1']
    %21 = vsyncpa [#allocation5], 0
    %22 = vsyncpa [#allocation8], 0
    %23 = vsyncpa [#allocation11], 0
    %24 = vsyncpa [#allocation14], 0
    %25 = vsyncpa [#allocation17], 0
    %26 = vsyncpa [#allocation6], 0
    %27 = vsyncpa [#allocation21], 0
    // Predicated region
    $region2: #{tpu_custom_call.1} parent=1 // pred_check
      _
    $region3: #{tpu_custom_call.1} parent=1 // pred_check_branch
      %29 = sbr.rel (0) target = $region5
    $region4: #{tpu_custom_call.1} parent=1 // pred_region
      %s31 = ssub.s32 1024, 1024
      %32 = vsyncadd [#allocation5], %s31
      %s33 = sshll.u32 [#allocation4], 4
      %s34 = int_to_ptr.vmem [resolvable:$true] %s33
      %39 = dma.hbm_to_vmem [thread:$0]  %s0, 1024, %s34, [#allocation5], 128, 128, 8
    $region5: #{tpu_custom_call.1} parent=1 // pred_fallthru
      _
    // Predicated region
    $region6: #{tpu_custom_call.1} parent=1 // pred_check
      _
    $region7: #{tpu_custom_call.1} parent=1 // pred_check_branch
      %41 = sbr.rel (0) target = $region9
    $region8: #{tpu_custom_call.1} parent=1 // pred_region
      %s43 = ssub.s32 256, 256
      %44 = vsyncadd [#allocation8], %s43
      %s45 = sshll.u32 [#allocation7], 4
      %s46 = int_to_ptr.vmem [resolvable:$true] %s45
      %51 = dma.hbm_to_vmem [thread:$0]  %s1, 256, %s46, [#allocation8], 128, 128, 8
    $region9: #{tpu_custom_call.1} parent=1 // pred_fallthru
      _
    // Predicated region
    $region10: #{tpu_custom_call.1} parent=1 // pred_check
      _
    $region11: #{tpu_custom_call.1} parent=1 // pred_check_branch
      %53 = sbr.rel (0) target = $region13
    $region12: #{tpu_custom_call.1} parent=1 // pred_region
      %s55 = ssub.s32 384, 384
      %56 = vsyncadd [#allocation8], %s55
      %s57 = sshll.u32 [#allocation9], 4
      %s58 = int_to_ptr.vmem [resolvable:$true] %s57
      %63 = dma.hbm_to_vmem [thread:$0]  %s2, 384, %s58, [#allocation8], 192, 192, 12
    $region13: #{tpu_custom_call.1} parent=1 // pred_fallthru
      _
    // Predicated region
    $region14: #{tpu_custom_call.1} parent=1 // pred_check
      _
    $region15: #{tpu_custom_call.1} parent=1 // pred_check_branch
      %65 = sbr.rel (0) target = $region17
    $region16: #{tpu_custom_call.1} parent=1 // pred_region
      %s67 = ssub.s32 2048, 2048
      %68 = vsyncadd [#allocation11], %s67
      %s69 = sshll.u32 [#allocation10], 4
      %s70 = int_to_ptr.vmem [resolvable:$true] %s69
      %75 = dma.hbm_to_vmem [thread:$0]  %s3, 2048, %s70, [#allocation11], 128, 128, 8
    $region17: #{tpu_custom_call.1} parent=1 // pred_fallthru
      _
    // Predicated region
    $region18: #{tpu_custom_call.1} parent=1 // pred_check
      _
    $region19: #{tpu_custom_call.1} parent=1 // pred_check_branch
      %77 = sbr.rel (0) target = $region21
    $region20: #{tpu_custom_call.1} parent=1 // pred_region
      _
    $region21: #{tpu_custom_call.1} parent=1 // pred_fallthru
      _
    // Predicated region
    $region22: #{tpu_custom_call.1} parent=1 // pred_check
      _
    $region23: #{tpu_custom_call.1} parent=1 // pred_check_branch
      %79 = sbr.rel (0) target = $region25
    $region24: #{tpu_custom_call.1} parent=1 // pred_region
      %s81 = ssub.s32 1024, 1024
      %82 = vsyncadd [#allocation11], %s81
      %s83 = sshll.u32 [#allocation12], 4
      %s84 = int_to_ptr.vmem [resolvable:$true] %s83
      %89 = dma.hbm_to_vmem [thread:$0]  %s5, 1024, %s84, [#allocation11], 64, 64, 4
    $region25: #{tpu_custom_call.1} parent=1 // pred_fallthru
      _
    // Predicated region
    $region26: #{tpu_custom_call.1} parent=1 // pred_check
      _
    $region27: #{tpu_custom_call.1} parent=1 // pred_check_branch
      %91 = sbr.rel (0) target = $region29
    $region28: #{tpu_custom_call.1} parent=1 // pred_region
      _
    $region29: #{tpu_custom_call.1} parent=1 // pred_fallthru
      _
    // Predicated region
    $region30: #{tpu_custom_call.1} parent=1 // pred_check
      _
    $region31: #{tpu_custom_call.1} parent=1 // pred_check_branch
      %93 = sbr.rel (0) target = $region33
    $region32: #{tpu_custom_call.1} parent=1 // pred_region
      %s95 = ssub.s32 3072, 3072
      %96 = vsyncadd [#allocation14], %s95
      %s97 = sshll.u32 [#allocation13], 4
      %s98 = int_to_ptr.vmem [resolvable:$true] %s97
      %103 = dma.hbm_to_vmem [thread:$0]  %s7, 3072, %s98, [#allocation14], 192, 192, 12
    $region33: #{tpu_custom_call.1} parent=1 // pred_fallthru
      _
    // Predicated region
    $region34: #{tpu_custom_call.1} parent=1 // pred_check
      _
    $region35: #{tpu_custom_call.1} parent=1 // pred_check_branch
      %105 = sbr.rel (0) target = $region37
    $region36: #{tpu_custom_call.1} parent=1 // pred_region
      %s107 = ssub.s32 2048, 2048
      %108 = vsyncadd [#allocation14], %s107
      %s109 = sshll.u32 [#allocation15], 4
      %s110 = int_to_ptr.vmem [resolvable:$true] %s109
      %115 = dma.hbm_to_vmem [thread:$0]  %s8, 2048, %s110, [#allocation14], 128, 128, 8
    $region37: #{tpu_custom_call.1} parent=1 // pred_fallthru
      _
    // Predicated region
    $region38: #{tpu_custom_call.1} parent=1 // pred_check
      _
    $region39: #{tpu_custom_call.1} parent=1 // pred_check_branch
      %117 = sbr.rel (0) target = $region41
    $region40: #{tpu_custom_call.1} parent=1 // pred_region
      _
    $region41: #{tpu_custom_call.1} parent=1 // pred_fallthru
      _
    // Predicated region
    $region42: #{tpu_custom_call.1} parent=1 // pred_check
      _
    $region43: #{tpu_custom_call.1} parent=1 // pred_check_branch
      %119 = sbr.rel (0) target = $region45
    $region44: #{tpu_custom_call.1} parent=1 // pred_region
      %s121 = ssub.s32 1024, 1024
      %122 = vsyncadd [#allocation17], %s121
      %s123 = sshll.u32 [#allocation16], 4
      %s124 = int_to_ptr.vmem [resolvable:$true] %s123
      %129 = dma.hbm_to_vmem [thread:$0]  %s10, 1024, %s124, [#allocation17], 64, 64, 4
    $region45: #{tpu_custom_call.1} parent=1 // pred_fallthru
      _
    // Predicated region
    $region46: #{tpu_custom_call.1} parent=1 // pred_check
      _
    $region47: #{tpu_custom_call.1} parent=1 // pred_check_branch
      %131 = sbr.rel (0) target = $region49
    $region48: #{tpu_custom_call.1} parent=1 // pred_region
      _
    $region49: #{tpu_custom_call.1} parent=1 // pred_fallthru
      _
    // Predicated region
    $region50: #{tpu_custom_call.1} parent=1 // pred_check
      _
    $region51: #{tpu_custom_call.1} parent=1 // pred_check_branch
      %133 = sbr.rel (0) target = $region53
    $region52: #{tpu_custom_call.1} parent=1 // pred_region
      %s135 = ssub.s32 1024, 1024
      %136 = vsyncadd [#allocation17], %s135
      %s137 = sshll.u32 [#allocation18], 4
      %s138 = int_to_ptr.vmem [resolvable:$true] %s137
      %143 = dma.hbm_to_vmem [thread:$0]  %s12, 1024, %s138, [#allocation17], 64, 64, 4
    $region53: #{tpu_custom_call.1} parent=1 // pred_fallthru
      _
    // Predicated region
    $region54: #{tpu_custom_call.1} parent=1 // pred_check
      _
    $region55: #{tpu_custom_call.1} parent=1 // pred_check_branch
      %145 = sbr.rel (0) target = $region57
    $region56: #{tpu_custom_call.1} parent=1 // pred_region
      _
    $region57: #{tpu_custom_call.1} parent=1 // pred_fallthru
      _
    // Predicated region
    $region58: #{tpu_custom_call.1} parent=1 // pred_check
      _
    $region59: #{tpu_custom_call.1} parent=1 // pred_check_branch
      %147 = sbr.rel (0) target = $region61
    $region60: #{tpu_custom_call.1} parent=1 // pred_region
      %148 = dma.done [#allocation5], 1024
    $region61: #{tpu_custom_call.1} parent=1 // pred_fallthru
      _
    // Predicated region
    $region62: #{tpu_custom_call.1} parent=1 // pred_check
      _
    $region63: #{tpu_custom_call.1} parent=1 // pred_check_branch
      %150 = sbr.rel (0) target = $region65
    $region64: #{tpu_custom_call.1} parent=1 // pred_region
      %151 = dma.done [#allocation8], 256
    $region65: #{tpu_custom_call.1} parent=1 // pred_fallthru
      _
    // Predicated region
    $region66: #{tpu_custom_call.1} parent=1 // pred_check
      _
    $region67: #{tpu_custom_call.1} parent=1 // pred_check_branch
      %153 = sbr.rel (0) target = $region69
    $region68: #{tpu_custom_call.1} parent=1 // pred_region
      %154 = dma.done [#allocation8], 384
    $region69: #{tpu_custom_call.1} parent=1 // pred_fallthru
      _
    // Predicated region
    $region70: #{tpu_custom_call.1} parent=1 // pred_check
      _
    $region71: #{tpu_custom_call.1} parent=1 // pred_check_branch
      %156 = sbr.rel (0) target = $region73
    $region72: #{tpu_custom_call.1} parent=1 // pred_region
      %157 = dma.done [#allocation11], 2048
    $region73: #{tpu_custom_call.1} parent=1 // pred_fallthru
      _
    // Predicated region
    $region74: #{tpu_custom_call.1} parent=1 // pred_check
      _
    $region75: #{tpu_custom_call.1} parent=1 // pred_check_branch
      %159 = sbr.rel (0) target = $region77
    $region76: #{tpu_custom_call.1} parent=1 // pred_region
      %160 = dma.done [#allocation11], 1024
    $region77: #{tpu_custom_call.1} parent=1 // pred_fallthru
      _
    // Predicated region
    $region78: #{tpu_custom_call.1} parent=1 // pred_check
      _
    $region79: #{tpu_custom_call.1} parent=1 // pred_check_branch
      %162 = sbr.rel (0) target = $region81
    $region80: #{tpu_custom_call.1} parent=1 // pred_region
      %163 = dma.done [#allocation14], 3072
    $region81: #{tpu_custom_call.1} parent=1 // pred_fallthru
      _
    // Predicated region
    $region82: #{tpu_custom_call.1} parent=1 // pred_check
      _
    $region83: #{tpu_custom_call.1} parent=1 // pred_check_branch
      %165 = sbr.rel (0) target = $region85
    $region84: #{tpu_custom_call.1} parent=1 // pred_region
      %166 = dma.done [#allocation14], 2048
    $region85: #{tpu_custom_call.1} parent=1 // pred_fallthru
      _
    // Predicated region
    $region86: #{tpu_custom_call.1} parent=1 // pred_check
      _
    $region87: #{tpu_custom_call.1} parent=1 // pred_check_branch
      %168 = sbr.rel (0) target = $region89
    $region88: #{tpu_custom_call.1} parent=1 // pred_region
      %169 = dma.done [#allocation17], 1024
    $region89: #{tpu_custom_call.1} parent=1 // pred_fallthru
      _
    // Predicated region
    $region90: #{tpu_custom_call.1} parent=1 // pred_check
      _
    $region91: #{tpu_custom_call.1} parent=1 // pred_check_branch
      %171 = sbr.rel (0) target = $region93
    $region92: #{tpu_custom_call.1} parent=1 // pred_region
      %172 = dma.done [#allocation17], 1024
    $region93: #{tpu_custom_call.1} parent=1 // pred_fallthru
      _
    %p174 = scmp.eq.s32.totalorder 0, 0
    // Predicated region
    $region94: #{tpu_custom_call.1} parent=1 // pred_check
      %p175 = pneg %p174
    $region95: #{tpu_custom_call.1} parent=1 // pred_check_branch
      %177 = sbr.rel (%p175) target = $region97
    $region96: #{tpu_custom_call.1} parent=1 // pred_region
      %v178 = vld [vmem:[#allocation7] sm:$0xff]
      %v179 = vld [vmem:[#allocation7 + $0x8] sm:$0xff]
      %180 = vst [vmem:[#allocation2] sm:$0xff] %v178
      %181 = vst [vmem:[#allocation2 + $0x8] sm:$0xff] %v179
    $region97: #{tpu_custom_call.1} parent=1 // pred_fallthru
      _
    %v182 = vld [vmem:[#allocation9] sm:$0xff]
    %v183 = vld [vmem:[#allocation9 + $0x8] sm:$0xf]
    %v184 = vld [vmem:[#allocation9 + $0xc] sm:$0xff]
    %v185 = vld [vmem:[#allocation9 + $0x14] sm:$0xf]
    %v186 = vld [vmem:[#allocation10] sm:$0xff]
    %v187 = vld [vmem:[#allocation10 + $0x8] sm:$0xff]
    %v188 = vld [vmem:[#allocation10 + $0x10] sm:$0xff]
    %v189 = vld [vmem:[#allocation10 + $0x18] sm:$0xff]
    %v190 = vld [vmem:[#allocation10 + $0x20] sm:$0xff]
    %v191 = vld [vmem:[#allocation10 + $0x28] sm:$0xff]
    %v192 = vld [vmem:[#allocation10 + $0x30] sm:$0xff]
    %v193 = vld [vmem:[#allocation10 + $0x38] sm:$0xff]
    %v194 = vld [vmem:[#allocation10 + $0x40] sm:$0xff]
    %v195 = vld [vmem:[#allocation10 + $0x48] sm:$0xff]
    %v196 = vld [vmem:[#allocation10 + $0x50] sm:$0xff]
    %v197 = vld [vmem:[#allocation10 + $0x58] sm:$0xff]
    %v198 = vld [vmem:[#allocation10 + $0x60] sm:$0xff]
    %v199 = vld [vmem:[#allocation10 + $0x68] sm:$0xff]
    %v200 = vld [vmem:[#allocation10 + $0x70] sm:$0xff]
    %v201 = vld [vmem:[#allocation10 + $0x78] sm:$0xff]
    %v202 = vld [vmem:[%s4] sm:$0x3]
    %v204 = vlaneseq
    %v205 = vshrl.u32 %v204, 7
    %v206 = vsub.s32 0, %v205
    %v207 = vrot.slane %v202, %v206
    %v208 = vlaneseq
    %v209 = vshrl.u32 %v208, 7
    %v210 = vsub.s32 1, %v209
    %v211 = vrot.slane %v202, %v210
    %v214 = vld [vmem:[#allocation12] sm:$0xf]
    %v215 = vld [vmem:[#allocation12 + $0x4] sm:$0xf]
    %v216 = vld [vmem:[#allocation12 + $0x8] sm:$0xf]
    %v217 = vld [vmem:[#allocation12 + $0xc] sm:$0xf]
    %v218 = vld [vmem:[#allocation12 + $0x10] sm:$0xf]
    %v219 = vld [vmem:[#allocation12 + $0x14] sm:$0xf]
    %v220 = vld [vmem:[#allocation12 + $0x18] sm:$0xf]
    %v221 = vld [vmem:[#allocation12 + $0x1c] sm:$0xf]
    %v222 = vld [vmem:[#allocation12 + $0x20] sm:$0xf]
    %v223 = vld [vmem:[#allocation12 + $0x24] sm:$0xf]
    %v224 = vld [vmem:[#allocation12 + $0x28] sm:$0xf]
    %v225 = vld [vmem:[#allocation12 + $0x2c] sm:$0xf]
    %v226 = vld [vmem:[#allocation12 + $0x30] sm:$0xf]
    %v227 = vld [vmem:[#allocation12 + $0x34] sm:$0xf]
    %v228 = vld [vmem:[#allocation12 + $0x38] sm:$0xf]
    %v229 = vld [vmem:[#allocation12 + $0x3c] sm:$0xf]
    %v230 = vld [vmem:[%s6] sm:$0x1]
    %v232 = vlaneseq
    %v233 = vshrl.u32 %v232, 7
    %v234 = vsub.s32 0, %v233
    %v235 = vrot.slane %v230, %v234
    %v237 = vld [vmem:[#allocation13] sm:$0xff]
    %v238 = vld [vmem:[#allocation13 + $0x8] sm:$0xf]
    %v239 = vld [vmem:[#allocation13 + $0xc] sm:$0xff]
    %v240 = vld [vmem:[#allocation13 + $0x14] sm:$0xf]
    %v241 = vld [vmem:[#allocation13 + $0x18] sm:$0xff]
    %v242 = vld [vmem:[#allocation13 + $0x20] sm:$0xf]
    %v243 = vld [vmem:[#allocation13 + $0x24] sm:$0xff]
    %v244 = vld [vmem:[#allocation13 + $0x2c] sm:$0xf]
    %v245 = vld [vmem:[#allocation13 + $0x30] sm:$0xff]
    %v246 = vld [vmem:[#allocation13 + $0x38] sm:$0xf]
    %v247 = vld [vmem:[#allocation13 + $0x3c] sm:$0xff]
    %v248 = vld [vmem:[#allocation13 + $0x44] sm:$0xf]
    %v249 = vld [vmem:[#allocation13 + $0x48] sm:$0xff]
    %v250 = vld [vmem:[#allocation13 + $0x50] sm:$0xf]
    %v251 = vld [vmem:[#allocation13 + $0x54] sm:$0xff]
    %v252 = vld [vmem:[#allocation13 + $0x5c] sm:$0xf]
    %v253 = vld [vmem:[#allocation13 + $0x60] sm:$0xff]
    %v254 = vld [vmem:[#allocation13 + $0x68] sm:$0xf]
    %v255 = vld [vmem:[#allocation13 + $0x6c] sm:$0xff]
    %v256 = vld [vmem:[#allocation13 + $0x74] sm:$0xf]
    %v257 = vld [vmem:[#allocation13 + $0x78] sm:$0xff]
    %v258 = vld [vmem:[#allocation13 + $0x80] sm:$0xf]
    %v259 = vld [vmem:[#allocation13 + $0x84] sm:$0xff]
    %v260 = vld [vmem:[#allocation13 + $0x8c] sm:$0xf]
    %v261 = vld [vmem:[#allocation13 + $0x90] sm:$0xff]
    %v262 = vld [vmem:[#allocation13 + $0x98] sm:$0xf]
    %v263 = vld [vmem:[#allocation13 + $0x9c] sm:$0xff]
    %v264 = vld [vmem:[#allocation13 + $0xa4] sm:$0xf]
    %v265 = vld [vmem:[#allocation13 + $0xa8] sm:$0xff]
    %v266 = vld [vmem:[#allocation13 + $0xb0] sm:$0xf]
    %v267 = vld [vmem:[#allocation13 + $0xb4] sm:$0xff]
    %v268 = vld [vmem:[#allocation13 + $0xbc] sm:$0xf]
    %v269 = vld [vmem:[#allocation15] sm:$0xff]
    %v270 = vld [vmem:[#allocation15 + $0x8] sm:$0xff]
    %v271 = vld [vmem:[#allocation15 + $0x10] sm:$0xff]
    %v272 = vld [vmem:[#allocation15 + $0x18] sm:$0xff]
    %v273 = vld [vmem:[#allocation15 + $0x20] sm:$0xff]
    %v274 = vld [vmem:[#allocation15 + $0x28] sm:$0xff]
    %v275 = vld [vmem:[#allocation15 + $0x30] sm:$0xff]
    %v276 = vld [vmem:[#allocation15 + $0x38] sm:$0xff]
    %v277 = vld [vmem:[#allocation15 + $0x40] sm:$0xff]
    %v278 = vld [vmem:[#allocation15 + $0x48] sm:$0xff]
    %v279 = vld [vmem:[#allocation15 + $0x50] sm:$0xff]
    %v280 = vld [vmem:[#allocation15 + $0x58] sm:$0xff]
    %v281 = vld [vmem:[#allocation15 + $0x60] sm:$0xff]
    %v282 = vld [vmem:[#allocation15 + $0x68] sm:$0xff]
    %v283 = vld [vmem:[#allocation15 + $0x70] sm:$0xff]
    %v284 = vld [vmem:[#allocation15 + $0x78] sm:$0xff]
    %v285 = vld [vmem:[%s9] sm:$0x3]
    %v287 = vlaneseq
    %v288 = vshrl.u32 %v287, 7
    %v289 = vsub.s32 0, %v288
    %v290 = vrot.slane %v285, %v289
    %v291 = vlaneseq
    %v292 = vshrl.u32 %v291, 7
    %v293 = vsub.s32 1, %v292
    %v294 = vrot.slane %v285, %v293
    %v297 = vld [vmem:[#allocation16] sm:$0xf]
    %v298 = vld [vmem:[#allocation16 + $0x4] sm:$0xf]
    %v299 = vld [vmem:[#allocation16 + $0x8] sm:$0xf]
    %v300 = vld [vmem:[#allocation16 + $0xc] sm:$0xf]
    %v301 = vld [vmem:[#allocation16 + $0x10] sm:$0xf]
    %v302 = vld [vmem:[#allocation16 + $0x14] sm:$0xf]
    %v303 = vld [vmem:[#allocation16 + $0x18] sm:$0xf]
    %v304 = vld [vmem:[#allocation16 + $0x1c] sm:$0xf]
    %v305 = vld [vmem:[#allocation16 + $0x20] sm:$0xf]
    %v306 = vld [vmem:[#allocation16 + $0x24] sm:$0xf]
    %v307 = vld [vmem:[#allocation16 + $0x28] sm:$0xf]
    %v308 = vld [vmem:[#allocation16 + $0x2c] sm:$0xf]
    %v309 = vld [vmem:[#allocation16 + $0x30] sm:$0xf]
    %v310 = vld [vmem:[#allocation16 + $0x34] sm:$0xf]
    %v311 = vld [vmem:[#allocation16 + $0x38] sm:$0xf]
    %v312 = vld [vmem:[#allocation16 + $0x3c] sm:$0xf]
    %v313 = vld [vmem:[%s11] sm:$0x1]
    %v315 = vlaneseq
    %v316 = vshrl.u32 %v315, 7
    %v317 = vsub.s32 0, %v316
    %v318 = vrot.slane %v313, %v317
    %v320 = vld [vmem:[#allocation2] sm:$0xff]
    %s321 = scalar_lea.vmem [#allocation2], 8
    %v322 = vld [vmem:[%s321] sm:$0xff]
    %v323 = vld [vmem:[#allocation4] sm:$0xff]
    %v324 = vpack.c.bf16 %v323, %v323
    %v329 = vunpack.c.l.b16 %v182
    %v330 = vunpack.c.h.b16 %v182
    %v331 = vunpack.c.l.b16 %v183
    %v332 = vunpack.c.l.b16 %v184
    %v333 = vunpack.c.h.b16 %v184
    %v334 = vunpack.c.l.b16 %v185
    %v335 = vpack.c.b16 %v332, %v329
    %v336 = vpack.c.b16 %v333, %v330
    %v337 = vpack.c.b16 %v334, %v331
    %vm341 = vcmask 130048
    %v343 = vsel %vm341, %v324, 0
    %345 = vmatprep.subr.bf16.mxu0 0
    %346 = vmatpush1.bf16.msra.mxu0 0
    %347 = vmatprep.subr.bf16.mxu0 0
    %348 = vmatpush1.bf16.msra.mxu0 0
    %349 = vmatprep.subr.bf16.mxu0 0
    %350 = vmatpush1.bf16.msra.mxu0 0
    %351 = vmatprep.subr.bf16.mxu0 0
    %352 = vmatpush1.bf16.msra.mxu0 0
    %353 = vmatprep.subr.bf16.mxu0 0
    %354 = vmatpush1.bf16.msra.mxu0 0
    %355 = vmatprep.subr.bf16.mxu0 0
    %356 = vmatpush1.bf16.msra.mxu0 0
    %357 = vmatprep.subr.bf16.mxu0 0
    %358 = vmatpush1.bf16.msra.mxu0 0
    %359 = vmatprep.subr.bf16.mxu0 %v336
    %360 = vmatpush1.bf16.msra.mxu0 %v335
    %361 = vmatprep.subr.bf16.mxu0 0
    %362 = vmatpush2.bf16.msra.mxu0 0
    %363 = vmatprep.subr.bf16.mxu0 0
    %364 = vmatpush2.bf16.msra.mxu0 0
    %365 = vmatprep.subr.bf16.mxu0 0
    %366 = vmatpush2.bf16.msra.mxu0 0
    %367 = vmatprep.subr.bf16.mxu0 0
    %368 = vmatpush2.bf16.msra.mxu0 0
    %369 = vmatprep.subr.bf16.mxu0 0
    %370 = vmatpush2.bf16.msra.mxu0 0
    %371 = vmatprep.subr.bf16.mxu0 0
    %372 = vmatpush2.bf16.msra.mxu0 0
    %373 = vmatprep.subr.bf16.mxu0 0
    %374 = vmatpush2.bf16.msra.mxu0 0
    %375 = vmatprep.subr.bf16.mxu0 0
    %376 = vmatpush2.bf16.msra.mxu0 0
    %377 = vmatprep.mubr.bf16.mxu0 0
    %378 = vmatmul.mubr.bf16.gmra.mxu0 %v343
    %v379 = vpop.f32.mrf.mxu0
    %v380 = vadd.f32 0.0, %v379
    %v381 = vpop.f32.mrf.mxu0
    %v382 = vadd.f32 0.0, %v381
    %v383 = vpop.f32.mrf.mxu0
    %v384 = vpop.f32.mrf.mxu0
    %385 = vdwg.mxu0
    %386 = vmatprep.subr.bf16.mxu0 0
    %387 = vmatpush1.bf16.msra.mxu0 0
    %388 = vmatprep.subr.bf16.mxu0 0
    %389 = vmatpush1.bf16.msra.mxu0 0
    %390 = vmatprep.subr.bf16.mxu0 0
    %391 = vmatpush1.bf16.msra.mxu0 0
    %392 = vmatprep.subr.bf16.mxu0 0
    %393 = vmatpush1.bf16.msra.mxu0 0
    %394 = vmatprep.subr.bf16.mxu0 0
    %395 = vmatpush1.bf16.msra.mxu0 0
    %396 = vmatprep.subr.bf16.mxu0 0
    %397 = vmatpush1.bf16.msra.mxu0 0
    %398 = vmatprep.subr.bf16.mxu0 0
    %399 = vmatpush1.bf16.msra.mxu0 0
    %400 = vmatprep.subr.bf16.mxu0 0
    %401 = vmatpush1.bf16.msra.mxu0 %v337
    %402 = vmatprep.subr.bf16.mxu0 0
    %403 = vmatpush2.bf16.msra.mxu0 0
    %404 = vmatprep.subr.bf16.mxu0 0
    %405 = vmatpush2.bf16.msra.mxu0 0
    %406 = vmatprep.subr.bf16.mxu0 0
    %407 = vmatpush2.bf16.msra.mxu0 0
    %408 = vmatprep.subr.bf16.mxu0 0
    %409 = vmatpush2.bf16.msra.mxu0 0
    %410 = vmatprep.subr.bf16.mxu0 0
    %411 = vmatpush2.bf16.msra.mxu0 0
    %412 = vmatprep.subr.bf16.mxu0 0
    %413 = vmatpush2.bf16.msra.mxu0 0
    %414 = vmatprep.subr.bf16.mxu0 0
    %415 = vmatpush2.bf16.msra.mxu0 0
    %416 = vmatprep.subr.bf16.mxu0 0
    %417 = vmatpush2.bf16.msra.mxu0 0
    %418 = vmatprep.mubr.bf16.mxu0 0
    %419 = vmatmul.mubr.bf16.gmra.mxu0 %v343
    %v420 = vpop.f32.mrf.mxu0
    %v421 = vadd.f32 0.0, %v420
    %v422 = vpop.f32.mrf.mxu0
    %v423 = vpop.f32.mrf.mxu0
    %v424 = vpop.f32.mrf.mxu0
    %425 = vdwg.mxu0
    %v426 = vpack.c.bf16 %v320, %v320
    %v443 = vunpack.c.l.b16 %v186
    %v444 = vunpack.c.h.b16 %v186
    %v445 = vunpack.c.l.b16 %v187
    %v446 = vunpack.c.h.b16 %v187
    %v447 = vunpack.c.l.b16 %v188
    %v448 = vunpack.c.h.b16 %v188
    %v449 = vunpack.c.l.b16 %v189
    %v450 = vunpack.c.h.b16 %v189
    %v451 = vunpack.c.l.b16 %v190
    %v452 = vunpack.c.h.b16 %v190
    %v453 = vunpack.c.l.b16 %v191
    %v454 = vunpack.c.h.b16 %v191
    %v455 = vunpack.c.l.b16 %v192
    %v456 = vunpack.c.h.b16 %v192
    %v457 = vunpack.c.l.b16 %v193
    %v458 = vunpack.c.h.b16 %v193
    %v459 = vunpack.c.l.b16 %v194
    %v460 = vunpack.c.h.b16 %v194
    %v461 = vunpack.c.l.b16 %v195
    %v462 = vunpack.c.h.b16 %v195
    %v463 = vunpack.c.l.b16 %v196
    %v464 = vunpack.c.h.b16 %v196
    %v465 = vunpack.c.l.b16 %v197
    %v466 = vunpack.c.h.b16 %v197
    %v467 = vunpack.c.l.b16 %v198
    %v468 = vunpack.c.h.b16 %v198
    %v469 = vunpack.c.l.b16 %v199
    %v470 = vunpack.c.h.b16 %v199
    %v471 = vunpack.c.l.b16 %v200
    %v472 = vunpack.c.h.b16 %v200
    %v473 = vunpack.c.l.b16 %v201
    %v474 = vunpack.c.h.b16 %v201
    %v475 = vpack.c.b16 %v445, %v443
    %v476 = vpack.c.b16 %v446, %v444
    %v477 = vpack.c.b16 %v449, %v447
    %v478 = vpack.c.b16 %v450, %v448
    %v479 = vpack.c.b16 %v453, %v451
    %v480 = vpack.c.b16 %v454, %v452
    %v481 = vpack.c.b16 %v457, %v455
    %v482 = vpack.c.b16 %v458, %v456
    %v483 = vpack.c.b16 %v461, %v459
    %v484 = vpack.c.b16 %v462, %v460
    %v485 = vpack.c.b16 %v465, %v463
    %v486 = vpack.c.b16 %v466, %v464
    %v487 = vpack.c.b16 %v469, %v467
    %v488 = vpack.c.b16 %v470, %v468
    %v489 = vpack.c.b16 %v473, %v471
    %v490 = vpack.c.b16 %v474, %v472
    %507 = vmatprep.subr.bf16.mxu0 %v490
    %508 = vmatpush1.bf16.msra.mxu0 %v489
    %509 = vmatprep.subr.bf16.mxu0 %v488
    %510 = vmatpush1.bf16.msra.mxu0 %v487
    %511 = vmatprep.subr.bf16.mxu0 %v486
    %512 = vmatpush1.bf16.msra.mxu0 %v485
    %513 = vmatprep.subr.bf16.mxu0 %v484
    %514 = vmatpush1.bf16.msra.mxu0 %v483
    %515 = vmatprep.subr.bf16.mxu0 %v482
    %516 = vmatpush1.bf16.msra.mxu0 %v481
    %517 = vmatprep.subr.bf16.mxu0 %v480
    %518 = vmatpush1.bf16.msra.mxu0 %v479
    %519 = vmatprep.subr.bf16.mxu0 %v478
    %520 = vmatpush1.bf16.msra.mxu0 %v477
    %521 = vmatprep.subr.bf16.mxu0 %v476
    %522 = vmatpush1.bf16.msra.mxu0 %v475
    %523 = vmatprep.subr.bf16.mxu0 0
    %524 = vmatpush2.bf16.msra.mxu0 0
    %525 = vmatprep.subr.bf16.mxu0 0
    %526 = vmatpush2.bf16.msra.mxu0 0
    %527 = vmatprep.subr.bf16.mxu0 0
    %528 = vmatpush2.bf16.msra.mxu0 0
    %529 = vmatprep.subr.bf16.mxu0 0
    %530 = vmatpush2.bf16.msra.mxu0 0
    %531 = vmatprep.subr.bf16.mxu0 0
    %532 = vmatpush2.bf16.msra.mxu0 0
    %533 = vmatprep.subr.bf16.mxu0 0
    %534 = vmatpush2.bf16.msra.mxu0 0
    %535 = vmatprep.subr.bf16.mxu0 0
    %536 = vmatpush2.bf16.msra.mxu0 0
    %537 = vmatprep.subr.bf16.mxu0 0
    %538 = vmatpush2.bf16.msra.mxu0 0
    %539 = vmatprep.mubr.bf16.mxu0 0
    %540 = vmatmul.mubr.bf16.gmra.mxu0 %v426
    %v541 = vpop.f32.mrf.mxu0
    %v542 = vadd.f32 %v207, %v541
    %v543 = vpop.f32.mrf.mxu0
    %v544 = vadd.f32 %v211, %v543
    %v545 = vpop.f32.mrf.mxu0
    %v546 = vpop.f32.mrf.mxu0
    %547 = vdwg.mxu0
    %v548 = vadd.f32 %v380, %v542
    %v549 = vxor.u32 %v548, 2147483648
    %v550 = vmul.f32 %v549, 1.442695
    %v551 = vpow.pop %v550
    %v552 = vadd.f32 %v551, 1.0
    %v553 = vrcp.pop %v552
    %v554 = vmul.f32 1.0, %v553
    %v555 = vadd.f32 %v382, %v544
    %v556 = vxor.u32 %v555, 2147483648
    %v557 = vmul.f32 %v556, 1.442695
    %v558 = vpow.pop %v557
    %v559 = vadd.f32 %v558, 1.0
    %v560 = vrcp.pop %v559
    %v561 = vmul.f32 1.0, %v560
    %v562 = vmul.f32 %v561, %v320
    %v563 = vpack.c.bf16 %v562, %v562
    %v580 = vunpack.c.l.b16 %v214
    %v581 = vunpack.c.l.b16 %v215
    %v582 = vunpack.c.l.b16 %v216
    %v583 = vunpack.c.l.b16 %v217
    %v584 = vunpack.c.l.b16 %v218
    %v585 = vunpack.c.l.b16 %v219
    %v586 = vunpack.c.l.b16 %v220
    %v587 = vunpack.c.l.b16 %v221
    %v588 = vunpack.c.l.b16 %v222
    %v589 = vunpack.c.l.b16 %v223
    %v590 = vunpack.c.l.b16 %v224
    %v591 = vunpack.c.l.b16 %v225
    %v592 = vunpack.c.l.b16 %v226
    %v593 = vunpack.c.l.b16 %v227
    %v594 = vunpack.c.l.b16 %v228
    %v595 = vunpack.c.l.b16 %v229
    %v596 = vpack.c.b16 %v581, %v580
    %v597 = vpack.c.b16 %v583, %v582
    %v598 = vpack.c.b16 %v585, %v584
    %v599 = vpack.c.b16 %v587, %v586
    %v600 = vpack.c.b16 %v589, %v588
    %v601 = vpack.c.b16 %v591, %v590
    %v602 = vpack.c.b16 %v593, %v592
    %v603 = vpack.c.b16 %v595, %v594
    %612 = vmatprep.subr.bf16.mxu0 0
    %613 = vmatpush1.bf16.msra.mxu0 %v603
    %614 = vmatprep.subr.bf16.mxu0 0
    %615 = vmatpush1.bf16.msra.mxu0 %v602
    %616 = vmatprep.subr.bf16.mxu0 0
    %617 = vmatpush1.bf16.msra.mxu0 %v601
    %618 = vmatprep.subr.bf16.mxu0 0
    %619 = vmatpush1.bf16.msra.mxu0 %v600
    %620 = vmatprep.subr.bf16.mxu0 0
    %621 = vmatpush1.bf16.msra.mxu0 %v599
    %622 = vmatprep.subr.bf16.mxu0 0
    %623 = vmatpush1.bf16.msra.mxu0 %v598
    %624 = vmatprep.subr.bf16.mxu0 0
    %625 = vmatpush1.bf16.msra.mxu0 %v597
    %626 = vmatprep.subr.bf16.mxu0 0
    %627 = vmatpush1.bf16.msra.mxu0 %v596
    %628 = vmatprep.subr.bf16.mxu0 0
    %629 = vmatpush2.bf16.msra.mxu0 0
    %630 = vmatprep.subr.bf16.mxu0 0
    %631 = vmatpush2.bf16.msra.mxu0 0
    %632 = vmatprep.subr.bf16.mxu0 0
    %633 = vmatpush2.bf16.msra.mxu0 0
    %634 = vmatprep.subr.bf16.mxu0 0
    %635 = vmatpush2.bf16.msra.mxu0 0
    %636 = vmatprep.subr.bf16.mxu0 0
    %637 = vmatpush2.bf16.msra.mxu0 0
    %638 = vmatprep.subr.bf16.mxu0 0
    %639 = vmatpush2.bf16.msra.mxu0 0
    %640 = vmatprep.subr.bf16.mxu0 0
    %641 = vmatpush2.bf16.msra.mxu0 0
    %642 = vmatprep.subr.bf16.mxu0 0
    %643 = vmatpush2.bf16.msra.mxu0 0
    %644 = vmatprep.mubr.bf16.mxu0 0
    %645 = vmatmul.mubr.bf16.gmra.mxu0 %v563
    %v646 = vpop.f32.mrf.mxu0
    %v647 = vadd.f32 0.0, %v646
    %v648 = vpop.f32.mrf.mxu0
    %v649 = vpop.f32.mrf.mxu0
    %v650 = vpop.f32.mrf.mxu0
    %651 = vdwg.mxu0
    %v652 = vadd.f32 %v421, %v647
    %v653 = vadd.f32 %v652, %v235
    %v654 = vtanh.pop %v653
    %v655 = vmul.f32 %v554, %v320
    %v656 = vsub.f32 1.0, %v554
    %v657 = vmul.f32 %v656, %v654
    %v658 = vadd.f32 %v655, %v657
    %v659 = vpack.c.bf16 %v658, %v658
    %v692 = vunpack.c.l.b16 %v237
    %v693 = vunpack.c.h.b16 %v237
    %v694 = vunpack.c.l.b16 %v238
    %v695 = vunpack.c.l.b16 %v239
    %v696 = vunpack.c.h.b16 %v239
    %v697 = vunpack.c.l.b16 %v240
    %v698 = vunpack.c.l.b16 %v241
    %v699 = vunpack.c.h.b16 %v241
    %v700 = vunpack.c.l.b16 %v242
    %v701 = vunpack.c.l.b16 %v243
    %v702 = vunpack.c.h.b16 %v243
    %v703 = vunpack.c.l.b16 %v244
    %v704 = vunpack.c.l.b16 %v245
    %v705 = vunpack.c.h.b16 %v245
    %v706 = vunpack.c.l.b16 %v246
    %v707 = vunpack.c.l.b16 %v247
    %v708 = vunpack.c.h.b16 %v247
    %v709 = vunpack.c.l.b16 %v248
    %v710 = vunpack.c.l.b16 %v249
    %v711 = vunpack.c.h.b16 %v249
    %v712 = vunpack.c.l.b16 %v250
    %v713 = vunpack.c.l.b16 %v251
    %v714 = vunpack.c.h.b16 %v251
    %v715 = vunpack.c.l.b16 %v252
    %v716 = vunpack.c.l.b16 %v253
    %v717 = vunpack.c.h.b16 %v253
    %v718 = vunpack.c.l.b16 %v254
    %v719 = vunpack.c.l.b16 %v255
    %v720 = vunpack.c.h.b16 %v255
    %v721 = vunpack.c.l.b16 %v256
    %v722 = vunpack.c.l.b16 %v257
    %v723 = vunpack.c.h.b16 %v257
    %v724 = vunpack.c.l.b16 %v258
    %v725 = vunpack.c.l.b16 %v259
    %v726 = vunpack.c.h.b16 %v259
    %v727 = vunpack.c.l.b16 %v260
    %v728 = vunpack.c.l.b16 %v261
    %v729 = vunpack.c.h.b16 %v261
    %v730 = vunpack.c.l.b16 %v262
    %v731 = vunpack.c.l.b16 %v263
    %v732 = vunpack.c.h.b16 %v263
    %v733 = vunpack.c.l.b16 %v264
    %v734 = vunpack.c.l.b16 %v265
    %v735 = vunpack.c.h.b16 %v265
    %v736 = vunpack.c.l.b16 %v266
    %v737 = vunpack.c.l.b16 %v267
    %v738 = vunpack.c.h.b16 %v267
    %v739 = vunpack.c.l.b16 %v268
    %v740 = vpack.c.b16 %v695, %v692
    %v741 = vpack.c.b16 %v696, %v693
    %v742 = vpack.c.b16 %v697, %v694
    %v743 = vpack.c.b16 %v701, %v698
    %v744 = vpack.c.b16 %v702, %v699
    %v745 = vpack.c.b16 %v703, %v700
    %v746 = vpack.c.b16 %v707, %v704
    %v747 = vpack.c.b16 %v708, %v705
    %v748 = vpack.c.b16 %v709, %v706
    %v749 = vpack.c.b16 %v713, %v710
    %v750 = vpack.c.b16 %v714, %v711
    %v751 = vpack.c.b16 %v715, %v712
    %v752 = vpack.c.b16 %v719, %v716
    %v753 = vpack.c.b16 %v720, %v717
    %v754 = vpack.c.b16 %v721, %v718
    %v755 = vpack.c.b16 %v725, %v722
    %v756 = vpack.c.b16 %v726, %v723
    %v757 = vpack.c.b16 %v727, %v724
    %v758 = vpack.c.b16 %v731, %v728
    %v759 = vpack.c.b16 %v732, %v729
    %v760 = vpack.c.b16 %v733, %v730
    %v761 = vpack.c.b16 %v737, %v734
    %v762 = vpack.c.b16 %v738, %v735
    %v763 = vpack.c.b16 %v739, %v736
    %788 = vmatprep.subr.bf16.mxu0 %v762
    %789 = vmatpush1.bf16.msra.mxu0 %v761
    %790 = vmatprep.subr.bf16.mxu0 %v759
    %791 = vmatpush1.bf16.msra.mxu0 %v758
    %792 = vmatprep.subr.bf16.mxu0 %v756
    %793 = vmatpush1.bf16.msra.mxu0 %v755
    %794 = vmatprep.subr.bf16.mxu0 %v753
    %795 = vmatpush1.bf16.msra.mxu0 %v752
    %796 = vmatprep.subr.bf16.mxu0 %v750
    %797 = vmatpush1.bf16.msra.mxu0 %v749
    %798 = vmatprep.subr.bf16.mxu0 %v747
    %799 = vmatpush1.bf16.msra.mxu0 %v746
    %800 = vmatprep.subr.bf16.mxu0 %v744
    %801 = vmatpush1.bf16.msra.mxu0 %v743
    %802 = vmatprep.subr.bf16.mxu0 %v741
    %803 = vmatpush1.bf16.msra.mxu0 %v740
    %804 = vmatprep.subr.bf16.mxu0 0
    %805 = vmatpush2.bf16.msra.mxu0 0
    %806 = vmatprep.subr.bf16.mxu0 0
    %807 = vmatpush2.bf16.msra.mxu0 0
    %808 = vmatprep.subr.bf16.mxu0 0
    %809 = vmatpush2.bf16.msra.mxu0 0
    %810 = vmatprep.subr.bf16.mxu0 0
    %811 = vmatpush2.bf16.msra.mxu0 0
    %812 = vmatprep.subr.bf16.mxu0 0
    %813 = vmatpush2.bf16.msra.mxu0 0
    %814 = vmatprep.subr.bf16.mxu0 0
    %815 = vmatpush2.bf16.msra.mxu0 0
    %816 = vmatprep.subr.bf16.mxu0 0
    %817 = vmatpush2.bf16.msra.mxu0 0
    %818 = vmatprep.subr.bf16.mxu0 0
    %819 = vmatpush2.bf16.msra.mxu0 0
    %820 = vmatprep.mubr.bf16.mxu0 0
    %821 = vmatmul.mubr.bf16.gmra.mxu0 %v659
    %v822 = vpop.f32.mrf.mxu0
    %v823 = vadd.f32 0.0, %v822
    %v824 = vpop.f32.mrf.mxu0
    %v825 = vadd.f32 0.0, %v824
    %v826 = vpop.f32.mrf.mxu0
    %v827 = vpop.f32.mrf.mxu0
    %828 = vdwg.mxu0
    %829 = vmatprep.subr.bf16.mxu0 0
    %830 = vmatpush1.bf16.msra.mxu0 %v763
    %831 = vmatprep.subr.bf16.mxu0 0
    %832 = vmatpush1.bf16.msra.mxu0 %v760
    %833 = vmatprep.subr.bf16.mxu0 0
    %834 = vmatpush1.bf16.msra.mxu0 %v757
    %835 = vmatprep.subr.bf16.mxu0 0
    %836 = vmatpush1.bf16.msra.mxu0 %v754
    %837 = vmatprep.subr.bf16.mxu0 0
    %838 = vmatpush1.bf16.msra.mxu0 %v751
    %839 = vmatprep.subr.bf16.mxu0 0
    %840 = vmatpush1.bf16.msra.mxu0 %v748
    %841 = vmatprep.subr.bf16.mxu0 0
    %842 = vmatpush1.bf16.msra.mxu0 %v745
    %843 = vmatprep.subr.bf16.mxu0 0
    %844 = vmatpush1.bf16.msra.mxu0 %v742
    %845 = vmatprep.subr.bf16.mxu0 0
    %846 = vmatpush2.bf16.msra.mxu0 0
    %847 = vmatprep.subr.bf16.mxu0 0
    %848 = vmatpush2.bf16.msra.mxu0 0
    %849 = vmatprep.subr.bf16.mxu0 0
    %850 = vmatpush2.bf16.msra.mxu0 0
    %851 = vmatprep.subr.bf16.mxu0 0
    %852 = vmatpush2.bf16.msra.mxu0 0
    %853 = vmatprep.subr.bf16.mxu0 0
    %854 = vmatpush2.bf16.msra.mxu0 0
    %855 = vmatprep.subr.bf16.mxu0 0
    %856 = vmatpush2.bf16.msra.mxu0 0
    %857 = vmatprep.subr.bf16.mxu0 0
    %858 = vmatpush2.bf16.msra.mxu0 0
    %859 = vmatprep.subr.bf16.mxu0 0
    %860 = vmatpush2.bf16.msra.mxu0 0
    %861 = vmatprep.mubr.bf16.mxu0 0
    %862 = vmatmul.mubr.bf16.gmra.mxu0 %v659
    %v863 = vpop.f32.mrf.mxu0
    %v864 = vadd.f32 0.0, %v863
    %v865 = vpop.f32.mrf.mxu0
    %v866 = vpop.f32.mrf.mxu0
    %v867 = vpop.f32.mrf.mxu0
    %868 = vdwg.mxu0
    %v869 = vpack.c.bf16 %v322, %v322
    %v886 = vunpack.c.l.b16 %v269
    %v887 = vunpack.c.h.b16 %v269
    %v888 = vunpack.c.l.b16 %v270
    %v889 = vunpack.c.h.b16 %v270
    %v890 = vunpack.c.l.b16 %v271
    %v891 = vunpack.c.h.b16 %v271
    %v892 = vunpack.c.l.b16 %v272
    %v893 = vunpack.c.h.b16 %v272
    %v894 = vunpack.c.l.b16 %v273
    %v895 = vunpack.c.h.b16 %v273
    %v896 = vunpack.c.l.b16 %v274
    %v897 = vunpack.c.h.b16 %v274
    %v898 = vunpack.c.l.b16 %v275
    %v899 = vunpack.c.h.b16 %v275
    %v900 = vunpack.c.l.b16 %v276
    %v901 = vunpack.c.h.b16 %v276
    %v902 = vunpack.c.l.b16 %v277
    %v903 = vunpack.c.h.b16 %v277
    %v904 = vunpack.c.l.b16 %v278
    %v905 = vunpack.c.h.b16 %v278
    %v906 = vunpack.c.l.b16 %v279
    %v907 = vunpack.c.h.b16 %v279
    %v908 = vunpack.c.l.b16 %v280
    %v909 = vunpack.c.h.b16 %v280
    %v910 = vunpack.c.l.b16 %v281
    %v911 = vunpack.c.h.b16 %v281
    %v912 = vunpack.c.l.b16 %v282
    %v913 = vunpack.c.h.b16 %v282
    %v914 = vunpack.c.l.b16 %v283
    %v915 = vunpack.c.h.b16 %v283
    %v916 = vunpack.c.l.b16 %v284
    %v917 = vunpack.c.h.b16 %v284
    %v918 = vpack.c.b16 %v888, %v886
    %v919 = vpack.c.b16 %v889, %v887
    %v920 = vpack.c.b16 %v892, %v890
    %v921 = vpack.c.b16 %v893, %v891
    %v922 = vpack.c.b16 %v896, %v894
    %v923 = vpack.c.b16 %v897, %v895
    %v924 = vpack.c.b16 %v900, %v898
    %v925 = vpack.c.b16 %v901, %v899
    %v926 = vpack.c.b16 %v904, %v902
    %v927 = vpack.c.b16 %v905, %v903
    %v928 = vpack.c.b16 %v908, %v906
    %v929 = vpack.c.b16 %v909, %v907
    %v930 = vpack.c.b16 %v912, %v910
    %v931 = vpack.c.b16 %v913, %v911
    %v932 = vpack.c.b16 %v916, %v914
    %v933 = vpack.c.b16 %v917, %v915
    %950 = vmatprep.subr.bf16.mxu0 %v933
    %951 = vmatpush1.bf16.msra.mxu0 %v932
    %952 = vmatprep.subr.bf16.mxu0 %v931
    %953 = vmatpush1.bf16.msra.mxu0 %v930
    %954 = vmatprep.subr.bf16.mxu0 %v929
    %955 = vmatpush1.bf16.msra.mxu0 %v928
    %956 = vmatprep.subr.bf16.mxu0 %v927
    %957 = vmatpush1.bf16.msra.mxu0 %v926
    %958 = vmatprep.subr.bf16.mxu0 %v925
    %959 = vmatpush1.bf16.msra.mxu0 %v924
    %960 = vmatprep.subr.bf16.mxu0 %v923
    %961 = vmatpush1.bf16.msra.mxu0 %v922
    %962 = vmatprep.subr.bf16.mxu0 %v921
    %963 = vmatpush1.bf16.msra.mxu0 %v920
    %964 = vmatprep.subr.bf16.mxu0 %v919
    %965 = vmatpush1.bf16.msra.mxu0 %v918
    %966 = vmatprep.subr.bf16.mxu0 0
    %967 = vmatpush2.bf16.msra.mxu0 0
    %968 = vmatprep.subr.bf16.mxu0 0
    %969 = vmatpush2.bf16.msra.mxu0 0
    %970 = vmatprep.subr.bf16.mxu0 0
    %971 = vmatpush2.bf16.msra.mxu0 0
    %972 = vmatprep.subr.bf16.mxu0 0
    %973 = vmatpush2.bf16.msra.mxu0 0
    %974 = vmatprep.subr.bf16.mxu0 0
    %975 = vmatpush2.bf16.msra.mxu0 0
    %976 = vmatprep.subr.bf16.mxu0 0
    %977 = vmatpush2.bf16.msra.mxu0 0
    %978 = vmatprep.subr.bf16.mxu0 0
    %979 = vmatpush2.bf16.msra.mxu0 0
    %980 = vmatprep.subr.bf16.mxu0 0
    %981 = vmatpush2.bf16.msra.mxu0 0
    %982 = vmatprep.mubr.bf16.mxu0 0
    %983 = vmatmul.mubr.bf16.gmra.mxu0 %v869
    %v984 = vpop.f32.mrf.mxu0
    %v985 = vadd.f32 %v290, %v984
    %v986 = vpop.f32.mrf.mxu0
    %v987 = vadd.f32 %v294, %v986
    %v988 = vpop.f32.mrf.mxu0
    %v989 = vpop.f32.mrf.mxu0
    %990 = vdwg.mxu0
    %v991 = vadd.f32 %v823, %v985
    %v992 = vxor.u32 %v991, 2147483648
    %v993 = vmul.f32 %v992, 1.442695
    %v994 = vpow.pop %v993
    %v995 = vadd.f32 %v994, 1.0
    %v996 = vrcp.pop %v995
    %v997 = vmul.f32 1.0, %v996
    %v998 = vadd.f32 %v825, %v987
    %v999 = vxor.u32 %v998, 2147483648
    %v1000 = vmul.f32 %v999, 1.442695
    %v1001 = vpow.pop %v1000
    %v1002 = vadd.f32 %v1001, 1.0
    %v1003 = vrcp.pop %v1002
    %v1004 = vmul.f32 1.0, %v1003
    %v1005 = vmul.f32 %v1004, %v322
    %v1006 = vpack.c.bf16 %v1005, %v1005
    %v1023 = vunpack.c.l.b16 %v297
    %v1024 = vunpack.c.l.b16 %v298
    %v1025 = vunpack.c.l.b16 %v299
    %v1026 = vunpack.c.l.b16 %v300
    %v1027 = vunpack.c.l.b16 %v301
    %v1028 = vunpack.c.l.b16 %v302
    %v1029 = vunpack.c.l.b16 %v303
    %v1030 = vunpack.c.l.b16 %v304
    %v1031 = vunpack.c.l.b16 %v305
    %v1032 = vunpack.c.l.b16 %v306
    %v1033 = vunpack.c.l.b16 %v307
    %v1034 = vunpack.c.l.b16 %v308
    %v1035 = vunpack.c.l.b16 %v309
    %v1036 = vunpack.c.l.b16 %v310
    %v1037 = vunpack.c.l.b16 %v311
    %v1038 = vunpack.c.l.b16 %v312
    %v1039 = vpack.c.b16 %v1024, %v1023
    %v1040 = vpack.c.b16 %v1026, %v1025
    %v1041 = vpack.c.b16 %v1028, %v1027
    %v1042 = vpack.c.b16 %v1030, %v1029
    %v1043 = vpack.c.b16 %v1032, %v1031
    %v1044 = vpack.c.b16 %v1034, %v1033
    %v1045 = vpack.c.b16 %v1036, %v1035
    %v1046 = vpack.c.b16 %v1038, %v1037
    %1055 = vmatprep.subr.bf16.mxu0 0
    %1056 = vmatpush1.bf16.msra.mxu0 %v1046
    %1057 = vmatprep.subr.bf16.mxu0 0
    %1058 = vmatpush1.bf16.msra.mxu0 %v1045
    %1059 = vmatprep.subr.bf16.mxu0 0
    %1060 = vmatpush1.bf16.msra.mxu0 %v1044
    %1061 = vmatprep.subr.bf16.mxu0 0
    %1062 = vmatpush1.bf16.msra.mxu0 %v1043
    %1063 = vmatprep.subr.bf16.mxu0 0
    %1064 = vmatpush1.bf16.msra.mxu0 %v1042
    %1065 = vmatprep.subr.bf16.mxu0 0
    %1066 = vmatpush1.bf16.msra.mxu0 %v1041
    %1067 = vmatprep.subr.bf16.mxu0 0
    %1068 = vmatpush1.bf16.msra.mxu0 %v1040
    %1069 = vmatprep.subr.bf16.mxu0 0
    %1070 = vmatpush1.bf16.msra.mxu0 %v1039
    %1071 = vmatprep.subr.bf16.mxu0 0
    %1072 = vmatpush2.bf16.msra.mxu0 0
    %1073 = vmatprep.subr.bf16.mxu0 0
    %1074 = vmatpush2.bf16.msra.mxu0 0
    %1075 = vmatprep.subr.bf16.mxu0 0
    %1076 = vmatpush2.bf16.msra.mxu0 0
    %1077 = vmatprep.subr.bf16.mxu0 0
    %1078 = vmatpush2.bf16.msra.mxu0 0
    %1079 = vmatprep.subr.bf16.mxu0 0
    %1080 = vmatpush2.bf16.msra.mxu0 0
    %1081 = vmatprep.subr.bf16.mxu0 0
    %1082 = vmatpush2.bf16.msra.mxu0 0
    %1083 = vmatprep.subr.bf16.mxu0 0
    %1084 = vmatpush2.bf16.msra.mxu0 0
    %1085 = vmatprep.subr.bf16.mxu0 0
    %1086 = vmatpush2.bf16.msra.mxu0 0
    %1087 = vmatprep.mubr.bf16.mxu0 0
    %1088 = vmatmul.mubr.bf16.gmra.mxu0 %v1006
    %v1089 = vpop.f32.mrf.mxu0
    %v1090 = vadd.f32 0.0, %v1089
    %v1091 = vpop.f32.mrf.mxu0
    %v1092 = vpop.f32.mrf.mxu0
    %v1093 = vpop.f32.mrf.mxu0
    %1094 = vdwg.mxu0
    %v1095 = vadd.f32 %v864, %v1090
    %v1096 = vadd.f32 %v1095, %v318
    %v1097 = vtanh.pop %v1096
    %v1098 = vmul.f32 %v997, %v322
    %v1099 = vsub.f32 1.0, %v997
    %v1100 = vmul.f32 %v1099, %v1097
    %v1101 = vadd.f32 %v1098, %v1100
    %1102 = vst [vmem:[#allocation3] sm:$0xff] %v1101
    %s1103 = scalar_lea.vmem [#allocation4], 8
    %v1104 = vld [vmem:[%s1103] sm:$0xff]
    %v1105 = vpack.c.bf16 %v1104, %v1104
    %v1107 = vsel %vm341, %v1105, 0
    %1109 = vmatprep.subr.bf16.mxu0 0
    %1110 = vmatpush1.bf16.msra.mxu0 0
    %1111 = vmatprep.subr.bf16.mxu0 0
    %1112 = vmatpush1.bf16.msra.mxu0 0
    %1113 = vmatprep.subr.bf16.mxu0 0
    %1114 = vmatpush1.bf16.msra.mxu0 0
    %1115 = vmatprep.subr.bf16.mxu0 0
    %1116 = vmatpush1.bf16.msra.mxu0 0
    %1117 = vmatprep.subr.bf16.mxu0 0
    %1118 = vmatpush1.bf16.msra.mxu0 0
    %1119 = vmatprep.subr.bf16.mxu0 0
    %1120 = vmatpush1.bf16.msra.mxu0 0
    %1121 = vmatprep.subr.bf16.mxu0 0
    %1122 = vmatpush1.bf16.msra.mxu0 0
    %1123 = vmatprep.subr.bf16.mxu0 %v336
    %1124 = vmatpush1.bf16.msra.mxu0 %v335
    %1125 = vmatprep.subr.bf16.mxu0 0
    %1126 = vmatpush2.bf16.msra.mxu0 0
    %1127 = vmatprep.subr.bf16.mxu0 0
    %1128 = vmatpush2.bf16.msra.mxu0 0
    %1129 = vmatprep.subr.bf16.mxu0 0
    %1130 = vmatpush2.bf16.msra.mxu0 0
    %1131 = vmatprep.subr.bf16.mxu0 0
    %1132 = vmatpush2.bf16.msra.mxu0 0
    %1133 = vmatprep.subr.bf16.mxu0 0
    %1134 = vmatpush2.bf16.msra.mxu0 0
    %1135 = vmatprep.subr.bf16.mxu0 0
    %1136 = vmatpush2.bf16.msra.mxu0 0
    %1137 = vmatprep.subr.bf16.mxu0 0
    %1138 = vmatpush2.bf16.msra.mxu0 0
    %1139 = vmatprep.subr.bf16.mxu0 0
    %1140 = vmatpush2.bf16.msra.mxu0 0
    %1141 = vmatprep.mubr.bf16.mxu0 0
    %1142 = vmatmul.mubr.bf16.gmra.mxu0 %v1107
    %v1143 = vpop.f32.mrf.mxu0
    %v1144 = vadd.f32 0.0, %v1143
    %v1145 = vpop.f32.mrf.mxu0
    %v1146 = vadd.f32 0.0, %v1145
    %v1147 = vpop.f32.mrf.mxu0
    %v1148 = vpop.f32.mrf.mxu0
    %1149 = vdwg.mxu0
    %1150 = vmatprep.subr.bf16.mxu0 0
    %1151 = vmatpush1.bf16.msra.mxu0 0
    %1152 = vmatprep.subr.bf16.mxu0 0
    %1153 = vmatpush1.bf16.msra.mxu0 0
    %1154 = vmatprep.subr.bf16.mxu0 0
    %1155 = vmatpush1.bf16.msra.mxu0 0
    %1156 = vmatprep.subr.bf16.mxu0 0
    %1157 = vmatpush1.bf16.msra.mxu0 0
    %1158 = vmatprep.subr.bf16.mxu0 0
    %1159 = vmatpush1.bf16.msra.mxu0 0
    %1160 = vmatprep.subr.bf16.mxu0 0
    %1161 = vmatpush1.bf16.msra.mxu0 0
    %1162 = vmatprep.subr.bf16.mxu0 0
    %1163 = vmatpush1.bf16.msra.mxu0 0
    %1164 = vmatprep.subr.bf16.mxu0 0
    %1165 = vmatpush1.bf16.msra.mxu0 %v337
    %1166 = vmatprep.subr.bf16.mxu0 0
    %1167 = vmatpush2.bf16.msra.mxu0 0
    %1168 = vmatprep.subr.bf16.mxu0 0
    %1169 = vmatpush2.bf16.msra.mxu0 0
    %1170 = vmatprep.subr.bf16.mxu0 0
    %1171 = vmatpush2.bf16.msra.mxu0 0
    %1172 = vmatprep.subr.bf16.mxu0 0
    %1173 = vmatpush2.bf16.msra.mxu0 0
    %1174 = vmatprep.subr.bf16.mxu0 0
    %1175 = vmatpush2.bf16.msra.mxu0 0
    %1176 = vmatprep.subr.bf16.mxu0 0
    %1177 = vmatpush2.bf16.msra.mxu0 0
    %1178 = vmatprep.subr.bf16.mxu0 0
    %1179 = vmatpush2.bf16.msra.mxu0 0
    %1180 = vmatprep.subr.bf16.mxu0 0
    %1181 = vmatpush2.bf16.msra.mxu0 0
    %1182 = vmatprep.mubr.bf16.mxu0 0
    %1183 = vmatmul.mubr.bf16.gmra.mxu0 %v1107
    %v1184 = vpop.f32.mrf.mxu0
    %v1185 = vadd.f32 0.0, %v1184
    %v1186 = vpop.f32.mrf.mxu0
    %v1187 = vpop.f32.mrf.mxu0
    %v1188 = vpop.f32.mrf.mxu0
    %1189 = vdwg.mxu0
    %1190 = vmatprep.subr.bf16.mxu0 %v490
    %1191 = vmatpush1.bf16.msra.mxu0 %v489
    %1192 = vmatprep.subr.bf16.mxu0 %v488
    %1193 = vmatpush1.bf16.msra.mxu0 %v487
    %1194 = vmatprep.subr.bf16.mxu0 %v486
    %1195 = vmatpush1.bf16.msra.mxu0 %v485
    %1196 = vmatprep.subr.bf16.mxu0 %v484
    %1197 = vmatpush1.bf16.msra.mxu0 %v483
    %1198 = vmatprep.subr.bf16.mxu0 %v482
    %1199 = vmatpush1.bf16.msra.mxu0 %v481
    %1200 = vmatprep.subr.bf16.mxu0 %v480
    %1201 = vmatpush1.bf16.msra.mxu0 %v479
    %1202 = vmatprep.subr.bf16.mxu0 %v478
    %1203 = vmatpush1.bf16.msra.mxu0 %v477
    %1204 = vmatprep.subr.bf16.mxu0 %v476
    %1205 = vmatpush1.bf16.msra.mxu0 %v475
    %1206 = vmatprep.subr.bf16.mxu0 0
    %1207 = vmatpush2.bf16.msra.mxu0 0
    %1208 = vmatprep.subr.bf16.mxu0 0
    %1209 = vmatpush2.bf16.msra.mxu0 0
    %1210 = vmatprep.subr.bf16.mxu0 0
    %1211 = vmatpush2.bf16.msra.mxu0 0
    %1212 = vmatprep.subr.bf16.mxu0 0
    %1213 = vmatpush2.bf16.msra.mxu0 0
    %1214 = vmatprep.subr.bf16.mxu0 0
    %1215 = vmatpush2.bf16.msra.mxu0 0
    %1216 = vmatprep.subr.bf16.mxu0 0
    %1217 = vmatpush2.bf16.msra.mxu0 0
    %1218 = vmatprep.subr.bf16.mxu0 0
    %1219 = vmatpush2.bf16.msra.mxu0 0
    %1220 = vmatprep.subr.bf16.mxu0 0
    %1221 = vmatpush2.bf16.msra.mxu0 0
    %1222 = vmatprep.mubr.bf16.mxu0 0
    %1223 = vmatmul.mubr.bf16.gmra.mxu0 %v659
    %v1224 = vpop.f32.mrf.mxu0
    %v1225 = vadd.f32 %v207, %v1224
    %v1226 = vpop.f32.mrf.mxu0
    %v1227 = vadd.f32 %v211, %v1226
    %v1228 = vpop.f32.mrf.mxu0
    %v1229 = vpop.f32.mrf.mxu0
    %1230 = vdwg.mxu0
    %v1231 = vadd.f32 %v1144, %v1225
    %v1232 = vxor.u32 %v1231, 2147483648
    %v1233 = vmul.f32 %v1232, 1.442695
    %v1234 = vpow.pop %v1233
    %v1235 = vadd.f32 %v1234, 1.0
    %v1236 = vrcp.pop %v1235
    %v1237 = vmul.f32 1.0, %v1236
    %v1238 = vadd.f32 %v1146, %v1227
    %v1239 = vxor.u32 %v1238, 2147483648
    %v1240 = vmul.f32 %v1239, 1.442695
    %v1241 = vpow.pop %v1240
    %v1242 = vadd.f32 %v1241, 1.0
    %v1243 = vrcp.pop %v1242
    %v1244 = vmul.f32 1.0, %v1243
    %v1245 = vmul.f32 %v1244, %v658
    %v1246 = vpack.c.bf16 %v1245, %v1245
    %1247 = vmatprep.subr.bf16.mxu0 0
    %1248 = vmatpush1.bf16.msra.mxu0 %v603
    %1249 = vmatprep.subr.bf16.mxu0 0
    %1250 = vmatpush1.bf16.msra.mxu0 %v602
    %1251 = vmatprep.subr.bf16.mxu0 0
    %1252 = vmatpush1.bf16.msra.mxu0 %v601
    %1253 = vmatprep.subr.bf16.mxu0 0
    %1254 = vmatpush1.bf16.msra.mxu0 %v600
    %1255 = vmatprep.subr.bf16.mxu0 0
    %1256 = vmatpush1.bf16.msra.mxu0 %v599
    %1257 = vmatprep.subr.bf16.mxu0 0
    %1258 = vmatpush1.bf16.msra.mxu0 %v598
    %1259 = vmatprep.subr.bf16.mxu0 0
    %1260 = vmatpush1.bf16.msra.mxu0 %v597
    %1261 = vmatprep.subr.bf16.mxu0 0
    %1262 = vmatpush1.bf16.msra.mxu0 %v596
    %1263 = vmatprep.subr.bf16.mxu0 0
    %1264 = vmatpush2.bf16.msra.mxu0 0
    %1265 = vmatprep.subr.bf16.mxu0 0
    %1266 = vmatpush2.bf16.msra.mxu0 0
    %1267 = vmatprep.subr.bf16.mxu0 0
    %1268 = vmatpush2.bf16.msra.mxu0 0
    %1269 = vmatprep.subr.bf16.mxu0 0
    %1270 = vmatpush2.bf16.msra.mxu0 0
    %1271 = vmatprep.subr.bf16.mxu0 0
    %1272 = vmatpush2.bf16.msra.mxu0 0
    %1273 = vmatprep.subr.bf16.mxu0 0
    %1274 = vmatpush2.bf16.msra.mxu0 0
    %1275 = vmatprep.subr.bf16.mxu0 0
    %1276 = vmatpush2.bf16.msra.mxu0 0
    %1277 = vmatprep.subr.bf16.mxu0 0
    %1278 = vmatpush2.bf16.msra.mxu0 0
    %1279 = vmatprep.mubr.bf16.mxu0 0
    %1280 = vmatmul.mubr.bf16.gmra.mxu0 %v1246
    %v1281 = vpop.f32.mrf.mxu0
    %v1282 = vadd.f32 0.0, %v1281
    %v1283 = vpop.f32.mrf.mxu0
    %v1284 = vpop.f32.mrf.mxu0
    %v1285 = vpop.f32.mrf.mxu0
    %1286 = vdwg.mxu0
    %v1287 = vadd.f32 %v1185, %v1282
    %v1288 = vadd.f32 %v1287, %v235
    %v1289 = vtanh.pop %v1288
    %v1290 = vmul.f32 %v1237, %v658
    %v1291 = vsub.f32 1.0, %v1237
    %v1292 = vmul.f32 %v1291, %v1289
    %v1293 = vadd.f32 %v1290, %v1292
    %v1294 = vpack.c.bf16 %v1293, %v1293
    %1295 = vmatprep.subr.bf16.mxu0 %v762
    %1296 = vmatpush1.bf16.msra.mxu0 %v761
    %1297 = vmatprep.subr.bf16.mxu0 %v759
    %1298 = vmatpush1.bf16.msra.mxu0 %v758
    %1299 = vmatprep.subr.bf16.mxu0 %v756
    %1300 = vmatpush1.bf16.msra.mxu0 %v755
    %1301 = vmatprep.subr.bf16.mxu0 %v753
    %1302 = vmatpush1.bf16.msra.mxu0 %v752
    %1303 = vmatprep.subr.bf16.mxu0 %v750
    %1304 = vmatpush1.bf16.msra.mxu0 %v749
    %1305 = vmatprep.subr.bf16.mxu0 %v747
    %1306 = vmatpush1.bf16.msra.mxu0 %v746
    %1307 = vmatprep.subr.bf16.mxu0 %v744
    %1308 = vmatpush1.bf16.msra.mxu0 %v743
    %1309 = vmatprep.subr.bf16.mxu0 %v741
    %1310 = vmatpush1.bf16.msra.mxu0 %v740
    %1311 = vmatprep.subr.bf16.mxu0 0
    %1312 = vmatpush2.bf16.msra.mxu0 0
    %1313 = vmatprep.subr.bf16.mxu0 0
    %1314 = vmatpush2.bf16.msra.mxu0 0
    %1315 = vmatprep.subr.bf16.mxu0 0
    %1316 = vmatpush2.bf16.msra.mxu0 0
    %1317 = vmatprep.subr.bf16.mxu0 0
    %1318 = vmatpush2.bf16.msra.mxu0 0
    %1319 = vmatprep.subr.bf16.mxu0 0
    %1320 = vmatpush2.bf16.msra.mxu0 0
    %1321 = vmatprep.subr.bf16.mxu0 0
    %1322 = vmatpush2.bf16.msra.mxu0 0
    %1323 = vmatprep.subr.bf16.mxu0 0
    %1324 = vmatpush2.bf16.msra.mxu0 0
    %1325 = vmatprep.subr.bf16.mxu0 0
    %1326 = vmatpush2.bf16.msra.mxu0 0
    %1327 = vmatprep.mubr.bf16.mxu0 0
    %1328 = vmatmul.mubr.bf16.gmra.mxu0 %v1294
    %v1329 = vpop.f32.mrf.mxu0
    %v1330 = vadd.f32 0.0, %v1329
    %v1331 = vpop.f32.mrf.mxu0
    %v1332 = vadd.f32 0.0, %v1331
    %v1333 = vpop.f32.mrf.mxu0
    %v1334 = vpop.f32.mrf.mxu0
    %1335 = vdwg.mxu0
    %1336 = vmatprep.subr.bf16.mxu0 0
    %1337 = vmatpush1.bf16.msra.mxu0 %v763
    %1338 = vmatprep.subr.bf16.mxu0 0
    %1339 = vmatpush1.bf16.msra.mxu0 %v760
    %1340 = vmatprep.subr.bf16.mxu0 0
    %1341 = vmatpush1.bf16.msra.mxu0 %v757
    %1342 = vmatprep.subr.bf16.mxu0 0
    %1343 = vmatpush1.bf16.msra.mxu0 %v754
    %1344 = vmatprep.subr.bf16.mxu0 0
    %1345 = vmatpush1.bf16.msra.mxu0 %v751
    %1346 = vmatprep.subr.bf16.mxu0 0
    %1347 = vmatpush1.bf16.msra.mxu0 %v748
    %1348 = vmatprep.subr.bf16.mxu0 0
    %1349 = vmatpush1.bf16.msra.mxu0 %v745
    %1350 = vmatprep.subr.bf16.mxu0 0
    %1351 = vmatpush1.bf16.msra.mxu0 %v742
    %1352 = vmatprep.subr.bf16.mxu0 0
    %1353 = vmatpush2.bf16.msra.mxu0 0
    %1354 = vmatprep.subr.bf16.mxu0 0
    %1355 = vmatpush2.bf16.msra.mxu0 0
    %1356 = vmatprep.subr.bf16.mxu0 0
    %1357 = vmatpush2.bf16.msra.mxu0 0
    %1358 = vmatprep.subr.bf16.mxu0 0
    %1359 = vmatpush2.bf16.msra.mxu0 0
    %1360 = vmatprep.subr.bf16.mxu0 0
    %1361 = vmatpush2.bf16.msra.mxu0 0
    %1362 = vmatprep.subr.bf16.mxu0 0
    %1363 = vmatpush2.bf16.msra.mxu0 0
    %1364 = vmatprep.subr.bf16.mxu0 0
    %1365 = vmatpush2.bf16.msra.mxu0 0
    %1366 = vmatprep.subr.bf16.mxu0 0
    %1367 = vmatpush2.bf16.msra.mxu0 0
    %1368 = vmatprep.mubr.bf16.mxu0 0
    %1369 = vmatmul.mubr.bf16.gmra.mxu0 %v1294
    %v1370 = vpop.f32.mrf.mxu0
    %v1371 = vadd.f32 0.0, %v1370
    %v1372 = vpop.f32.mrf.mxu0
    %v1373 = vpop.f32.mrf.mxu0
    %v1374 = vpop.f32.mrf.mxu0
    %1375 = vdwg.mxu0
    %v1376 = vpack.c.bf16 %v1101, %v1101
    %1377 = vmatprep.subr.bf16.mxu0 %v933
    %1378 = vmatpush1.bf16.msra.mxu0 %v932
    %1379 = vmatprep.subr.bf16.mxu0 %v931
    %1380 = vmatpush1.bf16.msra.mxu0 %v930
    %1381 = vmatprep.subr.bf16.mxu0 %v929
    %1382 = vmatpush1.bf16.msra.mxu0 %v928
    %1383 = vmatprep.subr.bf16.mxu0 %v927
    %1384 = vmatpush1.bf16.msra.mxu0 %v926
    %1385 = vmatprep.subr.bf16.mxu0 %v925
    %1386 = vmatpush1.bf16.msra.mxu0 %v924
    %1387 = vmatprep.subr.bf16.mxu0 %v923
    %1388 = vmatpush1.bf16.msra.mxu0 %v922
    %1389 = vmatprep.subr.bf16.mxu0 %v921
    %1390 = vmatpush1.bf16.msra.mxu0 %v920
    %1391 = vmatprep.subr.bf16.mxu0 %v919
    %1392 = vmatpush1.bf16.msra.mxu0 %v918
    %1393 = vmatprep.subr.bf16.mxu0 0
    %1394 = vmatpush2.bf16.msra.mxu0 0
    %1395 = vmatprep.subr.bf16.mxu0 0
    %1396 = vmatpush2.bf16.msra.mxu0 0
    %1397 = vmatprep.subr.bf16.mxu0 0
    %1398 = vmatpush2.bf16.msra.mxu0 0
    %1399 = vmatprep.subr.bf16.mxu0 0
    %1400 = vmatpush2.bf16.msra.mxu0 0
    %1401 = vmatprep.subr.bf16.mxu0 0
    %1402 = vmatpush2.bf16.msra.mxu0 0
    %1403 = vmatprep.subr.bf16.mxu0 0
    %1404 = vmatpush2.bf16.msra.mxu0 0
    %1405 = vmatprep.subr.bf16.mxu0 0
    %1406 = vmatpush2.bf16.msra.mxu0 0
    %1407 = vmatprep.subr.bf16.mxu0 0
    %1408 = vmatpush2.bf16.msra.mxu0 0
    %1409 = vmatprep.mubr.bf16.mxu0 0
    %1410 = vmatmul.mubr.bf16.gmra.mxu0 %v1376
    %v1411 = vpop.f32.mrf.mxu0
    %v1412 = vadd.f32 %v290, %v1411
    %v1413 = vpop.f32.mrf.mxu0
    %v1414 = vadd.f32 %v294, %v1413
    %v1415 = vpop.f32.mrf.mxu0
    %v1416 = vpop.f32.mrf.mxu0
    %1417 = vdwg.mxu0
    %v1418 = vadd.f32 %v1330, %v1412
    %v1419 = vxor.u32 %v1418, 2147483648
    %v1420 = vmul.f32 %v1419, 1.442695
    %v1421 = vpow.pop %v1420
    %v1422 = vadd.f32 %v1421, 1.0
    %v1423 = vrcp.pop %v1422
    %v1424 = vmul.f32 1.0, %v1423
    %v1425 = vadd.f32 %v1332, %v1414
    %v1426 = vxor.u32 %v1425, 2147483648
    %v1427 = vmul.f32 %v1426, 1.442695
    %v1428 = vpow.pop %v1427
    %v1429 = vadd.f32 %v1428, 1.0
    %v1430 = vrcp.pop %v1429
    %v1431 = vmul.f32 1.0, %v1430
    %v1432 = vmul.f32 %v1431, %v1101
    %v1433 = vpack.c.bf16 %v1432, %v1432
    %1434 = vmatprep.subr.bf16.mxu0 0
    %1435 = vmatpush1.bf16.msra.mxu0 %v1046
    %1436 = vmatprep.subr.bf16.mxu0 0
    %1437 = vmatpush1.bf16.msra.mxu0 %v1045
    %1438 = vmatprep.subr.bf16.mxu0 0
    %1439 = vmatpush1.bf16.msra.mxu0 %v1044
    %1440 = vmatprep.subr.bf16.mxu0 0
    %1441 = vmatpush1.bf16.msra.mxu0 %v1043
    %1442 = vmatprep.subr.bf16.mxu0 0
    %1443 = vmatpush1.bf16.msra.mxu0 %v1042
    %1444 = vmatprep.subr.bf16.mxu0 0
    %1445 = vmatpush1.bf16.msra.mxu0 %v1041
    %1446 = vmatprep.subr.bf16.mxu0 0
    %1447 = vmatpush1.bf16.msra.mxu0 %v1040
    %1448 = vmatprep.subr.bf16.mxu0 0
    %1449 = vmatpush1.bf16.msra.mxu0 %v1039
    %1450 = vmatprep.subr.bf16.mxu0 0
    %1451 = vmatpush2.bf16.msra.mxu0 0
    %1452 = vmatprep.subr.bf16.mxu0 0
    %1453 = vmatpush2.bf16.msra.mxu0 0
    %1454 = vmatprep.subr.bf16.mxu0 0
    %1455 = vmatpush2.bf16.msra.mxu0 0
    %1456 = vmatprep.subr.bf16.mxu0 0
    %1457 = vmatpush2.bf16.msra.mxu0 0
    %1458 = vmatprep.subr.bf16.mxu0 0
    %1459 = vmatpush2.bf16.msra.mxu0 0
    %1460 = vmatprep.subr.bf16.mxu0 0
    %1461 = vmatpush2.bf16.msra.mxu0 0
    %1462 = vmatprep.subr.bf16.mxu0 0
    %1463 = vmatpush2.bf16.msra.mxu0 0
    %1464 = vmatprep.subr.bf16.mxu0 0
    %1465 = vmatpush2.bf16.msra.mxu0 0
    %1466 = vmatprep.mubr.bf16.mxu0 0
    %1467 = vmatmul.mubr.bf16.gmra.mxu0 %v1433
    %v1468 = vpop.f32.mrf.mxu0
    %v1469 = vadd.f32 0.0, %v1468
    %v1470 = vpop.f32.mrf.mxu0
    %v1471 = vpop.f32.mrf.mxu0
    %v1472 = vpop.f32.mrf.mxu0
    %1473 = vdwg.mxu0
    %v1474 = vadd.f32 %v1371, %v1469
    %v1475 = vadd.f32 %v1474, %v318
    %v1476 = vtanh.pop %v1475
    %v1477 = vmul.f32 %v1424, %v1101
    %v1478 = vsub.f32 1.0, %v1424
    %v1479 = vmul.f32 %v1478, %v1476
    %v1480 = vadd.f32 %v1477, %v1479
    %s1481 = scalar_lea.vmem [#allocation3], 8
    %1482 = vst [vmem:[%s1481] sm:$0xff] %v1480
    %s1483 = scalar_lea.vmem [#allocation4], 16
    %v1484 = vld [vmem:[%s1483] sm:$0xff]
    %v1485 = vpack.c.bf16 %v1484, %v1484
    %v1487 = vsel %vm341, %v1485, 0
    %1489 = vmatprep.subr.bf16.mxu0 0
    %1490 = vmatpush1.bf16.msra.mxu0 0
    %1491 = vmatprep.subr.bf16.mxu0 0
    %1492 = vmatpush1.bf16.msra.mxu0 0
    %1493 = vmatprep.subr.bf16.mxu0 0
    %1494 = vmatpush1.bf16.msra.mxu0 0
    %1495 = vmatprep.subr.bf16.mxu0 0
    %1496 = vmatpush1.bf16.msra.mxu0 0
    %1497 = vmatprep.subr.bf16.mxu0 0
    %1498 = vmatpush1.bf16.msra.mxu0 0
    %1499 = vmatprep.subr.bf16.mxu0 0
    %1500 = vmatpush1.bf16.msra.mxu0 0
    %1501 = vmatprep.subr.bf16.mxu0 0
    %1502 = vmatpush1.bf16.msra.mxu0 0
    %1503 = vmatprep.subr.bf16.mxu0 %v336
    %1504 = vmatpush1.bf16.msra.mxu0 %v335
    %1505 = vmatprep.subr.bf16.mxu0 0
    %1506 = vmatpush2.bf16.msra.mxu0 0
    %1507 = vmatprep.subr.bf16.mxu0 0
    %1508 = vmatpush2.bf16.msra.mxu0 0
    %1509 = vmatprep.subr.bf16.mxu0 0
    %1510 = vmatpush2.bf16.msra.mxu0 0
    %1511 = vmatprep.subr.bf16.mxu0 0
    %1512 = vmatpush2.bf16.msra.mxu0 0
    %1513 = vmatprep.subr.bf16.mxu0 0
    %1514 = vmatpush2.bf16.msra.mxu0 0
    %1515 = vmatprep.subr.bf16.mxu0 0
    %1516 = vmatpush2.bf16.msra.mxu0 0
    %1517 = vmatprep.subr.bf16.mxu0 0
    %1518 = vmatpush2.bf16.msra.mxu0 0
    %1519 = vmatprep.subr.bf16.mxu0 0
    %1520 = vmatpush2.bf16.msra.mxu0 0
    %1521 = vmatprep.mubr.bf16.mxu0 0
    %1522 = vmatmul.mubr.bf16.gmra.mxu0 %v1487
    %v1523 = vpop.f32.mrf.mxu0
    %v1524 = vadd.f32 0.0, %v1523
    %v1525 = vpop.f32.mrf.mxu0
    %v1526 = vadd.f32 0.0, %v1525
    %v1527 = vpop.f32.mrf.mxu0
    %v1528 = vpop.f32.mrf.mxu0
    %1529 = vdwg.mxu0
    %1530 = vmatprep.subr.bf16.mxu0 0
    %1531 = vmatpush1.bf16.msra.mxu0 0
    %1532 = vmatprep.subr.bf16.mxu0 0
    %1533 = vmatpush1.bf16.msra.mxu0 0
    %1534 = vmatprep.subr.bf16.mxu0 0
    %1535 = vmatpush1.bf16.msra.mxu0 0
    %1536 = vmatprep.subr.bf16.mxu0 0
    %1537 = vmatpush1.bf16.msra.mxu0 0
    %1538 = vmatprep.subr.bf16.mxu0 0
    %1539 = vmatpush1.bf16.msra.mxu0 0
    %1540 = vmatprep.subr.bf16.mxu0 0
    %1541 = vmatpush1.bf16.msra.mxu0 0
    %1542 = vmatprep.subr.bf16.mxu0 0
    %1543 = vmatpush1.bf16.msra.mxu0 0
    %1544 = vmatprep.subr.bf16.mxu0 0
    %1545 = vmatpush1.bf16.msra.mxu0 %v337
    %1546 = vmatprep.subr.bf16.mxu0 0
    %1547 = vmatpush2.bf16.msra.mxu0 0
    %1548 = vmatprep.subr.bf16.mxu0 0
    %1549 = vmatpush2.bf16.msra.mxu0 0
    %1550 = vmatprep.subr.bf16.mxu0 0
    %1551 = vmatpush2.bf16.msra.mxu0 0
    %1552 = vmatprep.subr.bf16.mxu0 0
    %1553 = vmatpush2.bf16.msra.mxu0 0
    %1554 = vmatprep.subr.bf16.mxu0 0
    %1555 = vmatpush2.bf16.msra.mxu0 0
    %1556 = vmatprep.subr.bf16.mxu0 0
    %1557 = vmatpush2.bf16.msra.mxu0 0
    %1558 = vmatprep.subr.bf16.mxu0 0
    %1559 = vmatpush2.bf16.msra.mxu0 0
    %1560 = vmatprep.subr.bf16.mxu0 0
    %1561 = vmatpush2.bf16.msra.mxu0 0
    %1562 = vmatprep.mubr.bf16.mxu0 0
    %1563 = vmatmul.mubr.bf16.gmra.mxu0 %v1487
    %v1564 = vpop.f32.mrf.mxu0
    %v1565 = vadd.f32 0.0, %v1564
    %v1566 = vpop.f32.mrf.mxu0
    %v1567 = vpop.f32.mrf.mxu0
    %v1568 = vpop.f32.mrf.mxu0
    %1569 = vdwg.mxu0
    %1570 = vmatprep.subr.bf16.mxu0 %v490
    %1571 = vmatpush1.bf16.msra.mxu0 %v489
    %1572 = vmatprep.subr.bf16.mxu0 %v488
    %1573 = vmatpush1.bf16.msra.mxu0 %v487
    %1574 = vmatprep.subr.bf16.mxu0 %v486
    %1575 = vmatpush1.bf16.msra.mxu0 %v485
    %1576 = vmatprep.subr.bf16.mxu0 %v484
    %1577 = vmatpush1.bf16.msra.mxu0 %v483
    %1578 = vmatprep.subr.bf16.mxu0 %v482
    %1579 = vmatpush1.bf16.msra.mxu0 %v481
    %1580 = vmatprep.subr.bf16.mxu0 %v480
    %1581 = vmatpush1.bf16.msra.mxu0 %v479
    %1582 = vmatprep.subr.bf16.mxu0 %v478
    %1583 = vmatpush1.bf16.msra.mxu0 %v477
    %1584 = vmatprep.subr.bf16.mxu0 %v476
    %1585 = vmatpush1.bf16.msra.mxu0 %v475
    %1586 = vmatprep.subr.bf16.mxu0 0
    %1587 = vmatpush2.bf16.msra.mxu0 0
    %1588 = vmatprep.subr.bf16.mxu0 0
    %1589 = vmatpush2.bf16.msra.mxu0 0
    %1590 = vmatprep.subr.bf16.mxu0 0
    %1591 = vmatpush2.bf16.msra.mxu0 0
    %1592 = vmatprep.subr.bf16.mxu0 0
    %1593 = vmatpush2.bf16.msra.mxu0 0
    %1594 = vmatprep.subr.bf16.mxu0 0
    %1595 = vmatpush2.bf16.msra.mxu0 0
    %1596 = vmatprep.subr.bf16.mxu0 0
    %1597 = vmatpush2.bf16.msra.mxu0 0
    %1598 = vmatprep.subr.bf16.mxu0 0
    %1599 = vmatpush2.bf16.msra.mxu0 0
    %1600 = vmatprep.subr.bf16.mxu0 0
    %1601 = vmatpush2.bf16.msra.mxu0 0
    %1602 = vmatprep.mubr.bf16.mxu0 0
    %1603 = vmatmul.mubr.bf16.gmra.mxu0 %v1294
    %v1604 = vpop.f32.mrf.mxu0
    %v1605 = vadd.f32 %v207, %v1604
    %v1606 = vpop.f32.mrf.mxu0
    %v1607 = vadd.f32 %v211, %v1606
    %v1608 = vpop.f32.mrf.mxu0
    %v1609 = vpop.f32.mrf.mxu0
    %1610 = vdwg.mxu0
    %v1611 = vadd.f32 %v1524, %v1605
    %v1612 = vxor.u32 %v1611, 2147483648
    %v1613 = vmul.f32 %v1612, 1.442695
    %v1614 = vpow.pop %v1613
    %v1615 = vadd.f32 %v1614, 1.0
    %v1616 = vrcp.pop %v1615
    %v1617 = vmul.f32 1.0, %v1616
    %v1618 = vadd.f32 %v1526, %v1607
    %v1619 = vxor.u32 %v1618, 2147483648
    %v1620 = vmul.f32 %v1619, 1.442695
    %v1621 = vpow.pop %v1620
    %v1622 = vadd.f32 %v1621, 1.0
    %v1623 = vrcp.pop %v1622
    %v1624 = vmul.f32 1.0, %v1623
    %v1625 = vmul.f32 %v1624, %v1293
    %v1626 = vpack.c.bf16 %v1625, %v1625
    %1627 = vmatprep.subr.bf16.mxu0 0
    %1628 = vmatpush1.bf16.msra.mxu0 %v603
    %1629 = vmatprep.subr.bf16.mxu0 0
    %1630 = vmatpush1.bf16.msra.mxu0 %v602
    %1631 = vmatprep.subr.bf16.mxu0 0
    %1632 = vmatpush1.bf16.msra.mxu0 %v601
    %1633 = vmatprep.subr.bf16.mxu0 0
    %1634 = vmatpush1.bf16.msra.mxu0 %v600
    %1635 = vmatprep.subr.bf16.mxu0 0
    %1636 = vmatpush1.bf16.msra.mxu0 %v599
    %1637 = vmatprep.subr.bf16.mxu0 0
    %1638 = vmatpush1.bf16.msra.mxu0 %v598
    %1639 = vmatprep.subr.bf16.mxu0 0
    %1640 = vmatpush1.bf16.msra.mxu0 %v597
    %1641 = vmatprep.subr.bf16.mxu0 0
    %1642 = vmatpush1.bf16.msra.mxu0 %v596
    %1643 = vmatprep.subr.bf16.mxu0 0
    %1644 = vmatpush2.bf16.msra.mxu0 0
    %1645 = vmatprep.subr.bf16.mxu0 0
    %1646 = vmatpush2.bf16.msra.mxu0 0
    %1647 = vmatprep.subr.bf16.mxu0 0
    %1648 = vmatpush2.bf16.msra.mxu0 0
    %1649 = vmatprep.subr.bf16.mxu0 0
    %1650 = vmatpush2.bf16.msra.mxu0 0
    %1651 = vmatprep.subr.bf16.mxu0 0
    %1652 = vmatpush2.bf16.msra.mxu0 0
    %1653 = vmatprep.subr.bf16.mxu0 0
    %1654 = vmatpush2.bf16.msra.mxu0 0
    %1655 = vmatprep.subr.bf16.mxu0 0
    %1656 = vmatpush2.bf16.msra.mxu0 0
    %1657 = vmatprep.subr.bf16.mxu0 0
    %1658 = vmatpush2.bf16.msra.mxu0 0
    %1659 = vmatprep.mubr.bf16.mxu0 0
    %1660 = vmatmul.mubr.bf16.gmra.mxu0 %v1626
    %v1661 = vpop.f32.mrf.mxu0
    %v1662 = vadd.f32 0.0, %v1661
    %v1663 = vpop.f32.mrf.mxu0
    %v1664 = vpop.f32.mrf.mxu0
    %v1665 = vpop.f32.mrf.mxu0
    %1666 = vdwg.mxu0
    %v1667 = vadd.f32 %v1565, %v1662
    %v1668 = vadd.f32 %v1667, %v235
    %v1669 = vtanh.pop %v1668
    %v1670 = vmul.f32 %v1617, %v1293
    %v1671 = vsub.f32 1.0, %v1617
    %v1672 = vmul.f32 %v1671, %v1669
    %v1673 = vadd.f32 %v1670, %v1672
    %v1674 = vpack.c.bf16 %v1673, %v1673
    %1675 = vmatprep.subr.bf16.mxu0 %v762
    %1676 = vmatpush1.bf16.msra.mxu0 %v761
    %1677 = vmatprep.subr.bf16.mxu0 %v759
    %1678 = vmatpush1.bf16.msra.mxu0 %v758
    %1679 = vmatprep.subr.bf16.mxu0 %v756
    %1680 = vmatpush1.bf16.msra.mxu0 %v755
    %1681 = vmatprep.subr.bf16.mxu0 %v753
    %1682 = vmatpush1.bf16.msra.mxu0 %v752
    %1683 = vmatprep.subr.bf16.mxu0 %v750
    %1684 = vmatpush1.bf16.msra.mxu0 %v749
    %1685 = vmatprep.subr.bf16.mxu0 %v747
    %1686 = vmatpush1.bf16.msra.mxu0 %v746
    %1687 = vmatprep.subr.bf16.mxu0 %v744
    %1688 = vmatpush1.bf16.msra.mxu0 %v743
    %1689 = vmatprep.subr.bf16.mxu0 %v741
    %1690 = vmatpush1.bf16.msra.mxu0 %v740
    %1691 = vmatprep.subr.bf16.mxu0 0
    %1692 = vmatpush2.bf16.msra.mxu0 0
    %1693 = vmatprep.subr.bf16.mxu0 0
    %1694 = vmatpush2.bf16.msra.mxu0 0
    %1695 = vmatprep.subr.bf16.mxu0 0
    %1696 = vmatpush2.bf16.msra.mxu0 0
    %1697 = vmatprep.subr.bf16.mxu0 0
    %1698 = vmatpush2.bf16.msra.mxu0 0
    %1699 = vmatprep.subr.bf16.mxu0 0
    %1700 = vmatpush2.bf16.msra.mxu0 0
    %1701 = vmatprep.subr.bf16.mxu0 0
    %1702 = vmatpush2.bf16.msra.mxu0 0
    %1703 = vmatprep.subr.bf16.mxu0 0
    %1704 = vmatpush2.bf16.msra.mxu0 0
    %1705 = vmatprep.subr.bf16.mxu0 0
    %1706 = vmatpush2.bf16.msra.mxu0 0
    %1707 = vmatprep.mubr.bf16.mxu0 0
    %1708 = vmatmul.mubr.bf16.gmra.mxu0 %v1674
    %v1709 = vpop.f32.mrf.mxu0
    %v1710 = vadd.f32 0.0, %v1709
    %v1711 = vpop.f32.mrf.mxu0
    %v1712 = vadd.f32 0.0, %v1711
    %v1713 = vpop.f32.mrf.mxu0
    %v1714 = vpop.f32.mrf.mxu0
    %1715 = vdwg.mxu0
    %1716 = vmatprep.subr.bf16.mxu0 0
    %1717 = vmatpush1.bf16.msra.mxu0 %v763
    %1718 = vmatprep.subr.bf16.mxu0 0
    %1719 = vmatpush1.bf16.msra.mxu0 %v760
    %1720 = vmatprep.subr.bf16.mxu0 0
    %1721 = vmatpush1.bf16.msra.mxu0 %v757
    %1722 = vmatprep.subr.bf16.mxu0 0
    %1723 = vmatpush1.bf16.msra.mxu0 %v754
    %1724 = vmatprep.subr.bf16.mxu0 0
    %1725 = vmatpush1.bf16.msra.mxu0 %v751
    %1726 = vmatprep.subr.bf16.mxu0 0
    %1727 = vmatpush1.bf16.msra.mxu0 %v748
    %1728 = vmatprep.subr.bf16.mxu0 0
    %1729 = vmatpush1.bf16.msra.mxu0 %v745
    %1730 = vmatprep.subr.bf16.mxu0 0
    %1731 = vmatpush1.bf16.msra.mxu0 %v742
    %1732 = vmatprep.subr.bf16.mxu0 0
    %1733 = vmatpush2.bf16.msra.mxu0 0
    %1734 = vmatprep.subr.bf16.mxu0 0
    %1735 = vmatpush2.bf16.msra.mxu0 0
    %1736 = vmatprep.subr.bf16.mxu0 0
    %1737 = vmatpush2.bf16.msra.mxu0 0
    %1738 = vmatprep.subr.bf16.mxu0 0
    %1739 = vmatpush2.bf16.msra.mxu0 0
    %1740 = vmatprep.subr.bf16.mxu0 0
    %1741 = vmatpush2.bf16.msra.mxu0 0
    %1742 = vmatprep.subr.bf16.mxu0 0
    %1743 = vmatpush2.bf16.msra.mxu0 0
    %1744 = vmatprep.subr.bf16.mxu0 0
    %1745 = vmatpush2.bf16.msra.mxu0 0
    %1746 = vmatprep.subr.bf16.mxu0 0
    %1747 = vmatpush2.bf16.msra.mxu0 0
    %1748 = vmatprep.mubr.bf16.mxu0 0
    %1749 = vmatmul.mubr.bf16.gmra.mxu0 %v1674
    %v1750 = vpop.f32.mrf.mxu0
    %v1751 = vadd.f32 0.0, %v1750
    %v1752 = vpop.f32.mrf.mxu0
    %v1753 = vpop.f32.mrf.mxu0
    %v1754 = vpop.f32.mrf.mxu0
    %1755 = vdwg.mxu0
    %v1756 = vpack.c.bf16 %v1480, %v1480
    %1757 = vmatprep.subr.bf16.mxu0 %v933
    %1758 = vmatpush1.bf16.msra.mxu0 %v932
    %1759 = vmatprep.subr.bf16.mxu0 %v931
    %1760 = vmatpush1.bf16.msra.mxu0 %v930
    %1761 = vmatprep.subr.bf16.mxu0 %v929
    %1762 = vmatpush1.bf16.msra.mxu0 %v928
    %1763 = vmatprep.subr.bf16.mxu0 %v927
    %1764 = vmatpush1.bf16.msra.mxu0 %v926
    %1765 = vmatprep.subr.bf16.mxu0 %v925
    %1766 = vmatpush1.bf16.msra.mxu0 %v924
    %1767 = vmatprep.subr.bf16.mxu0 %v923
    %1768 = vmatpush1.bf16.msra.mxu0 %v922
    %1769 = vmatprep.subr.bf16.mxu0 %v921
    %1770 = vmatpush1.bf16.msra.mxu0 %v920
    %1771 = vmatprep.subr.bf16.mxu0 %v919
    %1772 = vmatpush1.bf16.msra.mxu0 %v918
    %1773 = vmatprep.subr.bf16.mxu0 0
    %1774 = vmatpush2.bf16.msra.mxu0 0
    %1775 = vmatprep.subr.bf16.mxu0 0
    %1776 = vmatpush2.bf16.msra.mxu0 0
    %1777 = vmatprep.subr.bf16.mxu0 0
    %1778 = vmatpush2.bf16.msra.mxu0 0
    %1779 = vmatprep.subr.bf16.mxu0 0
    %1780 = vmatpush2.bf16.msra.mxu0 0
    %1781 = vmatprep.subr.bf16.mxu0 0
    %1782 = vmatpush2.bf16.msra.mxu0 0
    %1783 = vmatprep.subr.bf16.mxu0 0
    %1784 = vmatpush2.bf16.msra.mxu0 0
    %1785 = vmatprep.subr.bf16.mxu0 0
    %1786 = vmatpush2.bf16.msra.mxu0 0
    %1787 = vmatprep.subr.bf16.mxu0 0
    %1788 = vmatpush2.bf16.msra.mxu0 0
    %1789 = vmatprep.mubr.bf16.mxu0 0
    %1790 = vmatmul.mubr.bf16.gmra.mxu0 %v1756
    %v1791 = vpop.f32.mrf.mxu0
    %v1792 = vadd.f32 %v290, %v1791
    %v1793 = vpop.f32.mrf.mxu0
    %v1794 = vadd.f32 %v294, %v1793
    %v1795 = vpop.f32.mrf.mxu0
    %v1796 = vpop.f32.mrf.mxu0
    %1797 = vdwg.mxu0
    %v1798 = vadd.f32 %v1710, %v1792
    %v1799 = vxor.u32 %v1798, 2147483648
    %v1800 = vmul.f32 %v1799, 1.442695
    %v1801 = vpow.pop %v1800
    %v1802 = vadd.f32 %v1801, 1.0
    %v1803 = vrcp.pop %v1802
    %v1804 = vmul.f32 1.0, %v1803
    %v1805 = vadd.f32 %v1712, %v1794
    %v1806 = vxor.u32 %v1805, 2147483648
    %v1807 = vmul.f32 %v1806, 1.442695
    %v1808 = vpow.pop %v1807
    %v1809 = vadd.f32 %v1808, 1.0
    %v1810 = vrcp.pop %v1809
    %v1811 = vmul.f32 1.0, %v1810
    %v1812 = vmul.f32 %v1811, %v1480
    %v1813 = vpack.c.bf16 %v1812, %v1812
    %1814 = vmatprep.subr.bf16.mxu0 0
    %1815 = vmatpush1.bf16.msra.mxu0 %v1046
    %1816 = vmatprep.subr.bf16.mxu0 0
    %1817 = vmatpush1.bf16.msra.mxu0 %v1045
    %1818 = vmatprep.subr.bf16.mxu0 0
    %1819 = vmatpush1.bf16.msra.mxu0 %v1044
    %1820 = vmatprep.subr.bf16.mxu0 0
    %1821 = vmatpush1.bf16.msra.mxu0 %v1043
    %1822 = vmatprep.subr.bf16.mxu0 0
    %1823 = vmatpush1.bf16.msra.mxu0 %v1042
    %1824 = vmatprep.subr.bf16.mxu0 0
    %1825 = vmatpush1.bf16.msra.mxu0 %v1041
    %1826 = vmatprep.subr.bf16.mxu0 0
    %1827 = vmatpush1.bf16.msra.mxu0 %v1040
    %1828 = vmatprep.subr.bf16.mxu0 0
    %1829 = vmatpush1.bf16.msra.mxu0 %v1039
    %1830 = vmatprep.subr.bf16.mxu0 0
    %1831 = vmatpush2.bf16.msra.mxu0 0
    %1832 = vmatprep.subr.bf16.mxu0 0
    %1833 = vmatpush2.bf16.msra.mxu0 0
    %1834 = vmatprep.subr.bf16.mxu0 0
    %1835 = vmatpush2.bf16.msra.mxu0 0
    %1836 = vmatprep.subr.bf16.mxu0 0
    %1837 = vmatpush2.bf16.msra.mxu0 0
    %1838 = vmatprep.subr.bf16.mxu0 0
    %1839 = vmatpush2.bf16.msra.mxu0 0
    %1840 = vmatprep.subr.bf16.mxu0 0
    %1841 = vmatpush2.bf16.msra.mxu0 0
    %1842 = vmatprep.subr.bf16.mxu0 0
    %1843 = vmatpush2.bf16.msra.mxu0 0
    %1844 = vmatprep.subr.bf16.mxu0 0
    %1845 = vmatpush2.bf16.msra.mxu0 0
    %1846 = vmatprep.mubr.bf16.mxu0 0
    %1847 = vmatmul.mubr.bf16.gmra.mxu0 %v1813
    %v1848 = vpop.f32.mrf.mxu0
    %v1849 = vadd.f32 0.0, %v1848
    %v1850 = vpop.f32.mrf.mxu0
    %v1851 = vpop.f32.mrf.mxu0
    %v1852 = vpop.f32.mrf.mxu0
    %1853 = vdwg.mxu0
    %v1854 = vadd.f32 %v1751, %v1849
    %v1855 = vadd.f32 %v1854, %v318
    %v1856 = vtanh.pop %v1855
    %v1857 = vmul.f32 %v1804, %v1480
    %v1858 = vsub.f32 1.0, %v1804
    %v1859 = vmul.f32 %v1858, %v1856
    %v1860 = vadd.f32 %v1857, %v1859
    %s1861 = scalar_lea.vmem [#allocation3], 16
    %1862 = vst [vmem:[%s1861] sm:$0xff] %v1860
    %s1863 = scalar_lea.vmem [#allocation4], 24
    %v1864 = vld [vmem:[%s1863] sm:$0xff]
    %v1865 = vpack.c.bf16 %v1864, %v1864
    %v1867 = vsel %vm341, %v1865, 0
    %1869 = vmatprep.subr.bf16.mxu0 0
    %1870 = vmatpush1.bf16.msra.mxu0 0
    %1871 = vmatprep.subr.bf16.mxu0 0
    %1872 = vmatpush1.bf16.msra.mxu0 0
    %1873 = vmatprep.subr.bf16.mxu0 0
    %1874 = vmatpush1.bf16.msra.mxu0 0
    %1875 = vmatprep.subr.bf16.mxu0 0
    %1876 = vmatpush1.bf16.msra.mxu0 0
    %1877 = vmatprep.subr.bf16.mxu0 0
    %1878 = vmatpush1.bf16.msra.mxu0 0
    %1879 = vmatprep.subr.bf16.mxu0 0
    %1880 = vmatpush1.bf16.msra.mxu0 0
    %1881 = vmatprep.subr.bf16.mxu0 0
    %1882 = vmatpush1.bf16.msra.mxu0 0
    %1883 = vmatprep.subr.bf16.mxu0 %v336
    %1884 = vmatpush1.bf16.msra.mxu0 %v335
    %1885 = vmatprep.subr.bf16.mxu0 0
    %1886 = vmatpush2.bf16.msra.mxu0 0
    %1887 = vmatprep.subr.bf16.mxu0 0
    %1888 = vmatpush2.bf16.msra.mxu0 0
    %1889 = vmatprep.subr.bf16.mxu0 0
    %1890 = vmatpush2.bf16.msra.mxu0 0
    %1891 = vmatprep.subr.bf16.mxu0 0
    %1892 = vmatpush2.bf16.msra.mxu0 0
    %1893 = vmatprep.subr.bf16.mxu0 0
    %1894 = vmatpush2.bf16.msra.mxu0 0
    %1895 = vmatprep.subr.bf16.mxu0 0
    %1896 = vmatpush2.bf16.msra.mxu0 0
    %1897 = vmatprep.subr.bf16.mxu0 0
    %1898 = vmatpush2.bf16.msra.mxu0 0
    %1899 = vmatprep.subr.bf16.mxu0 0
    %1900 = vmatpush2.bf16.msra.mxu0 0
    %1901 = vmatprep.mubr.bf16.mxu0 0
    %1902 = vmatmul.mubr.bf16.gmra.mxu0 %v1867
    %v1903 = vpop.f32.mrf.mxu0
    %v1904 = vadd.f32 0.0, %v1903
    %v1905 = vpop.f32.mrf.mxu0
    %v1906 = vadd.f32 0.0, %v1905
    %v1907 = vpop.f32.mrf.mxu0
    %v1908 = vpop.f32.mrf.mxu0
    %1909 = vdwg.mxu0
    %1910 = vmatprep.subr.bf16.mxu0 0
    %1911 = vmatpush1.bf16.msra.mxu0 0
    %1912 = vmatprep.subr.bf16.mxu0 0
    %1913 = vmatpush1.bf16.msra.mxu0 0
    %1914 = vmatprep.subr.bf16.mxu0 0
    %1915 = vmatpush1.bf16.msra.mxu0 0
    %1916 = vmatprep.subr.bf16.mxu0 0
    %1917 = vmatpush1.bf16.msra.mxu0 0
    %1918 = vmatprep.subr.bf16.mxu0 0
    %1919 = vmatpush1.bf16.msra.mxu0 0
    %1920 = vmatprep.subr.bf16.mxu0 0
    %1921 = vmatpush1.bf16.msra.mxu0 0
    %1922 = vmatprep.subr.bf16.mxu0 0
    %1923 = vmatpush1.bf16.msra.mxu0 0
    %1924 = vmatprep.subr.bf16.mxu0 0
    %1925 = vmatpush1.bf16.msra.mxu0 %v337
    %1926 = vmatprep.subr.bf16.mxu0 0
    %1927 = vmatpush2.bf16.msra.mxu0 0
    %1928 = vmatprep.subr.bf16.mxu0 0
    %1929 = vmatpush2.bf16.msra.mxu0 0
    %1930 = vmatprep.subr.bf16.mxu0 0
    %1931 = vmatpush2.bf16.msra.mxu0 0
    %1932 = vmatprep.subr.bf16.mxu0 0
    %1933 = vmatpush2.bf16.msra.mxu0 0
    %1934 = vmatprep.subr.bf16.mxu0 0
    %1935 = vmatpush2.bf16.msra.mxu0 0
    %1936 = vmatprep.subr.bf16.mxu0 0
    %1937 = vmatpush2.bf16.msra.mxu0 0
    %1938 = vmatprep.subr.bf16.mxu0 0
    %1939 = vmatpush2.bf16.msra.mxu0 0
    %1940 = vmatprep.subr.bf16.mxu0 0
    %1941 = vmatpush2.bf16.msra.mxu0 0
    %1942 = vmatprep.mubr.bf16.mxu0 0
    %1943 = vmatmul.mubr.bf16.gmra.mxu0 %v1867
    %v1944 = vpop.f32.mrf.mxu0
    %v1945 = vadd.f32 0.0, %v1944
    %v1946 = vpop.f32.mrf.mxu0
    %v1947 = vpop.f32.mrf.mxu0
    %v1948 = vpop.f32.mrf.mxu0
    %1949 = vdwg.mxu0
    %1950 = vmatprep.subr.bf16.mxu0 %v490
    %1951 = vmatpush1.bf16.msra.mxu0 %v489
    %1952 = vmatprep.subr.bf16.mxu0 %v488
    %1953 = vmatpush1.bf16.msra.mxu0 %v487
    %1954 = vmatprep.subr.bf16.mxu0 %v486
    %1955 = vmatpush1.bf16.msra.mxu0 %v485
    %1956 = vmatprep.subr.bf16.mxu0 %v484
    %1957 = vmatpush1.bf16.msra.mxu0 %v483
    %1958 = vmatprep.subr.bf16.mxu0 %v482
    %1959 = vmatpush1.bf16.msra.mxu0 %v481
    %1960 = vmatprep.subr.bf16.mxu0 %v480
    %1961 = vmatpush1.bf16.msra.mxu0 %v479
    %1962 = vmatprep.subr.bf16.mxu0 %v478
    %1963 = vmatpush1.bf16.msra.mxu0 %v477
    %1964 = vmatprep.subr.bf16.mxu0 %v476
    %1965 = vmatpush1.bf16.msra.mxu0 %v475
    %1966 = vmatprep.subr.bf16.mxu0 0
    %1967 = vmatpush2.bf16.msra.mxu0 0
    %1968 = vmatprep.subr.bf16.mxu0 0
    %1969 = vmatpush2.bf16.msra.mxu0 0
    %1970 = vmatprep.subr.bf16.mxu0 0
    %1971 = vmatpush2.bf16.msra.mxu0 0
    %1972 = vmatprep.subr.bf16.mxu0 0
    %1973 = vmatpush2.bf16.msra.mxu0 0
    %1974 = vmatprep.subr.bf16.mxu0 0
    %1975 = vmatpush2.bf16.msra.mxu0 0
    %1976 = vmatprep.subr.bf16.mxu0 0
    %1977 = vmatpush2.bf16.msra.mxu0 0
    %1978 = vmatprep.subr.bf16.mxu0 0
    %1979 = vmatpush2.bf16.msra.mxu0 0
    %1980 = vmatprep.subr.bf16.mxu0 0
    %1981 = vmatpush2.bf16.msra.mxu0 0
    %1982 = vmatprep.mubr.bf16.mxu0 0
    %1983 = vmatmul.mubr.bf16.gmra.mxu0 %v1674
    %v1984 = vpop.f32.mrf.mxu0
    %v1985 = vadd.f32 %v207, %v1984
    %v1986 = vpop.f32.mrf.mxu0
    %v1987 = vadd.f32 %v211, %v1986
    %v1988 = vpop.f32.mrf.mxu0
    %v1989 = vpop.f32.mrf.mxu0
    %1990 = vdwg.mxu0
    %v1991 = vadd.f32 %v1904, %v1985
    %v1992 = vxor.u32 %v1991, 2147483648
    %v1993 = vmul.f32 %v1992, 1.442695
    %v1994 = vpow.pop %v1993
    %v1995 = vadd.f32 %v1994, 1.0
    %v1996 = vrcp.pop %v1995
    %v1997 = vmul.f32 1.0, %v1996
    %v1998 = vadd.f32 %v1906, %v1987
    %v1999 = vxor.u32 %v1998, 2147483648
    %v2000 = vmul.f32 %v1999, 1.442695
    %v2001 = vpow.pop %v2000
    %v2002 = vadd.f32 %v2001, 1.0
    %v2003 = vrcp.pop %v2002
    %v2004 = vmul.f32 1.0, %v2003
    %v2005 = vmul.f32 %v2004, %v1673
    %v2006 = vpack.c.bf16 %v2005, %v2005
    %2007 = vmatprep.subr.bf16.mxu0 0
    %2008 = vmatpush1.bf16.msra.mxu0 %v603
    %2009 = vmatprep.subr.bf16.mxu0 0
    %2010 = vmatpush1.bf16.msra.mxu0 %v602
    %2011 = vmatprep.subr.bf16.mxu0 0
    %2012 = vmatpush1.bf16.msra.mxu0 %v601
    %2013 = vmatprep.subr.bf16.mxu0 0
    %2014 = vmatpush1.bf16.msra.mxu0 %v600
    %2015 = vmatprep.subr.bf16.mxu0 0
    %2016 = vmatpush1.bf16.msra.mxu0 %v599
    %2017 = vmatprep.subr.bf16.mxu0 0
    %2018 = vmatpush1.bf16.msra.mxu0 %v598
    %2019 = vmatprep.subr.bf16.mxu0 0
    %2020 = vmatpush1.bf16.msra.mxu0 %v597
    %2021 = vmatprep.subr.bf16.mxu0 0
    %2022 = vmatpush1.bf16.msra.mxu0 %v596
    %2023 = vmatprep.subr.bf16.mxu0 0
    %2024 = vmatpush2.bf16.msra.mxu0 0
    %2025 = vmatprep.subr.bf16.mxu0 0
    %2026 = vmatpush2.bf16.msra.mxu0 0
    %2027 = vmatprep.subr.bf16.mxu0 0
    %2028 = vmatpush2.bf16.msra.mxu0 0
    %2029 = vmatprep.subr.bf16.mxu0 0
    %2030 = vmatpush2.bf16.msra.mxu0 0
    %2031 = vmatprep.subr.bf16.mxu0 0
    %2032 = vmatpush2.bf16.msra.mxu0 0
    %2033 = vmatprep.subr.bf16.mxu0 0
    %2034 = vmatpush2.bf16.msra.mxu0 0
    %2035 = vmatprep.subr.bf16.mxu0 0
    %2036 = vmatpush2.bf16.msra.mxu0 0
    %2037 = vmatprep.subr.bf16.mxu0 0
    %2038 = vmatpush2.bf16.msra.mxu0 0
    %2039 = vmatprep.mubr.bf16.mxu0 0
    %2040 = vmatmul.mubr.bf16.gmra.mxu0 %v2006
    %v2041 = vpop.f32.mrf.mxu0
    %v2042 = vadd.f32 0.0, %v2041
    %v2043 = vpop.f32.mrf.mxu0
    %v2044 = vpop.f32.mrf.mxu0
    %v2045 = vpop.f32.mrf.mxu0
    %2046 = vdwg.mxu0
    %v2047 = vadd.f32 %v1945, %v2042
    %v2048 = vadd.f32 %v2047, %v235
    %v2049 = vtanh.pop %v2048
    %v2050 = vmul.f32 %v1997, %v1673
    %v2051 = vsub.f32 1.0, %v1997
    %v2052 = vmul.f32 %v2051, %v2049
    %v2053 = vadd.f32 %v2050, %v2052
    %v2054 = vpack.c.bf16 %v2053, %v2053
    %2055 = vmatprep.subr.bf16.mxu0 %v762
    %2056 = vmatpush1.bf16.msra.mxu0 %v761
    %2057 = vmatprep.subr.bf16.mxu0 %v759
    %2058 = vmatpush1.bf16.msra.mxu0 %v758
    %2059 = vmatprep.subr.bf16.mxu0 %v756
    %2060 = vmatpush1.bf16.msra.mxu0 %v755
    %2061 = vmatprep.subr.bf16.mxu0 %v753
    %2062 = vmatpush1.bf16.msra.mxu0 %v752
    %2063 = vmatprep.subr.bf16.mxu0 %v750
    %2064 = vmatpush1.bf16.msra.mxu0 %v749
    %2065 = vmatprep.subr.bf16.mxu0 %v747
    %2066 = vmatpush1.bf16.msra.mxu0 %v746
    %2067 = vmatprep.subr.bf16.mxu0 %v744
    %2068 = vmatpush1.bf16.msra.mxu0 %v743
    %2069 = vmatprep.subr.bf16.mxu0 %v741
    %2070 = vmatpush1.bf16.msra.mxu0 %v740
    %2071 = vmatprep.subr.bf16.mxu0 0
    %2072 = vmatpush2.bf16.msra.mxu0 0
    %2073 = vmatprep.subr.bf16.mxu0 0
    %2074 = vmatpush2.bf16.msra.mxu0 0
    %2075 = vmatprep.subr.bf16.mxu0 0
    %2076 = vmatpush2.bf16.msra.mxu0 0
    %2077 = vmatprep.subr.bf16.mxu0 0
    %2078 = vmatpush2.bf16.msra.mxu0 0
    %2079 = vmatprep.subr.bf16.mxu0 0
    %2080 = vmatpush2.bf16.msra.mxu0 0
    %2081 = vmatprep.subr.bf16.mxu0 0
    %2082 = vmatpush2.bf16.msra.mxu0 0
    %2083 = vmatprep.subr.bf16.mxu0 0
    %2084 = vmatpush2.bf16.msra.mxu0 0
    %2085 = vmatprep.subr.bf16.mxu0 0
    %2086 = vmatpush2.bf16.msra.mxu0 0
    %2087 = vmatprep.mubr.bf16.mxu0 0
    %2088 = vmatmul.mubr.bf16.gmra.mxu0 %v2054
    %v2089 = vpop.f32.mrf.mxu0
    %v2090 = vadd.f32 0.0, %v2089
    %v2091 = vpop.f32.mrf.mxu0
    %v2092 = vadd.f32 0.0, %v2091
    %v2093 = vpop.f32.mrf.mxu0
    %v2094 = vpop.f32.mrf.mxu0
    %2095 = vdwg.mxu0
    %2096 = vmatprep.subr.bf16.mxu0 0
    %2097 = vmatpush1.bf16.msra.mxu0 %v763
    %2098 = vmatprep.subr.bf16.mxu0 0
    %2099 = vmatpush1.bf16.msra.mxu0 %v760
    %2100 = vmatprep.subr.bf16.mxu0 0
    %2101 = vmatpush1.bf16.msra.mxu0 %v757
    %2102 = vmatprep.subr.bf16.mxu0 0
    %2103 = vmatpush1.bf16.msra.mxu0 %v754
    %2104 = vmatprep.subr.bf16.mxu0 0
    %2105 = vmatpush1.bf16.msra.mxu0 %v751
    %2106 = vmatprep.subr.bf16.mxu0 0
    %2107 = vmatpush1.bf16.msra.mxu0 %v748
    %2108 = vmatprep.subr.bf16.mxu0 0
    %2109 = vmatpush1.bf16.msra.mxu0 %v745
    %2110 = vmatprep.subr.bf16.mxu0 0
    %2111 = vmatpush1.bf16.msra.mxu0 %v742
    %2112 = vmatprep.subr.bf16.mxu0 0
    %2113 = vmatpush2.bf16.msra.mxu0 0
    %2114 = vmatprep.subr.bf16.mxu0 0
    %2115 = vmatpush2.bf16.msra.mxu0 0
    %2116 = vmatprep.subr.bf16.mxu0 0
    %2117 = vmatpush2.bf16.msra.mxu0 0
    %2118 = vmatprep.subr.bf16.mxu0 0
    %2119 = vmatpush2.bf16.msra.mxu0 0
    %2120 = vmatprep.subr.bf16.mxu0 0
    %2121 = vmatpush2.bf16.msra.mxu0 0
    %2122 = vmatprep.subr.bf16.mxu0 0
    %2123 = vmatpush2.bf16.msra.mxu0 0
    %2124 = vmatprep.subr.bf16.mxu0 0
    %2125 = vmatpush2.bf16.msra.mxu0 0
    %2126 = vmatprep.subr.bf16.mxu0 0
    %2127 = vmatpush2.bf16.msra.mxu0 0
    %2128 = vmatprep.mubr.bf16.mxu0 0
    %2129 = vmatmul.mubr.bf16.gmra.mxu0 %v2054
    %v2130 = vpop.f32.mrf.mxu0
    %v2131 = vadd.f32 0.0, %v2130
    %v2132 = vpop.f32.mrf.mxu0
    %v2133 = vpop.f32.mrf.mxu0
    %v2134 = vpop.f32.mrf.mxu0
    %2135 = vdwg.mxu0
    %v2136 = vpack.c.bf16 %v1860, %v1860
    %2137 = vmatprep.subr.bf16.mxu0 %v933
    %2138 = vmatpush1.bf16.msra.mxu0 %v932
    %2139 = vmatprep.subr.bf16.mxu0 %v931
    %2140 = vmatpush1.bf16.msra.mxu0 %v930
    %2141 = vmatprep.subr.bf16.mxu0 %v929
    %2142 = vmatpush1.bf16.msra.mxu0 %v928
    %2143 = vmatprep.subr.bf16.mxu0 %v927
    %2144 = vmatpush1.bf16.msra.mxu0 %v926
    %2145 = vmatprep.subr.bf16.mxu0 %v925
    %2146 = vmatpush1.bf16.msra.mxu0 %v924
    %2147 = vmatprep.subr.bf16.mxu0 %v923
    %2148 = vmatpush1.bf16.msra.mxu0 %v922
    %2149 = vmatprep.subr.bf16.mxu0 %v921
    %2150 = vmatpush1.bf16.msra.mxu0 %v920
    %2151 = vmatprep.subr.bf16.mxu0 %v919
    %2152 = vmatpush1.bf16.msra.mxu0 %v918
    %2153 = vmatprep.subr.bf16.mxu0 0
    %2154 = vmatpush2.bf16.msra.mxu0 0
    %2155 = vmatprep.subr.bf16.mxu0 0
    %2156 = vmatpush2.bf16.msra.mxu0 0
    %2157 = vmatprep.subr.bf16.mxu0 0
    %2158 = vmatpush2.bf16.msra.mxu0 0
    %2159 = vmatprep.subr.bf16.mxu0 0
    %2160 = vmatpush2.bf16.msra.mxu0 0
    %2161 = vmatprep.subr.bf16.mxu0 0
    %2162 = vmatpush2.bf16.msra.mxu0 0
    %2163 = vmatprep.subr.bf16.mxu0 0
    %2164 = vmatpush2.bf16.msra.mxu0 0
    %2165 = vmatprep.subr.bf16.mxu0 0
    %2166 = vmatpush2.bf16.msra.mxu0 0
    %2167 = vmatprep.subr.bf16.mxu0 0
    %2168 = vmatpush2.bf16.msra.mxu0 0
    %2169 = vmatprep.mubr.bf16.mxu0 0
    %2170 = vmatmul.mubr.bf16.gmra.mxu0 %v2136
    %v2171 = vpop.f32.mrf.mxu0
    %v2172 = vadd.f32 %v290, %v2171
    %v2173 = vpop.f32.mrf.mxu0
    %v2174 = vadd.f32 %v294, %v2173
    %v2175 = vpop.f32.mrf.mxu0
    %v2176 = vpop.f32.mrf.mxu0
    %2177 = vdwg.mxu0
    %v2178 = vadd.f32 %v2090, %v2172
    %v2179 = vxor.u32 %v2178, 2147483648
    %v2180 = vmul.f32 %v2179, 1.442695
    %v2181 = vpow.pop %v2180
    %v2182 = vadd.f32 %v2181, 1.0
    %v2183 = vrcp.pop %v2182
    %v2184 = vmul.f32 1.0, %v2183
    %v2185 = vadd.f32 %v2092, %v2174
    %v2186 = vxor.u32 %v2185, 2147483648
    %v2187 = vmul.f32 %v2186, 1.442695
    %v2188 = vpow.pop %v2187
    %v2189 = vadd.f32 %v2188, 1.0
    %v2190 = vrcp.pop %v2189
    %v2191 = vmul.f32 1.0, %v2190
    %v2192 = vmul.f32 %v2191, %v1860
    %v2193 = vpack.c.bf16 %v2192, %v2192
    %2194 = vmatprep.subr.bf16.mxu0 0
    %2195 = vmatpush1.bf16.msra.mxu0 %v1046
    %2196 = vmatprep.subr.bf16.mxu0 0
    %2197 = vmatpush1.bf16.msra.mxu0 %v1045
    %2198 = vmatprep.subr.bf16.mxu0 0
    %2199 = vmatpush1.bf16.msra.mxu0 %v1044
    %2200 = vmatprep.subr.bf16.mxu0 0
    %2201 = vmatpush1.bf16.msra.mxu0 %v1043
    %2202 = vmatprep.subr.bf16.mxu0 0
    %2203 = vmatpush1.bf16.msra.mxu0 %v1042
    %2204 = vmatprep.subr.bf16.mxu0 0
    %2205 = vmatpush1.bf16.msra.mxu0 %v1041
    %2206 = vmatprep.subr.bf16.mxu0 0
    %2207 = vmatpush1.bf16.msra.mxu0 %v1040
    %2208 = vmatprep.subr.bf16.mxu0 0
    %2209 = vmatpush1.bf16.msra.mxu0 %v1039
    %2210 = vmatprep.subr.bf16.mxu0 0
    %2211 = vmatpush2.bf16.msra.mxu0 0
    %2212 = vmatprep.subr.bf16.mxu0 0
    %2213 = vmatpush2.bf16.msra.mxu0 0
    %2214 = vmatprep.subr.bf16.mxu0 0
    %2215 = vmatpush2.bf16.msra.mxu0 0
    %2216 = vmatprep.subr.bf16.mxu0 0
    %2217 = vmatpush2.bf16.msra.mxu0 0
    %2218 = vmatprep.subr.bf16.mxu0 0
    %2219 = vmatpush2.bf16.msra.mxu0 0
    %2220 = vmatprep.subr.bf16.mxu0 0
    %2221 = vmatpush2.bf16.msra.mxu0 0
    %2222 = vmatprep.subr.bf16.mxu0 0
    %2223 = vmatpush2.bf16.msra.mxu0 0
    %2224 = vmatprep.subr.bf16.mxu0 0
    %2225 = vmatpush2.bf16.msra.mxu0 0
    %2226 = vmatprep.mubr.bf16.mxu0 0
    %2227 = vmatmul.mubr.bf16.gmra.mxu0 %v2193
    %v2228 = vpop.f32.mrf.mxu0
    %v2229 = vadd.f32 0.0, %v2228
    %v2230 = vpop.f32.mrf.mxu0
    %v2231 = vpop.f32.mrf.mxu0
    %v2232 = vpop.f32.mrf.mxu0
    %2233 = vdwg.mxu0
    %v2234 = vadd.f32 %v2131, %v2229
    %v2235 = vadd.f32 %v2234, %v318
    %v2236 = vtanh.pop %v2235
    %v2237 = vmul.f32 %v2184, %v1860
    %v2238 = vsub.f32 1.0, %v2184
    %v2239 = vmul.f32 %v2238, %v2236
    %v2240 = vadd.f32 %v2237, %v2239
    %s2241 = scalar_lea.vmem [#allocation3], 24
    %2242 = vst [vmem:[%s2241] sm:$0xff] %v2240
    %s2243 = scalar_lea.vmem [#allocation4], 32
    %v2244 = vld [vmem:[%s2243] sm:$0xff]
    %v2245 = vpack.c.bf16 %v2244, %v2244
    %v2247 = vsel %vm341, %v2245, 0
    %2249 = vmatprep.subr.bf16.mxu0 0
    %2250 = vmatpush1.bf16.msra.mxu0 0
    %2251 = vmatprep.subr.bf16.mxu0 0
    %2252 = vmatpush1.bf16.msra.mxu0 0
    %2253 = vmatprep.subr.bf16.mxu0 0
    %2254 = vmatpush1.bf16.msra.mxu0 0
    %2255 = vmatprep.subr.bf16.mxu0 0
    %2256 = vmatpush1.bf16.msra.mxu0 0
    %2257 = vmatprep.subr.bf16.mxu0 0
    %2258 = vmatpush1.bf16.msra.mxu0 0
    %2259 = vmatprep.subr.bf16.mxu0 0
    %2260 = vmatpush1.bf16.msra.mxu0 0
    %2261 = vmatprep.subr.bf16.mxu0 0
    %2262 = vmatpush1.bf16.msra.mxu0 0
    %2263 = vmatprep.subr.bf16.mxu0 %v336
    %2264 = vmatpush1.bf16.msra.mxu0 %v335
    %2265 = vmatprep.subr.bf16.mxu0 0
    %2266 = vmatpush2.bf16.msra.mxu0 0
    %2267 = vmatprep.subr.bf16.mxu0 0
    %2268 = vmatpush2.bf16.msra.mxu0 0
    %2269 = vmatprep.subr.bf16.mxu0 0
    %2270 = vmatpush2.bf16.msra.mxu0 0
    %2271 = vmatprep.subr.bf16.mxu0 0
    %2272 = vmatpush2.bf16.msra.mxu0 0
    %2273 = vmatprep.subr.bf16.mxu0 0
    %2274 = vmatpush2.bf16.msra.mxu0 0
    %2275 = vmatprep.subr.bf16.mxu0 0
    %2276 = vmatpush2.bf16.msra.mxu0 0
    %2277 = vmatprep.subr.bf16.mxu0 0
    %2278 = vmatpush2.bf16.msra.mxu0 0
    %2279 = vmatprep.subr.bf16.mxu0 0
    %2280 = vmatpush2.bf16.msra.mxu0 0
    %2281 = vmatprep.mubr.bf16.mxu0 0
    %2282 = vmatmul.mubr.bf16.gmra.mxu0 %v2247
    %v2283 = vpop.f32.mrf.mxu0
    %v2284 = vadd.f32 0.0, %v2283
    %v2285 = vpop.f32.mrf.mxu0
    %v2286 = vadd.f32 0.0, %v2285
    %v2287 = vpop.f32.mrf.mxu0
    %v2288 = vpop.f32.mrf.mxu0
    %2289 = vdwg.mxu0
    %2290 = vmatprep.subr.bf16.mxu0 0
    %2291 = vmatpush1.bf16.msra.mxu0 0
    %2292 = vmatprep.subr.bf16.mxu0 0
    %2293 = vmatpush1.bf16.msra.mxu0 0
    %2294 = vmatprep.subr.bf16.mxu0 0
    %2295 = vmatpush1.bf16.msra.mxu0 0
    %2296 = vmatprep.subr.bf16.mxu0 0
    %2297 = vmatpush1.bf16.msra.mxu0 0
    %2298 = vmatprep.subr.bf16.mxu0 0
    %2299 = vmatpush1.bf16.msra.mxu0 0
    %2300 = vmatprep.subr.bf16.mxu0 0
    %2301 = vmatpush1.bf16.msra.mxu0 0
    %2302 = vmatprep.subr.bf16.mxu0 0
    %2303 = vmatpush1.bf16.msra.mxu0 0
    %2304 = vmatprep.subr.bf16.mxu0 0
    %2305 = vmatpush1.bf16.msra.mxu0 %v337
    %2306 = vmatprep.subr.bf16.mxu0 0
    %2307 = vmatpush2.bf16.msra.mxu0 0
    %2308 = vmatprep.subr.bf16.mxu0 0
    %2309 = vmatpush2.bf16.msra.mxu0 0
    %2310 = vmatprep.subr.bf16.mxu0 0
    %2311 = vmatpush2.bf16.msra.mxu0 0
    %2312 = vmatprep.subr.bf16.mxu0 0
    %2313 = vmatpush2.bf16.msra.mxu0 0
    %2314 = vmatprep.subr.bf16.mxu0 0
    %2315 = vmatpush2.bf16.msra.mxu0 0
    %2316 = vmatprep.subr.bf16.mxu0 0
    %2317 = vmatpush2.bf16.msra.mxu0 0
    %2318 = vmatprep.subr.bf16.mxu0 0
    %2319 = vmatpush2.bf16.msra.mxu0 0
    %2320 = vmatprep.subr.bf16.mxu0 0
    %2321 = vmatpush2.bf16.msra.mxu0 0
    %2322 = vmatprep.mubr.bf16.mxu0 0
    %2323 = vmatmul.mubr.bf16.gmra.mxu0 %v2247
    %v2324 = vpop.f32.mrf.mxu0
    %v2325 = vadd.f32 0.0, %v2324
    %v2326 = vpop.f32.mrf.mxu0
    %v2327 = vpop.f32.mrf.mxu0
    %v2328 = vpop.f32.mrf.mxu0
    %2329 = vdwg.mxu0
    %2330 = vmatprep.subr.bf16.mxu0 %v490
    %2331 = vmatpush1.bf16.msra.mxu0 %v489
    %2332 = vmatprep.subr.bf16.mxu0 %v488
    %2333 = vmatpush1.bf16.msra.mxu0 %v487
    %2334 = vmatprep.subr.bf16.mxu0 %v486
    %2335 = vmatpush1.bf16.msra.mxu0 %v485
    %2336 = vmatprep.subr.bf16.mxu0 %v484
    %2337 = vmatpush1.bf16.msra.mxu0 %v483
    %2338 = vmatprep.subr.bf16.mxu0 %v482
    %2339 = vmatpush1.bf16.msra.mxu0 %v481
    %2340 = vmatprep.subr.bf16.mxu0 %v480
    %2341 = vmatpush1.bf16.msra.mxu0 %v479
    %2342 = vmatprep.subr.bf16.mxu0 %v478
    %2343 = vmatpush1.bf16.msra.mxu0 %v477
    %2344 = vmatprep.subr.bf16.mxu0 %v476
    %2345 = vmatpush1.bf16.msra.mxu0 %v475
    %2346 = vmatprep.subr.bf16.mxu0 0
    %2347 = vmatpush2.bf16.msra.mxu0 0
    %2348 = vmatprep.subr.bf16.mxu0 0
    %2349 = vmatpush2.bf16.msra.mxu0 0
    %2350 = vmatprep.subr.bf16.mxu0 0
    %2351 = vmatpush2.bf16.msra.mxu0 0
    %2352 = vmatprep.subr.bf16.mxu0 0
    %2353 = vmatpush2.bf16.msra.mxu0 0
    %2354 = vmatprep.subr.bf16.mxu0 0
    %2355 = vmatpush2.bf16.msra.mxu0 0
    %2356 = vmatprep.subr.bf16.mxu0 0
    %2357 = vmatpush2.bf16.msra.mxu0 0
    %2358 = vmatprep.subr.bf16.mxu0 0
    %2359 = vmatpush2.bf16.msra.mxu0 0
    %2360 = vmatprep.subr.bf16.mxu0 0
    %2361 = vmatpush2.bf16.msra.mxu0 0
    %2362 = vmatprep.mubr.bf16.mxu0 0
    %2363 = vmatmul.mubr.bf16.gmra.mxu0 %v2054
    %v2364 = vpop.f32.mrf.mxu0
    %v2365 = vadd.f32 %v207, %v2364
    %v2366 = vpop.f32.mrf.mxu0
    %v2367 = vadd.f32 %v211, %v2366
    %v2368 = vpop.f32.mrf.mxu0
    %v2369 = vpop.f32.mrf.mxu0
    %2370 = vdwg.mxu0
    %v2371 = vadd.f32 %v2284, %v2365
    %v2372 = vxor.u32 %v2371, 2147483648
    %v2373 = vmul.f32 %v2372, 1.442695
    %v2374 = vpow.pop %v2373
    %v2375 = vadd.f32 %v2374, 1.0
    %v2376 = vrcp.pop %v2375
    %v2377 = vmul.f32 1.0, %v2376
    %v2378 = vadd.f32 %v2286, %v2367
    %v2379 = vxor.u32 %v2378, 2147483648
    %v2380 = vmul.f32 %v2379, 1.442695
    %v2381 = vpow.pop %v2380
    %v2382 = vadd.f32 %v2381, 1.0
    %v2383 = vrcp.pop %v2382
    %v2384 = vmul.f32 1.0, %v2383
    %v2385 = vmul.f32 %v2384, %v2053
    %v2386 = vpack.c.bf16 %v2385, %v2385
    %2387 = vmatprep.subr.bf16.mxu0 0
    %2388 = vmatpush1.bf16.msra.mxu0 %v603
    %2389 = vmatprep.subr.bf16.mxu0 0
    %2390 = vmatpush1.bf16.msra.mxu0 %v602
    %2391 = vmatprep.subr.bf16.mxu0 0
    %2392 = vmatpush1.bf16.msra.mxu0 %v601
    %2393 = vmatprep.subr.bf16.mxu0 0
    %2394 = vmatpush1.bf16.msra.mxu0 %v600
    %2395 = vmatprep.subr.bf16.mxu0 0
    %2396 = vmatpush1.bf16.msra.mxu0 %v599
    %2397 = vmatprep.subr.bf16.mxu0 0
    %2398 = vmatpush1.bf16.msra.mxu0 %v598
    %2399 = vmatprep.subr.bf16.mxu0 0
    %2400 = vmatpush1.bf16.msra.mxu0 %v597
    %2401 = vmatprep.subr.bf16.mxu0 0
    %2402 = vmatpush1.bf16.msra.mxu0 %v596
    %2403 = vmatprep.subr.bf16.mxu0 0
    %2404 = vmatpush2.bf16.msra.mxu0 0
    %2405 = vmatprep.subr.bf16.mxu0 0
    %2406 = vmatpush2.bf16.msra.mxu0 0
    %2407 = vmatprep.subr.bf16.mxu0 0
    %2408 = vmatpush2.bf16.msra.mxu0 0
    %2409 = vmatprep.subr.bf16.mxu0 0
    %2410 = vmatpush2.bf16.msra.mxu0 0
    %2411 = vmatprep.subr.bf16.mxu0 0
    %2412 = vmatpush2.bf16.msra.mxu0 0
    %2413 = vmatprep.subr.bf16.mxu0 0
    %2414 = vmatpush2.bf16.msra.mxu0 0
    %2415 = vmatprep.subr.bf16.mxu0 0
    %2416 = vmatpush2.bf16.msra.mxu0 0
    %2417 = vmatprep.subr.bf16.mxu0 0
    %2418 = vmatpush2.bf16.msra.mxu0 0
    %2419 = vmatprep.mubr.bf16.mxu0 0
    %2420 = vmatmul.mubr.bf16.gmra.mxu0 %v2386
    %v2421 = vpop.f32.mrf.mxu0
    %v2422 = vadd.f32 0.0, %v2421
    %v2423 = vpop.f32.mrf.mxu0
    %v2424 = vpop.f32.mrf.mxu0
    %v2425 = vpop.f32.mrf.mxu0
    %2426 = vdwg.mxu0
    %v2427 = vadd.f32 %v2325, %v2422
    %v2428 = vadd.f32 %v2427, %v235
    %v2429 = vtanh.pop %v2428
    %v2430 = vmul.f32 %v2377, %v2053
    %v2431 = vsub.f32 1.0, %v2377
    %v2432 = vmul.f32 %v2431, %v2429
    %v2433 = vadd.f32 %v2430, %v2432
    %v2434 = vpack.c.bf16 %v2433, %v2433
    %2435 = vmatprep.subr.bf16.mxu0 %v762
    %2436 = vmatpush1.bf16.msra.mxu0 %v761
    %2437 = vmatprep.subr.bf16.mxu0 %v759
    %2438 = vmatpush1.bf16.msra.mxu0 %v758
    %2439 = vmatprep.subr.bf16.mxu0 %v756
    %2440 = vmatpush1.bf16.msra.mxu0 %v755
    %2441 = vmatprep.subr.bf16.mxu0 %v753
    %2442 = vmatpush1.bf16.msra.mxu0 %v752
    %2443 = vmatprep.subr.bf16.mxu0 %v750
    %2444 = vmatpush1.bf16.msra.mxu0 %v749
    %2445 = vmatprep.subr.bf16.mxu0 %v747
    %2446 = vmatpush1.bf16.msra.mxu0 %v746
    %2447 = vmatprep.subr.bf16.mxu0 %v744
    %2448 = vmatpush1.bf16.msra.mxu0 %v743
    %2449 = vmatprep.subr.bf16.mxu0 %v741
    %2450 = vmatpush1.bf16.msra.mxu0 %v740
    %2451 = vmatprep.subr.bf16.mxu0 0
    %2452 = vmatpush2.bf16.msra.mxu0 0
    %2453 = vmatprep.subr.bf16.mxu0 0
    %2454 = vmatpush2.bf16.msra.mxu0 0
    %2455 = vmatprep.subr.bf16.mxu0 0
    %2456 = vmatpush2.bf16.msra.mxu0 0
    %2457 = vmatprep.subr.bf16.mxu0 0
    %2458 = vmatpush2.bf16.msra.mxu0 0
    %2459 = vmatprep.subr.bf16.mxu0 0
    %2460 = vmatpush2.bf16.msra.mxu0 0
    %2461 = vmatprep.subr.bf16.mxu0 0
    %2462 = vmatpush2.bf16.msra.mxu0 0
    %2463 = vmatprep.subr.bf16.mxu0 0
    %2464 = vmatpush2.bf16.msra.mxu0 0
    %2465 = vmatprep.subr.bf16.mxu0 0
    %2466 = vmatpush2.bf16.msra.mxu0 0
    %2467 = vmatprep.mubr.bf16.mxu0 0
    %2468 = vmatmul.mubr.bf16.gmra.mxu0 %v2434
    %v2469 = vpop.f32.mrf.mxu0
    %v2470 = vadd.f32 0.0, %v2469
    %v2471 = vpop.f32.mrf.mxu0
    %v2472 = vadd.f32 0.0, %v2471
    %v2473 = vpop.f32.mrf.mxu0
    %v2474 = vpop.f32.mrf.mxu0
    %2475 = vdwg.mxu0
    %2476 = vmatprep.subr.bf16.mxu0 0
    %2477 = vmatpush1.bf16.msra.mxu0 %v763
    %2478 = vmatprep.subr.bf16.mxu0 0
    %2479 = vmatpush1.bf16.msra.mxu0 %v760
    %2480 = vmatprep.subr.bf16.mxu0 0
    %2481 = vmatpush1.bf16.msra.mxu0 %v757
    %2482 = vmatprep.subr.bf16.mxu0 0
    %2483 = vmatpush1.bf16.msra.mxu0 %v754
    %2484 = vmatprep.subr.bf16.mxu0 0
    %2485 = vmatpush1.bf16.msra.mxu0 %v751
    %2486 = vmatprep.subr.bf16.mxu0 0
    %2487 = vmatpush1.bf16.msra.mxu0 %v748
    %2488 = vmatprep.subr.bf16.mxu0 0
    %2489 = vmatpush1.bf16.msra.mxu0 %v745
    %2490 = vmatprep.subr.bf16.mxu0 0
    %2491 = vmatpush1.bf16.msra.mxu0 %v742
    %2492 = vmatprep.subr.bf16.mxu0 0
    %2493 = vmatpush2.bf16.msra.mxu0 0
    %2494 = vmatprep.subr.bf16.mxu0 0
    %2495 = vmatpush2.bf16.msra.mxu0 0
    %2496 = vmatprep.subr.bf16.mxu0 0
    %2497 = vmatpush2.bf16.msra.mxu0 0
    %2498 = vmatprep.subr.bf16.mxu0 0
    %2499 = vmatpush2.bf16.msra.mxu0 0
    %2500 = vmatprep.subr.bf16.mxu0 0
    %2501 = vmatpush2.bf16.msra.mxu0 0
    %2502 = vmatprep.subr.bf16.mxu0 0
    %2503 = vmatpush2.bf16.msra.mxu0 0
    %2504 = vmatprep.subr.bf16.mxu0 0
    %2505 = vmatpush2.bf16.msra.mxu0 0
    %2506 = vmatprep.subr.bf16.mxu0 0
    %2507 = vmatpush2.bf16.msra.mxu0 0
    %2508 = vmatprep.mubr.bf16.mxu0 0
    %2509 = vmatmul.mubr.bf16.gmra.mxu0 %v2434
    %v2510 = vpop.f32.mrf.mxu0
    %v2511 = vadd.f32 0.0, %v2510
    %v2512 = vpop.f32.mrf.mxu0
    %v2513 = vpop.f32.mrf.mxu0
    %v2514 = vpop.f32.mrf.mxu0
    %2515 = vdwg.mxu0
    %v2516 = vpack.c.bf16 %v2240, %v2240
    %2517 = vmatprep.subr.bf16.mxu0 %v933
    %2518 = vmatpush1.bf16.msra.mxu0 %v932
    %2519 = vmatprep.subr.bf16.mxu0 %v931
    %2520 = vmatpush1.bf16.msra.mxu0 %v930
    %2521 = vmatprep.subr.bf16.mxu0 %v929
    %2522 = vmatpush1.bf16.msra.mxu0 %v928
    %2523 = vmatprep.subr.bf16.mxu0 %v927
    %2524 = vmatpush1.bf16.msra.mxu0 %v926
    %2525 = vmatprep.subr.bf16.mxu0 %v925
    %2526 = vmatpush1.bf16.msra.mxu0 %v924
    %2527 = vmatprep.subr.bf16.mxu0 %v923
    %2528 = vmatpush1.bf16.msra.mxu0 %v922
    %2529 = vmatprep.subr.bf16.mxu0 %v921
    %2530 = vmatpush1.bf16.msra.mxu0 %v920
    %2531 = vmatprep.subr.bf16.mxu0 %v919
    %2532 = vmatpush1.bf16.msra.mxu0 %v918
    %2533 = vmatprep.subr.bf16.mxu0 0
    %2534 = vmatpush2.bf16.msra.mxu0 0
    %2535 = vmatprep.subr.bf16.mxu0 0
    %2536 = vmatpush2.bf16.msra.mxu0 0
    %2537 = vmatprep.subr.bf16.mxu0 0
    %2538 = vmatpush2.bf16.msra.mxu0 0
    %2539 = vmatprep.subr.bf16.mxu0 0
    %2540 = vmatpush2.bf16.msra.mxu0 0
    %2541 = vmatprep.subr.bf16.mxu0 0
    %2542 = vmatpush2.bf16.msra.mxu0 0
    %2543 = vmatprep.subr.bf16.mxu0 0
    %2544 = vmatpush2.bf16.msra.mxu0 0
    %2545 = vmatprep.subr.bf16.mxu0 0
    %2546 = vmatpush2.bf16.msra.mxu0 0
    %2547 = vmatprep.subr.bf16.mxu0 0
    %2548 = vmatpush2.bf16.msra.mxu0 0
    %2549 = vmatprep.mubr.bf16.mxu0 0
    %2550 = vmatmul.mubr.bf16.gmra.mxu0 %v2516
    %v2551 = vpop.f32.mrf.mxu0
    %v2552 = vadd.f32 %v290, %v2551
    %v2553 = vpop.f32.mrf.mxu0
    %v2554 = vadd.f32 %v294, %v2553
    %v2555 = vpop.f32.mrf.mxu0
    %v2556 = vpop.f32.mrf.mxu0
    %2557 = vdwg.mxu0
    %v2558 = vadd.f32 %v2470, %v2552
    %v2559 = vxor.u32 %v2558, 2147483648
    %v2560 = vmul.f32 %v2559, 1.442695
    %v2561 = vpow.pop %v2560
    %v2562 = vadd.f32 %v2561, 1.0
    %v2563 = vrcp.pop %v2562
    %v2564 = vmul.f32 1.0, %v2563
    %v2565 = vadd.f32 %v2472, %v2554
    %v2566 = vxor.u32 %v2565, 2147483648
    %v2567 = vmul.f32 %v2566, 1.442695
    %v2568 = vpow.pop %v2567
    %v2569 = vadd.f32 %v2568, 1.0
    %v2570 = vrcp.pop %v2569
    %v2571 = vmul.f32 1.0, %v2570
    %v2572 = vmul.f32 %v2571, %v2240
    %v2573 = vpack.c.bf16 %v2572, %v2572
    %2574 = vmatprep.subr.bf16.mxu0 0
    %2575 = vmatpush1.bf16.msra.mxu0 %v1046
    %2576 = vmatprep.subr.bf16.mxu0 0
    %2577 = vmatpush1.bf16.msra.mxu0 %v1045
    %2578 = vmatprep.subr.bf16.mxu0 0
    %2579 = vmatpush1.bf16.msra.mxu0 %v1044
    %2580 = vmatprep.subr.bf16.mxu0 0
    %2581 = vmatpush1.bf16.msra.mxu0 %v1043
    %2582 = vmatprep.subr.bf16.mxu0 0
    %2583 = vmatpush1.bf16.msra.mxu0 %v1042
    %2584 = vmatprep.subr.bf16.mxu0 0
    %2585 = vmatpush1.bf16.msra.mxu0 %v1041
    %2586 = vmatprep.subr.bf16.mxu0 0
    %2587 = vmatpush1.bf16.msra.mxu0 %v1040
    %2588 = vmatprep.subr.bf16.mxu0 0
    %2589 = vmatpush1.bf16.msra.mxu0 %v1039
    %2590 = vmatprep.subr.bf16.mxu0 0
    %2591 = vmatpush2.bf16.msra.mxu0 0
    %2592 = vmatprep.subr.bf16.mxu0 0
    %2593 = vmatpush2.bf16.msra.mxu0 0
    %2594 = vmatprep.subr.bf16.mxu0 0
    %2595 = vmatpush2.bf16.msra.mxu0 0
    %2596 = vmatprep.subr.bf16.mxu0 0
    %2597 = vmatpush2.bf16.msra.mxu0 0
    %2598 = vmatprep.subr.bf16.mxu0 0
    %2599 = vmatpush2.bf16.msra.mxu0 0
    %2600 = vmatprep.subr.bf16.mxu0 0
    %2601 = vmatpush2.bf16.msra.mxu0 0
    %2602 = vmatprep.subr.bf16.mxu0 0
    %2603 = vmatpush2.bf16.msra.mxu0 0
    %2604 = vmatprep.subr.bf16.mxu0 0
    %2605 = vmatpush2.bf16.msra.mxu0 0
    %2606 = vmatprep.mubr.bf16.mxu0 0
    %2607 = vmatmul.mubr.bf16.gmra.mxu0 %v2573
    %v2608 = vpop.f32.mrf.mxu0
    %v2609 = vadd.f32 0.0, %v2608
    %v2610 = vpop.f32.mrf.mxu0
    %v2611 = vpop.f32.mrf.mxu0
    %v2612 = vpop.f32.mrf.mxu0
    %2613 = vdwg.mxu0
    %v2614 = vadd.f32 %v2511, %v2609
    %v2615 = vadd.f32 %v2614, %v318
    %v2616 = vtanh.pop %v2615
    %v2617 = vmul.f32 %v2564, %v2240
    %v2618 = vsub.f32 1.0, %v2564
    %v2619 = vmul.f32 %v2618, %v2616
    %v2620 = vadd.f32 %v2617, %v2619
    %s2621 = scalar_lea.vmem [#allocation3], 32
    %2622 = vst [vmem:[%s2621] sm:$0xff] %v2620
    %s2623 = scalar_lea.vmem [#allocation4], 40
    %v2624 = vld [vmem:[%s2623] sm:$0xff]
    %v2625 = vpack.c.bf16 %v2624, %v2624
    %v2627 = vsel %vm341, %v2625, 0
    %2629 = vmatprep.subr.bf16.mxu0 0
    %2630 = vmatpush1.bf16.msra.mxu0 0
    %2631 = vmatprep.subr.bf16.mxu0 0
    %2632 = vmatpush1.bf16.msra.mxu0 0
    %2633 = vmatprep.subr.bf16.mxu0 0
    %2634 = vmatpush1.bf16.msra.mxu0 0
    %2635 = vmatprep.subr.bf16.mxu0 0
    %2636 = vmatpush1.bf16.msra.mxu0 0
    %2637 = vmatprep.subr.bf16.mxu0 0
    %2638 = vmatpush1.bf16.msra.mxu0 0
    %2639 = vmatprep.subr.bf16.mxu0 0
    %2640 = vmatpush1.bf16.msra.mxu0 0
    %2641 = vmatprep.subr.bf16.mxu0 0
    %2642 = vmatpush1.bf16.msra.mxu0 0
    %2643 = vmatprep.subr.bf16.mxu0 %v336
    %2644 = vmatpush1.bf16.msra.mxu0 %v335
    %2645 = vmatprep.subr.bf16.mxu0 0
    %2646 = vmatpush2.bf16.msra.mxu0 0
    %2647 = vmatprep.subr.bf16.mxu0 0
    %2648 = vmatpush2.bf16.msra.mxu0 0
    %2649 = vmatprep.subr.bf16.mxu0 0
    %2650 = vmatpush2.bf16.msra.mxu0 0
    %2651 = vmatprep.subr.bf16.mxu0 0
    %2652 = vmatpush2.bf16.msra.mxu0 0
    %2653 = vmatprep.subr.bf16.mxu0 0
    %2654 = vmatpush2.bf16.msra.mxu0 0
    %2655 = vmatprep.subr.bf16.mxu0 0
    %2656 = vmatpush2.bf16.msra.mxu0 0
    %2657 = vmatprep.subr.bf16.mxu0 0
    %2658 = vmatpush2.bf16.msra.mxu0 0
    %2659 = vmatprep.subr.bf16.mxu0 0
    %2660 = vmatpush2.bf16.msra.mxu0 0
    %2661 = vmatprep.mubr.bf16.mxu0 0
    %2662 = vmatmul.mubr.bf16.gmra.mxu0 %v2627
    %v2663 = vpop.f32.mrf.mxu0
    %v2664 = vadd.f32 0.0, %v2663
    %v2665 = vpop.f32.mrf.mxu0
    %v2666 = vadd.f32 0.0, %v2665
    %v2667 = vpop.f32.mrf.mxu0
    %v2668 = vpop.f32.mrf.mxu0
    %2669 = vdwg.mxu0
    %2670 = vmatprep.subr.bf16.mxu0 0
    %2671 = vmatpush1.bf16.msra.mxu0 0
    %2672 = vmatprep.subr.bf16.mxu0 0
    %2673 = vmatpush1.bf16.msra.mxu0 0
    %2674 = vmatprep.subr.bf16.mxu0 0
    %2675 = vmatpush1.bf16.msra.mxu0 0
    %2676 = vmatprep.subr.bf16.mxu0 0
    %2677 = vmatpush1.bf16.msra.mxu0 0
    %2678 = vmatprep.subr.bf16.mxu0 0
    %2679 = vmatpush1.bf16.msra.mxu0 0
    %2680 = vmatprep.subr.bf16.mxu0 0
    %2681 = vmatpush1.bf16.msra.mxu0 0
    %2682 = vmatprep.subr.bf16.mxu0 0
    %2683 = vmatpush1.bf16.msra.mxu0 0
    %2684 = vmatprep.subr.bf16.mxu0 0
    %2685 = vmatpush1.bf16.msra.mxu0 %v337
    %2686 = vmatprep.subr.bf16.mxu0 0
    %2687 = vmatpush2.bf16.msra.mxu0 0
    %2688 = vmatprep.subr.bf16.mxu0 0
    %2689 = vmatpush2.bf16.msra.mxu0 0
    %2690 = vmatprep.subr.bf16.mxu0 0
    %2691 = vmatpush2.bf16.msra.mxu0 0
    %2692 = vmatprep.subr.bf16.mxu0 0
    %2693 = vmatpush2.bf16.msra.mxu0 0
    %2694 = vmatprep.subr.bf16.mxu0 0
    %2695 = vmatpush2.bf16.msra.mxu0 0
    %2696 = vmatprep.subr.bf16.mxu0 0
    %2697 = vmatpush2.bf16.msra.mxu0 0
    %2698 = vmatprep.subr.bf16.mxu0 0
    %2699 = vmatpush2.bf16.msra.mxu0 0
    %2700 = vmatprep.subr.bf16.mxu0 0
    %2701 = vmatpush2.bf16.msra.mxu0 0
    %2702 = vmatprep.mubr.bf16.mxu0 0
    %2703 = vmatmul.mubr.bf16.gmra.mxu0 %v2627
    %v2704 = vpop.f32.mrf.mxu0
    %v2705 = vadd.f32 0.0, %v2704
    %v2706 = vpop.f32.mrf.mxu0
    %v2707 = vpop.f32.mrf.mxu0
    %v2708 = vpop.f32.mrf.mxu0
    %2709 = vdwg.mxu0
    %2710 = vmatprep.subr.bf16.mxu0 %v490
    %2711 = vmatpush1.bf16.msra.mxu0 %v489
    %2712 = vmatprep.subr.bf16.mxu0 %v488
    %2713 = vmatpush1.bf16.msra.mxu0 %v487
    %2714 = vmatprep.subr.bf16.mxu0 %v486
    %2715 = vmatpush1.bf16.msra.mxu0 %v485
    %2716 = vmatprep.subr.bf16.mxu0 %v484
    %2717 = vmatpush1.bf16.msra.mxu0 %v483
    %2718 = vmatprep.subr.bf16.mxu0 %v482
    %2719 = vmatpush1.bf16.msra.mxu0 %v481
    %2720 = vmatprep.subr.bf16.mxu0 %v480
    %2721 = vmatpush1.bf16.msra.mxu0 %v479
    %2722 = vmatprep.subr.bf16.mxu0 %v478
    %2723 = vmatpush1.bf16.msra.mxu0 %v477
    %2724 = vmatprep.subr.bf16.mxu0 %v476
    %2725 = vmatpush1.bf16.msra.mxu0 %v475
    %2726 = vmatprep.subr.bf16.mxu0 0
    %2727 = vmatpush2.bf16.msra.mxu0 0
    %2728 = vmatprep.subr.bf16.mxu0 0
    %2729 = vmatpush2.bf16.msra.mxu0 0
    %2730 = vmatprep.subr.bf16.mxu0 0
    %2731 = vmatpush2.bf16.msra.mxu0 0
    %2732 = vmatprep.subr.bf16.mxu0 0
    %2733 = vmatpush2.bf16.msra.mxu0 0
    %2734 = vmatprep.subr.bf16.mxu0 0
    %2735 = vmatpush2.bf16.msra.mxu0 0
    %2736 = vmatprep.subr.bf16.mxu0 0
    %2737 = vmatpush2.bf16.msra.mxu0 0
    %2738 = vmatprep.subr.bf16.mxu0 0
    %2739 = vmatpush2.bf16.msra.mxu0 0
    %2740 = vmatprep.subr.bf16.mxu0 0
    %2741 = vmatpush2.bf16.msra.mxu0 0
    %2742 = vmatprep.mubr.bf16.mxu0 0
    %2743 = vmatmul.mubr.bf16.gmra.mxu0 %v2434
    %v2744 = vpop.f32.mrf.mxu0
    %v2745 = vadd.f32 %v207, %v2744
    %v2746 = vpop.f32.mrf.mxu0
    %v2747 = vadd.f32 %v211, %v2746
    %v2748 = vpop.f32.mrf.mxu0
    %v2749 = vpop.f32.mrf.mxu0
    %2750 = vdwg.mxu0
    %v2751 = vadd.f32 %v2664, %v2745
    %v2752 = vxor.u32 %v2751, 2147483648
    %v2753 = vmul.f32 %v2752, 1.442695
    %v2754 = vpow.pop %v2753
    %v2755 = vadd.f32 %v2754, 1.0
    %v2756 = vrcp.pop %v2755
    %v2757 = vmul.f32 1.0, %v2756
    %v2758 = vadd.f32 %v2666, %v2747
    %v2759 = vxor.u32 %v2758, 2147483648
    %v2760 = vmul.f32 %v2759, 1.442695
    %v2761 = vpow.pop %v2760
    %v2762 = vadd.f32 %v2761, 1.0
    %v2763 = vrcp.pop %v2762
    %v2764 = vmul.f32 1.0, %v2763
    %v2765 = vmul.f32 %v2764, %v2433
    %v2766 = vpack.c.bf16 %v2765, %v2765
    %2767 = vmatprep.subr.bf16.mxu0 0
    %2768 = vmatpush1.bf16.msra.mxu0 %v603
    %2769 = vmatprep.subr.bf16.mxu0 0
    %2770 = vmatpush1.bf16.msra.mxu0 %v602
    %2771 = vmatprep.subr.bf16.mxu0 0
    %2772 = vmatpush1.bf16.msra.mxu0 %v601
    %2773 = vmatprep.subr.bf16.mxu0 0
    %2774 = vmatpush1.bf16.msra.mxu0 %v600
    %2775 = vmatprep.subr.bf16.mxu0 0
    %2776 = vmatpush1.bf16.msra.mxu0 %v599
    %2777 = vmatprep.subr.bf16.mxu0 0
    %2778 = vmatpush1.bf16.msra.mxu0 %v598
    %2779 = vmatprep.subr.bf16.mxu0 0
    %2780 = vmatpush1.bf16.msra.mxu0 %v597
    %2781 = vmatprep.subr.bf16.mxu0 0
    %2782 = vmatpush1.bf16.msra.mxu0 %v596
    %2783 = vmatprep.subr.bf16.mxu0 0
    %2784 = vmatpush2.bf16.msra.mxu0 0
    %2785 = vmatprep.subr.bf16.mxu0 0
    %2786 = vmatpush2.bf16.msra.mxu0 0
    %2787 = vmatprep.subr.bf16.mxu0 0
    %2788 = vmatpush2.bf16.msra.mxu0 0
    %2789 = vmatprep.subr.bf16.mxu0 0
    %2790 = vmatpush2.bf16.msra.mxu0 0
    %2791 = vmatprep.subr.bf16.mxu0 0
    %2792 = vmatpush2.bf16.msra.mxu0 0
    %2793 = vmatprep.subr.bf16.mxu0 0
    %2794 = vmatpush2.bf16.msra.mxu0 0
    %2795 = vmatprep.subr.bf16.mxu0 0
    %2796 = vmatpush2.bf16.msra.mxu0 0
    %2797 = vmatprep.subr.bf16.mxu0 0
    %2798 = vmatpush2.bf16.msra.mxu0 0
    %2799 = vmatprep.mubr.bf16.mxu0 0
    %2800 = vmatmul.mubr.bf16.gmra.mxu0 %v2766
    %v2801 = vpop.f32.mrf.mxu0
    %v2802 = vadd.f32 0.0, %v2801
    %v2803 = vpop.f32.mrf.mxu0
    %v2804 = vpop.f32.mrf.mxu0
    %v2805 = vpop.f32.mrf.mxu0
    %2806 = vdwg.mxu0
    %v2807 = vadd.f32 %v2705, %v2802
    %v2808 = vadd.f32 %v2807, %v235
    %v2809 = vtanh.pop %v2808
    %v2810 = vmul.f32 %v2757, %v2433
    %v2811 = vsub.f32 1.0, %v2757
    %v2812 = vmul.f32 %v2811, %v2809
    %v2813 = vadd.f32 %v2810, %v2812
    %v2814 = vpack.c.bf16 %v2813, %v2813
    %2815 = vmatprep.subr.bf16.mxu0 %v762
    %2816 = vmatpush1.bf16.msra.mxu0 %v761
    %2817 = vmatprep.subr.bf16.mxu0 %v759
    %2818 = vmatpush1.bf16.msra.mxu0 %v758
    %2819 = vmatprep.subr.bf16.mxu0 %v756
    %2820 = vmatpush1.bf16.msra.mxu0 %v755
    %2821 = vmatprep.subr.bf16.mxu0 %v753
    %2822 = vmatpush1.bf16.msra.mxu0 %v752
    %2823 = vmatprep.subr.bf16.mxu0 %v750
    %2824 = vmatpush1.bf16.msra.mxu0 %v749
    %2825 = vmatprep.subr.bf16.mxu0 %v747
    %2826 = vmatpush1.bf16.msra.mxu0 %v746
    %2827 = vmatprep.subr.bf16.mxu0 %v744
    %2828 = vmatpush1.bf16.msra.mxu0 %v743
    %2829 = vmatprep.subr.bf16.mxu0 %v741
    %2830 = vmatpush1.bf16.msra.mxu0 %v740
    %2831 = vmatprep.subr.bf16.mxu0 0
    %2832 = vmatpush2.bf16.msra.mxu0 0
    %2833 = vmatprep.subr.bf16.mxu0 0
    %2834 = vmatpush2.bf16.msra.mxu0 0
    %2835 = vmatprep.subr.bf16.mxu0 0
    %2836 = vmatpush2.bf16.msra.mxu0 0
    %2837 = vmatprep.subr.bf16.mxu0 0
    %2838 = vmatpush2.bf16.msra.mxu0 0
    %2839 = vmatprep.subr.bf16.mxu0 0
    %2840 = vmatpush2.bf16.msra.mxu0 0
    %2841 = vmatprep.subr.bf16.mxu0 0
    %2842 = vmatpush2.bf16.msra.mxu0 0
    %2843 = vmatprep.subr.bf16.mxu0 0
    %2844 = vmatpush2.bf16.msra.mxu0 0
    %2845 = vmatprep.subr.bf16.mxu0 0
    %2846 = vmatpush2.bf16.msra.mxu0 0
    %2847 = vmatprep.mubr.bf16.mxu0 0
    %2848 = vmatmul.mubr.bf16.gmra.mxu0 %v2814
    %v2849 = vpop.f32.mrf.mxu0
    %v2850 = vadd.f32 0.0, %v2849
    %v2851 = vpop.f32.mrf.mxu0
    %v2852 = vadd.f32 0.0, %v2851
    %v2853 = vpop.f32.mrf.mxu0
    %v2854 = vpop.f32.mrf.mxu0
    %2855 = vdwg.mxu0
    %2856 = vmatprep.subr.bf16.mxu0 0
    %2857 = vmatpush1.bf16.msra.mxu0 %v763
    %2858 = vmatprep.subr.bf16.mxu0 0
    %2859 = vmatpush1.bf16.msra.mxu0 %v760
    %2860 = vmatprep.subr.bf16.mxu0 0
    %2861 = vmatpush1.bf16.msra.mxu0 %v757
    %2862 = vmatprep.subr.bf16.mxu0 0
    %2863 = vmatpush1.bf16.msra.mxu0 %v754
    %2864 = vmatprep.subr.bf16.mxu0 0
    %2865 = vmatpush1.bf16.msra.mxu0 %v751
    %2866 = vmatprep.subr.bf16.mxu0 0
    %2867 = vmatpush1.bf16.msra.mxu0 %v748
    %2868 = vmatprep.subr.bf16.mxu0 0
    %2869 = vmatpush1.bf16.msra.mxu0 %v745
    %2870 = vmatprep.subr.bf16.mxu0 0
    %2871 = vmatpush1.bf16.msra.mxu0 %v742
    %2872 = vmatprep.subr.bf16.mxu0 0
    %2873 = vmatpush2.bf16.msra.mxu0 0
    %2874 = vmatprep.subr.bf16.mxu0 0
    %2875 = vmatpush2.bf16.msra.mxu0 0
    %2876 = vmatprep.subr.bf16.mxu0 0
    %2877 = vmatpush2.bf16.msra.mxu0 0
    %2878 = vmatprep.subr.bf16.mxu0 0
    %2879 = vmatpush2.bf16.msra.mxu0 0
    %2880 = vmatprep.subr.bf16.mxu0 0
    %2881 = vmatpush2.bf16.msra.mxu0 0
    %2882 = vmatprep.subr.bf16.mxu0 0
    %2883 = vmatpush2.bf16.msra.mxu0 0
    %2884 = vmatprep.subr.bf16.mxu0 0
    %2885 = vmatpush2.bf16.msra.mxu0 0
    %2886 = vmatprep.subr.bf16.mxu0 0
    %2887 = vmatpush2.bf16.msra.mxu0 0
    %2888 = vmatprep.mubr.bf16.mxu0 0
    %2889 = vmatmul.mubr.bf16.gmra.mxu0 %v2814
    %v2890 = vpop.f32.mrf.mxu0
    %v2891 = vadd.f32 0.0, %v2890
    %v2892 = vpop.f32.mrf.mxu0
    %v2893 = vpop.f32.mrf.mxu0
    %v2894 = vpop.f32.mrf.mxu0
    %2895 = vdwg.mxu0
    %v2896 = vpack.c.bf16 %v2620, %v2620
    %2897 = vmatprep.subr.bf16.mxu0 %v933
    %2898 = vmatpush1.bf16.msra.mxu0 %v932
    %2899 = vmatprep.subr.bf16.mxu0 %v931
    %2900 = vmatpush1.bf16.msra.mxu0 %v930
    %2901 = vmatprep.subr.bf16.mxu0 %v929
    %2902 = vmatpush1.bf16.msra.mxu0 %v928
    %2903 = vmatprep.subr.bf16.mxu0 %v927
    %2904 = vmatpush1.bf16.msra.mxu0 %v926
    %2905 = vmatprep.subr.bf16.mxu0 %v925
    %2906 = vmatpush1.bf16.msra.mxu0 %v924
    %2907 = vmatprep.subr.bf16.mxu0 %v923
    %2908 = vmatpush1.bf16.msra.mxu0 %v922
    %2909 = vmatprep.subr.bf16.mxu0 %v921
    %2910 = vmatpush1.bf16.msra.mxu0 %v920
    %2911 = vmatprep.subr.bf16.mxu0 %v919
    %2912 = vmatpush1.bf16.msra.mxu0 %v918
    %2913 = vmatprep.subr.bf16.mxu0 0
    %2914 = vmatpush2.bf16.msra.mxu0 0
    %2915 = vmatprep.subr.bf16.mxu0 0
    %2916 = vmatpush2.bf16.msra.mxu0 0
    %2917 = vmatprep.subr.bf16.mxu0 0
    %2918 = vmatpush2.bf16.msra.mxu0 0
    %2919 = vmatprep.subr.bf16.mxu0 0
    %2920 = vmatpush2.bf16.msra.mxu0 0
    %2921 = vmatprep.subr.bf16.mxu0 0
    %2922 = vmatpush2.bf16.msra.mxu0 0
    %2923 = vmatprep.subr.bf16.mxu0 0
    %2924 = vmatpush2.bf16.msra.mxu0 0
    %2925 = vmatprep.subr.bf16.mxu0 0
    %2926 = vmatpush2.bf16.msra.mxu0 0
    %2927 = vmatprep.subr.bf16.mxu0 0
    %2928 = vmatpush2.bf16.msra.mxu0 0
    %2929 = vmatprep.mubr.bf16.mxu0 0
    %2930 = vmatmul.mubr.bf16.gmra.mxu0 %v2896
    %v2931 = vpop.f32.mrf.mxu0
    %v2932 = vadd.f32 %v290, %v2931
    %v2933 = vpop.f32.mrf.mxu0
    %v2934 = vadd.f32 %v294, %v2933
    %v2935 = vpop.f32.mrf.mxu0
    %v2936 = vpop.f32.mrf.mxu0
    %2937 = vdwg.mxu0
    %v2938 = vadd.f32 %v2850, %v2932
    %v2939 = vxor.u32 %v2938, 2147483648
    %v2940 = vmul.f32 %v2939, 1.442695
    %v2941 = vpow.pop %v2940
    %v2942 = vadd.f32 %v2941, 1.0
    %v2943 = vrcp.pop %v2942
    %v2944 = vmul.f32 1.0, %v2943
    %v2945 = vadd.f32 %v2852, %v2934
    %v2946 = vxor.u32 %v2945, 2147483648
    %v2947 = vmul.f32 %v2946, 1.442695
    %v2948 = vpow.pop %v2947
    %v2949 = vadd.f32 %v2948, 1.0
    %v2950 = vrcp.pop %v2949
    %v2951 = vmul.f32 1.0, %v2950
    %v2952 = vmul.f32 %v2951, %v2620
    %v2953 = vpack.c.bf16 %v2952, %v2952
    %2954 = vmatprep.subr.bf16.mxu0 0
    %2955 = vmatpush1.bf16.msra.mxu0 %v1046
    %2956 = vmatprep.subr.bf16.mxu0 0
    %2957 = vmatpush1.bf16.msra.mxu0 %v1045
    %2958 = vmatprep.subr.bf16.mxu0 0
    %2959 = vmatpush1.bf16.msra.mxu0 %v1044
    %2960 = vmatprep.subr.bf16.mxu0 0
    %2961 = vmatpush1.bf16.msra.mxu0 %v1043
    %2962 = vmatprep.subr.bf16.mxu0 0
    %2963 = vmatpush1.bf16.msra.mxu0 %v1042
    %2964 = vmatprep.subr.bf16.mxu0 0
    %2965 = vmatpush1.bf16.msra.mxu0 %v1041
    %2966 = vmatprep.subr.bf16.mxu0 0
    %2967 = vmatpush1.bf16.msra.mxu0 %v1040
    %2968 = vmatprep.subr.bf16.mxu0 0
    %2969 = vmatpush1.bf16.msra.mxu0 %v1039
    %2970 = vmatprep.subr.bf16.mxu0 0
    %2971 = vmatpush2.bf16.msra.mxu0 0
    %2972 = vmatprep.subr.bf16.mxu0 0
    %2973 = vmatpush2.bf16.msra.mxu0 0
    %2974 = vmatprep.subr.bf16.mxu0 0
    %2975 = vmatpush2.bf16.msra.mxu0 0
    %2976 = vmatprep.subr.bf16.mxu0 0
    %2977 = vmatpush2.bf16.msra.mxu0 0
    %2978 = vmatprep.subr.bf16.mxu0 0
    %2979 = vmatpush2.bf16.msra.mxu0 0
    %2980 = vmatprep.subr.bf16.mxu0 0
    %2981 = vmatpush2.bf16.msra.mxu0 0
    %2982 = vmatprep.subr.bf16.mxu0 0
    %2983 = vmatpush2.bf16.msra.mxu0 0
    %2984 = vmatprep.subr.bf16.mxu0 0
    %2985 = vmatpush2.bf16.msra.mxu0 0
    %2986 = vmatprep.mubr.bf16.mxu0 0
    %2987 = vmatmul.mubr.bf16.gmra.mxu0 %v2953
    %v2988 = vpop.f32.mrf.mxu0
    %v2989 = vadd.f32 0.0, %v2988
    %v2990 = vpop.f32.mrf.mxu0
    %v2991 = vpop.f32.mrf.mxu0
    %v2992 = vpop.f32.mrf.mxu0
    %2993 = vdwg.mxu0
    %v2994 = vadd.f32 %v2891, %v2989
    %v2995 = vadd.f32 %v2994, %v318
    %v2996 = vtanh.pop %v2995
    %v2997 = vmul.f32 %v2944, %v2620
    %v2998 = vsub.f32 1.0, %v2944
    %v2999 = vmul.f32 %v2998, %v2996
    %v3000 = vadd.f32 %v2997, %v2999
    %s3001 = scalar_lea.vmem [#allocation3], 40
    %3002 = vst [vmem:[%s3001] sm:$0xff] %v3000
    %s3003 = scalar_lea.vmem [#allocation4], 48
    %v3004 = vld [vmem:[%s3003] sm:$0xff]
    %v3005 = vpack.c.bf16 %v3004, %v3004
    %v3007 = vsel %vm341, %v3005, 0
    %3009 = vmatprep.subr.bf16.mxu0 0
    %3010 = vmatpush1.bf16.msra.mxu0 0
    %3011 = vmatprep.subr.bf16.mxu0 0
    %3012 = vmatpush1.bf16.msra.mxu0 0
    %3013 = vmatprep.subr.bf16.mxu0 0
    %3014 = vmatpush1.bf16.msra.mxu0 0
    %3015 = vmatprep.subr.bf16.mxu0 0
    %3016 = vmatpush1.bf16.msra.mxu0 0
    %3017 = vmatprep.subr.bf16.mxu0 0
    %3018 = vmatpush1.bf16.msra.mxu0 0
    %3019 = vmatprep.subr.bf16.mxu0 0
    %3020 = vmatpush1.bf16.msra.mxu0 0
    %3021 = vmatprep.subr.bf16.mxu0 0
    %3022 = vmatpush1.bf16.msra.mxu0 0
    %3023 = vmatprep.subr.bf16.mxu0 %v336
    %3024 = vmatpush1.bf16.msra.mxu0 %v335
    %3025 = vmatprep.subr.bf16.mxu0 0
    %3026 = vmatpush2.bf16.msra.mxu0 0
    %3027 = vmatprep.subr.bf16.mxu0 0
    %3028 = vmatpush2.bf16.msra.mxu0 0
    %3029 = vmatprep.subr.bf16.mxu0 0
    %3030 = vmatpush2.bf16.msra.mxu0 0
    %3031 = vmatprep.subr.bf16.mxu0 0
    %3032 = vmatpush2.bf16.msra.mxu0 0
    %3033 = vmatprep.subr.bf16.mxu0 0
    %3034 = vmatpush2.bf16.msra.mxu0 0
    %3035 = vmatprep.subr.bf16.mxu0 0
    %3036 = vmatpush2.bf16.msra.mxu0 0
    %3037 = vmatprep.subr.bf16.mxu0 0
    %3038 = vmatpush2.bf16.msra.mxu0 0
    %3039 = vmatprep.subr.bf16.mxu0 0
    %3040 = vmatpush2.bf16.msra.mxu0 0
    %3041 = vmatprep.mubr.bf16.mxu0 0
    %3042 = vmatmul.mubr.bf16.gmra.mxu0 %v3007
    %v3043 = vpop.f32.mrf.mxu0
    %v3044 = vadd.f32 0.0, %v3043
    %v3045 = vpop.f32.mrf.mxu0
    %v3046 = vadd.f32 0.0, %v3045
    %v3047 = vpop.f32.mrf.mxu0
    %v3048 = vpop.f32.mrf.mxu0
    %3049 = vdwg.mxu0
    %3050 = vmatprep.subr.bf16.mxu0 0
    %3051 = vmatpush1.bf16.msra.mxu0 0
    %3052 = vmatprep.subr.bf16.mxu0 0
    %3053 = vmatpush1.bf16.msra.mxu0 0
    %3054 = vmatprep.subr.bf16.mxu0 0
    %3055 = vmatpush1.bf16.msra.mxu0 0
    %3056 = vmatprep.subr.bf16.mxu0 0
    %3057 = vmatpush1.bf16.msra.mxu0 0
    %3058 = vmatprep.subr.bf16.mxu0 0
    %3059 = vmatpush1.bf16.msra.mxu0 0
    %3060 = vmatprep.subr.bf16.mxu0 0
    %3061 = vmatpush1.bf16.msra.mxu0 0
    %3062 = vmatprep.subr.bf16.mxu0 0
    %3063 = vmatpush1.bf16.msra.mxu0 0
    %3064 = vmatprep.subr.bf16.mxu0 0
    %3065 = vmatpush1.bf16.msra.mxu0 %v337
    %3066 = vmatprep.subr.bf16.mxu0 0
    %3067 = vmatpush2.bf16.msra.mxu0 0
    %3068 = vmatprep.subr.bf16.mxu0 0
    %3069 = vmatpush2.bf16.msra.mxu0 0
    %3070 = vmatprep.subr.bf16.mxu0 0
    %3071 = vmatpush2.bf16.msra.mxu0 0
    %3072 = vmatprep.subr.bf16.mxu0 0
    %3073 = vmatpush2.bf16.msra.mxu0 0
    %3074 = vmatprep.subr.bf16.mxu0 0
    %3075 = vmatpush2.bf16.msra.mxu0 0
    %3076 = vmatprep.subr.bf16.mxu0 0
    %3077 = vmatpush2.bf16.msra.mxu0 0
    %3078 = vmatprep.subr.bf16.mxu0 0
    %3079 = vmatpush2.bf16.msra.mxu0 0
    %3080 = vmatprep.subr.bf16.mxu0 0
    %3081 = vmatpush2.bf16.msra.mxu0 0
    %3082 = vmatprep.mubr.bf16.mxu0 0
    %3083 = vmatmul.mubr.bf16.gmra.mxu0 %v3007
    %v3084 = vpop.f32.mrf.mxu0
    %v3085 = vadd.f32 0.0, %v3084
    %v3086 = vpop.f32.mrf.mxu0
    %v3087 = vpop.f32.mrf.mxu0
    %v3088 = vpop.f32.mrf.mxu0
    %3089 = vdwg.mxu0
    %3090 = vmatprep.subr.bf16.mxu0 %v490
    %3091 = vmatpush1.bf16.msra.mxu0 %v489
    %3092 = vmatprep.subr.bf16.mxu0 %v488
    %3093 = vmatpush1.bf16.msra.mxu0 %v487
    %3094 = vmatprep.subr.bf16.mxu0 %v486
    %3095 = vmatpush1.bf16.msra.mxu0 %v485
    %3096 = vmatprep.subr.bf16.mxu0 %v484
    %3097 = vmatpush1.bf16.msra.mxu0 %v483
    %3098 = vmatprep.subr.bf16.mxu0 %v482
    %3099 = vmatpush1.bf16.msra.mxu0 %v481
    %3100 = vmatprep.subr.bf16.mxu0 %v480
    %3101 = vmatpush1.bf16.msra.mxu0 %v479
    %3102 = vmatprep.subr.bf16.mxu0 %v478
    %3103 = vmatpush1.bf16.msra.mxu0 %v477
    %3104 = vmatprep.subr.bf16.mxu0 %v476
    %3105 = vmatpush1.bf16.msra.mxu0 %v475
    %3106 = vmatprep.subr.bf16.mxu0 0
    %3107 = vmatpush2.bf16.msra.mxu0 0
    %3108 = vmatprep.subr.bf16.mxu0 0
    %3109 = vmatpush2.bf16.msra.mxu0 0
    %3110 = vmatprep.subr.bf16.mxu0 0
    %3111 = vmatpush2.bf16.msra.mxu0 0
    %3112 = vmatprep.subr.bf16.mxu0 0
    %3113 = vmatpush2.bf16.msra.mxu0 0
    %3114 = vmatprep.subr.bf16.mxu0 0
    %3115 = vmatpush2.bf16.msra.mxu0 0
    %3116 = vmatprep.subr.bf16.mxu0 0
    %3117 = vmatpush2.bf16.msra.mxu0 0
    %3118 = vmatprep.subr.bf16.mxu0 0
    %3119 = vmatpush2.bf16.msra.mxu0 0
    %3120 = vmatprep.subr.bf16.mxu0 0
    %3121 = vmatpush2.bf16.msra.mxu0 0
    %3122 = vmatprep.mubr.bf16.mxu0 0
    %3123 = vmatmul.mubr.bf16.gmra.mxu0 %v2814
    %v3124 = vpop.f32.mrf.mxu0
    %v3125 = vadd.f32 %v207, %v3124
    %v3126 = vpop.f32.mrf.mxu0
    %v3127 = vadd.f32 %v211, %v3126
    %v3128 = vpop.f32.mrf.mxu0
    %v3129 = vpop.f32.mrf.mxu0
    %3130 = vdwg.mxu0
    %v3131 = vadd.f32 %v3044, %v3125
    %v3132 = vxor.u32 %v3131, 2147483648
    %v3133 = vmul.f32 %v3132, 1.442695
    %v3134 = vpow.pop %v3133
    %v3135 = vadd.f32 %v3134, 1.0
    %v3136 = vrcp.pop %v3135
    %v3137 = vmul.f32 1.0, %v3136
    %v3138 = vadd.f32 %v3046, %v3127
    %v3139 = vxor.u32 %v3138, 2147483648
    %v3140 = vmul.f32 %v3139, 1.442695
    %v3141 = vpow.pop %v3140
    %v3142 = vadd.f32 %v3141, 1.0
    %v3143 = vrcp.pop %v3142
    %v3144 = vmul.f32 1.0, %v3143
    %v3145 = vmul.f32 %v3144, %v2813
    %v3146 = vpack.c.bf16 %v3145, %v3145
    %3147 = vmatprep.subr.bf16.mxu0 0
    %3148 = vmatpush1.bf16.msra.mxu0 %v603
    %3149 = vmatprep.subr.bf16.mxu0 0
    %3150 = vmatpush1.bf16.msra.mxu0 %v602
    %3151 = vmatprep.subr.bf16.mxu0 0
    %3152 = vmatpush1.bf16.msra.mxu0 %v601
    %3153 = vmatprep.subr.bf16.mxu0 0
    %3154 = vmatpush1.bf16.msra.mxu0 %v600
    %3155 = vmatprep.subr.bf16.mxu0 0
    %3156 = vmatpush1.bf16.msra.mxu0 %v599
    %3157 = vmatprep.subr.bf16.mxu0 0
    %3158 = vmatpush1.bf16.msra.mxu0 %v598
    %3159 = vmatprep.subr.bf16.mxu0 0
    %3160 = vmatpush1.bf16.msra.mxu0 %v597
    %3161 = vmatprep.subr.bf16.mxu0 0
    %3162 = vmatpush1.bf16.msra.mxu0 %v596
    %3163 = vmatprep.subr.bf16.mxu0 0
    %3164 = vmatpush2.bf16.msra.mxu0 0
    %3165 = vmatprep.subr.bf16.mxu0 0
    %3166 = vmatpush2.bf16.msra.mxu0 0
    %3167 = vmatprep.subr.bf16.mxu0 0
    %3168 = vmatpush2.bf16.msra.mxu0 0
    %3169 = vmatprep.subr.bf16.mxu0 0
    %3170 = vmatpush2.bf16.msra.mxu0 0
    %3171 = vmatprep.subr.bf16.mxu0 0
    %3172 = vmatpush2.bf16.msra.mxu0 0
    %3173 = vmatprep.subr.bf16.mxu0 0
    %3174 = vmatpush2.bf16.msra.mxu0 0
    %3175 = vmatprep.subr.bf16.mxu0 0
    %3176 = vmatpush2.bf16.msra.mxu0 0
    %3177 = vmatprep.subr.bf16.mxu0 0
    %3178 = vmatpush2.bf16.msra.mxu0 0
    %3179 = vmatprep.mubr.bf16.mxu0 0
    %3180 = vmatmul.mubr.bf16.gmra.mxu0 %v3146
    %v3181 = vpop.f32.mrf.mxu0
    %v3182 = vadd.f32 0.0, %v3181
    %v3183 = vpop.f32.mrf.mxu0
    %v3184 = vpop.f32.mrf.mxu0
    %v3185 = vpop.f32.mrf.mxu0
    %3186 = vdwg.mxu0
    %v3187 = vadd.f32 %v3085, %v3182
    %v3188 = vadd.f32 %v3187, %v235
    %v3189 = vtanh.pop %v3188
    %v3190 = vmul.f32 %v3137, %v2813
    %v3191 = vsub.f32 1.0, %v3137
    %v3192 = vmul.f32 %v3191, %v3189
    %v3193 = vadd.f32 %v3190, %v3192
    %v3194 = vpack.c.bf16 %v3193, %v3193
    %3195 = vmatprep.subr.bf16.mxu0 %v762
    %3196 = vmatpush1.bf16.msra.mxu0 %v761
    %3197 = vmatprep.subr.bf16.mxu0 %v759
    %3198 = vmatpush1.bf16.msra.mxu0 %v758
    %3199 = vmatprep.subr.bf16.mxu0 %v756
    %3200 = vmatpush1.bf16.msra.mxu0 %v755
    %3201 = vmatprep.subr.bf16.mxu0 %v753
    %3202 = vmatpush1.bf16.msra.mxu0 %v752
    %3203 = vmatprep.subr.bf16.mxu0 %v750
    %3204 = vmatpush1.bf16.msra.mxu0 %v749
    %3205 = vmatprep.subr.bf16.mxu0 %v747
    %3206 = vmatpush1.bf16.msra.mxu0 %v746
    %3207 = vmatprep.subr.bf16.mxu0 %v744
    %3208 = vmatpush1.bf16.msra.mxu0 %v743
    %3209 = vmatprep.subr.bf16.mxu0 %v741
    %3210 = vmatpush1.bf16.msra.mxu0 %v740
    %3211 = vmatprep.subr.bf16.mxu0 0
    %3212 = vmatpush2.bf16.msra.mxu0 0
    %3213 = vmatprep.subr.bf16.mxu0 0
    %3214 = vmatpush2.bf16.msra.mxu0 0
    %3215 = vmatprep.subr.bf16.mxu0 0
    %3216 = vmatpush2.bf16.msra.mxu0 0
    %3217 = vmatprep.subr.bf16.mxu0 0
    %3218 = vmatpush2.bf16.msra.mxu0 0
    %3219 = vmatprep.subr.bf16.mxu0 0
    %3220 = vmatpush2.bf16.msra.mxu0 0
    %3221 = vmatprep.subr.bf16.mxu0 0
    %3222 = vmatpush2.bf16.msra.mxu0 0
    %3223 = vmatprep.subr.bf16.mxu0 0
    %3224 = vmatpush2.bf16.msra.mxu0 0
    %3225 = vmatprep.subr.bf16.mxu0 0
    %3226 = vmatpush2.bf16.msra.mxu0 0
    %3227 = vmatprep.mubr.bf16.mxu0 0
    %3228 = vmatmul.mubr.bf16.gmra.mxu0 %v3194
    %v3229 = vpop.f32.mrf.mxu0
    %v3230 = vadd.f32 0.0, %v3229
    %v3231 = vpop.f32.mrf.mxu0
    %v3232 = vadd.f32 0.0, %v3231
    %v3233 = vpop.f32.mrf.mxu0
    %v3234 = vpop.f32.mrf.mxu0
    %3235 = vdwg.mxu0
    %3236 = vmatprep.subr.bf16.mxu0 0
    %3237 = vmatpush1.bf16.msra.mxu0 %v763
    %3238 = vmatprep.subr.bf16.mxu0 0
    %3239 = vmatpush1.bf16.msra.mxu0 %v760
    %3240 = vmatprep.subr.bf16.mxu0 0
    %3241 = vmatpush1.bf16.msra.mxu0 %v757
    %3242 = vmatprep.subr.bf16.mxu0 0
    %3243 = vmatpush1.bf16.msra.mxu0 %v754
    %3244 = vmatprep.subr.bf16.mxu0 0
    %3245 = vmatpush1.bf16.msra.mxu0 %v751
    %3246 = vmatprep.subr.bf16.mxu0 0
    %3247 = vmatpush1.bf16.msra.mxu0 %v748
    %3248 = vmatprep.subr.bf16.mxu0 0
    %3249 = vmatpush1.bf16.msra.mxu0 %v745
    %3250 = vmatprep.subr.bf16.mxu0 0
    %3251 = vmatpush1.bf16.msra.mxu0 %v742
    %3252 = vmatprep.subr.bf16.mxu0 0
    %3253 = vmatpush2.bf16.msra.mxu0 0
    %3254 = vmatprep.subr.bf16.mxu0 0
    %3255 = vmatpush2.bf16.msra.mxu0 0
    %3256 = vmatprep.subr.bf16.mxu0 0
    %3257 = vmatpush2.bf16.msra.mxu0 0
    %3258 = vmatprep.subr.bf16.mxu0 0
    %3259 = vmatpush2.bf16.msra.mxu0 0
    %3260 = vmatprep.subr.bf16.mxu0 0
    %3261 = vmatpush2.bf16.msra.mxu0 0
    %3262 = vmatprep.subr.bf16.mxu0 0
    %3263 = vmatpush2.bf16.msra.mxu0 0
    %3264 = vmatprep.subr.bf16.mxu0 0
    %3265 = vmatpush2.bf16.msra.mxu0 0
    %3266 = vmatprep.subr.bf16.mxu0 0
    %3267 = vmatpush2.bf16.msra.mxu0 0
    %3268 = vmatprep.mubr.bf16.mxu0 0
    %3269 = vmatmul.mubr.bf16.gmra.mxu0 %v3194
    %v3270 = vpop.f32.mrf.mxu0
    %v3271 = vadd.f32 0.0, %v3270
    %v3272 = vpop.f32.mrf.mxu0
    %v3273 = vpop.f32.mrf.mxu0
    %v3274 = vpop.f32.mrf.mxu0
    %3275 = vdwg.mxu0
    %v3276 = vpack.c.bf16 %v3000, %v3000
    %3277 = vmatprep.subr.bf16.mxu0 %v933
    %3278 = vmatpush1.bf16.msra.mxu0 %v932
    %3279 = vmatprep.subr.bf16.mxu0 %v931
    %3280 = vmatpush1.bf16.msra.mxu0 %v930
    %3281 = vmatprep.subr.bf16.mxu0 %v929
    %3282 = vmatpush1.bf16.msra.mxu0 %v928
    %3283 = vmatprep.subr.bf16.mxu0 %v927
    %3284 = vmatpush1.bf16.msra.mxu0 %v926
    %3285 = vmatprep.subr.bf16.mxu0 %v925
    %3286 = vmatpush1.bf16.msra.mxu0 %v924
    %3287 = vmatprep.subr.bf16.mxu0 %v923
    %3288 = vmatpush1.bf16.msra.mxu0 %v922
    %3289 = vmatprep.subr.bf16.mxu0 %v921
    %3290 = vmatpush1.bf16.msra.mxu0 %v920
    %3291 = vmatprep.subr.bf16.mxu0 %v919
    %3292 = vmatpush1.bf16.msra.mxu0 %v918
    %3293 = vmatprep.subr.bf16.mxu0 0
    %3294 = vmatpush2.bf16.msra.mxu0 0
    %3295 = vmatprep.subr.bf16.mxu0 0
    %3296 = vmatpush2.bf16.msra.mxu0 0
    %3297 = vmatprep.subr.bf16.mxu0 0
    %3298 = vmatpush2.bf16.msra.mxu0 0
    %3299 = vmatprep.subr.bf16.mxu0 0
    %3300 = vmatpush2.bf16.msra.mxu0 0
    %3301 = vmatprep.subr.bf16.mxu0 0
    %3302 = vmatpush2.bf16.msra.mxu0 0
    %3303 = vmatprep.subr.bf16.mxu0 0
    %3304 = vmatpush2.bf16.msra.mxu0 0
    %3305 = vmatprep.subr.bf16.mxu0 0
    %3306 = vmatpush2.bf16.msra.mxu0 0
    %3307 = vmatprep.subr.bf16.mxu0 0
    %3308 = vmatpush2.bf16.msra.mxu0 0
    %3309 = vmatprep.mubr.bf16.mxu0 0
    %3310 = vmatmul.mubr.bf16.gmra.mxu0 %v3276
    %v3311 = vpop.f32.mrf.mxu0
    %v3312 = vadd.f32 %v290, %v3311
    %v3313 = vpop.f32.mrf.mxu0
    %v3314 = vadd.f32 %v294, %v3313
    %v3315 = vpop.f32.mrf.mxu0
    %v3316 = vpop.f32.mrf.mxu0
    %3317 = vdwg.mxu0
    %v3318 = vadd.f32 %v3230, %v3312
    %v3319 = vxor.u32 %v3318, 2147483648
    %v3320 = vmul.f32 %v3319, 1.442695
    %v3321 = vpow.pop %v3320
    %v3322 = vadd.f32 %v3321, 1.0
    %v3323 = vrcp.pop %v3322
    %v3324 = vmul.f32 1.0, %v3323
    %v3325 = vadd.f32 %v3232, %v3314
    %v3326 = vxor.u32 %v3325, 2147483648
    %v3327 = vmul.f32 %v3326, 1.442695
    %v3328 = vpow.pop %v3327
    %v3329 = vadd.f32 %v3328, 1.0
    %v3330 = vrcp.pop %v3329
    %v3331 = vmul.f32 1.0, %v3330
    %v3332 = vmul.f32 %v3331, %v3000
    %v3333 = vpack.c.bf16 %v3332, %v3332
    %3334 = vmatprep.subr.bf16.mxu0 0
    %3335 = vmatpush1.bf16.msra.mxu0 %v1046
    %3336 = vmatprep.subr.bf16.mxu0 0
    %3337 = vmatpush1.bf16.msra.mxu0 %v1045
    %3338 = vmatprep.subr.bf16.mxu0 0
    %3339 = vmatpush1.bf16.msra.mxu0 %v1044
    %3340 = vmatprep.subr.bf16.mxu0 0
    %3341 = vmatpush1.bf16.msra.mxu0 %v1043
    %3342 = vmatprep.subr.bf16.mxu0 0
    %3343 = vmatpush1.bf16.msra.mxu0 %v1042
    %3344 = vmatprep.subr.bf16.mxu0 0
    %3345 = vmatpush1.bf16.msra.mxu0 %v1041
    %3346 = vmatprep.subr.bf16.mxu0 0
    %3347 = vmatpush1.bf16.msra.mxu0 %v1040
    %3348 = vmatprep.subr.bf16.mxu0 0
    %3349 = vmatpush1.bf16.msra.mxu0 %v1039
    %3350 = vmatprep.subr.bf16.mxu0 0
    %3351 = vmatpush2.bf16.msra.mxu0 0
    %3352 = vmatprep.subr.bf16.mxu0 0
    %3353 = vmatpush2.bf16.msra.mxu0 0
    %3354 = vmatprep.subr.bf16.mxu0 0
    %3355 = vmatpush2.bf16.msra.mxu0 0
    %3356 = vmatprep.subr.bf16.mxu0 0
    %3357 = vmatpush2.bf16.msra.mxu0 0
    %3358 = vmatprep.subr.bf16.mxu0 0
    %3359 = vmatpush2.bf16.msra.mxu0 0
    %3360 = vmatprep.subr.bf16.mxu0 0
    %3361 = vmatpush2.bf16.msra.mxu0 0
    %3362 = vmatprep.subr.bf16.mxu0 0
    %3363 = vmatpush2.bf16.msra.mxu0 0
    %3364 = vmatprep.subr.bf16.mxu0 0
    %3365 = vmatpush2.bf16.msra.mxu0 0
    %3366 = vmatprep.mubr.bf16.mxu0 0
    %3367 = vmatmul.mubr.bf16.gmra.mxu0 %v3333
    %v3368 = vpop.f32.mrf.mxu0
    %v3369 = vadd.f32 0.0, %v3368
    %v3370 = vpop.f32.mrf.mxu0
    %v3371 = vpop.f32.mrf.mxu0
    %v3372 = vpop.f32.mrf.mxu0
    %3373 = vdwg.mxu0
    %v3374 = vadd.f32 %v3271, %v3369
    %v3375 = vadd.f32 %v3374, %v318
    %v3376 = vtanh.pop %v3375
    %v3377 = vmul.f32 %v3324, %v3000
    %v3378 = vsub.f32 1.0, %v3324
    %v3379 = vmul.f32 %v3378, %v3376
    %v3380 = vadd.f32 %v3377, %v3379
    %s3381 = scalar_lea.vmem [#allocation3], 48
    %3382 = vst [vmem:[%s3381] sm:$0xff] %v3380
    %s3383 = scalar_lea.vmem [#allocation4], 56
    %v3384 = vld [vmem:[%s3383] sm:$0xff]
    %v3385 = vpack.c.bf16 %v3384, %v3384
    %v3387 = vsel %vm341, %v3385, 0
    %3389 = vmatprep.subr.bf16.mxu0 0
    %3390 = vmatpush1.bf16.msra.mxu0 0
    %3391 = vmatprep.subr.bf16.mxu0 0
    %3392 = vmatpush1.bf16.msra.mxu0 0
    %3393 = vmatprep.subr.bf16.mxu0 0
    %3394 = vmatpush1.bf16.msra.mxu0 0
    %3395 = vmatprep.subr.bf16.mxu0 0
    %3396 = vmatpush1.bf16.msra.mxu0 0
    %3397 = vmatprep.subr.bf16.mxu0 0
    %3398 = vmatpush1.bf16.msra.mxu0 0
    %3399 = vmatprep.subr.bf16.mxu0 0
    %3400 = vmatpush1.bf16.msra.mxu0 0
    %3401 = vmatprep.subr.bf16.mxu0 0
    %3402 = vmatpush1.bf16.msra.mxu0 0
    %3403 = vmatprep.subr.bf16.mxu0 %v336
    %3404 = vmatpush1.bf16.msra.mxu0 %v335
    %3405 = vmatprep.subr.bf16.mxu0 0
    %3406 = vmatpush2.bf16.msra.mxu0 0
    %3407 = vmatprep.subr.bf16.mxu0 0
    %3408 = vmatpush2.bf16.msra.mxu0 0
    %3409 = vmatprep.subr.bf16.mxu0 0
    %3410 = vmatpush2.bf16.msra.mxu0 0
    %3411 = vmatprep.subr.bf16.mxu0 0
    %3412 = vmatpush2.bf16.msra.mxu0 0
    %3413 = vmatprep.subr.bf16.mxu0 0
    %3414 = vmatpush2.bf16.msra.mxu0 0
    %3415 = vmatprep.subr.bf16.mxu0 0
    %3416 = vmatpush2.bf16.msra.mxu0 0
    %3417 = vmatprep.subr.bf16.mxu0 0
    %3418 = vmatpush2.bf16.msra.mxu0 0
    %3419 = vmatprep.subr.bf16.mxu0 0
    %3420 = vmatpush2.bf16.msra.mxu0 0
    %3421 = vmatprep.mubr.bf16.mxu0 0
    %3422 = vmatmul.mubr.bf16.gmra.mxu0 %v3387
    %v3423 = vpop.f32.mrf.mxu0
    %v3424 = vadd.f32 0.0, %v3423
    %v3425 = vpop.f32.mrf.mxu0
    %v3426 = vadd.f32 0.0, %v3425
    %v3427 = vpop.f32.mrf.mxu0
    %v3428 = vpop.f32.mrf.mxu0
    %3429 = vdwg.mxu0
    %3430 = vmatprep.subr.bf16.mxu0 0
    %3431 = vmatpush1.bf16.msra.mxu0 0
    %3432 = vmatprep.subr.bf16.mxu0 0
    %3433 = vmatpush1.bf16.msra.mxu0 0
    %3434 = vmatprep.subr.bf16.mxu0 0
    %3435 = vmatpush1.bf16.msra.mxu0 0
    %3436 = vmatprep.subr.bf16.mxu0 0
    %3437 = vmatpush1.bf16.msra.mxu0 0
    %3438 = vmatprep.subr.bf16.mxu0 0
    %3439 = vmatpush1.bf16.msra.mxu0 0
    %3440 = vmatprep.subr.bf16.mxu0 0
    %3441 = vmatpush1.bf16.msra.mxu0 0
    %3442 = vmatprep.subr.bf16.mxu0 0
    %3443 = vmatpush1.bf16.msra.mxu0 0
    %3444 = vmatprep.subr.bf16.mxu0 0
    %3445 = vmatpush1.bf16.msra.mxu0 %v337
    %3446 = vmatprep.subr.bf16.mxu0 0
    %3447 = vmatpush2.bf16.msra.mxu0 0
    %3448 = vmatprep.subr.bf16.mxu0 0
    %3449 = vmatpush2.bf16.msra.mxu0 0
    %3450 = vmatprep.subr.bf16.mxu0 0
    %3451 = vmatpush2.bf16.msra.mxu0 0
    %3452 = vmatprep.subr.bf16.mxu0 0
    %3453 = vmatpush2.bf16.msra.mxu0 0
    %3454 = vmatprep.subr.bf16.mxu0 0
    %3455 = vmatpush2.bf16.msra.mxu0 0
    %3456 = vmatprep.subr.bf16.mxu0 0
    %3457 = vmatpush2.bf16.msra.mxu0 0
    %3458 = vmatprep.subr.bf16.mxu0 0
    %3459 = vmatpush2.bf16.msra.mxu0 0
    %3460 = vmatprep.subr.bf16.mxu0 0
    %3461 = vmatpush2.bf16.msra.mxu0 0
    %3462 = vmatprep.mubr.bf16.mxu0 0
    %3463 = vmatmul.mubr.bf16.gmra.mxu0 %v3387
    %v3464 = vpop.f32.mrf.mxu0
    %v3465 = vadd.f32 0.0, %v3464
    %v3466 = vpop.f32.mrf.mxu0
    %v3467 = vpop.f32.mrf.mxu0
    %v3468 = vpop.f32.mrf.mxu0
    %3469 = vdwg.mxu0
    %3470 = vmatprep.subr.bf16.mxu0 %v490
    %3471 = vmatpush1.bf16.msra.mxu0 %v489
    %3472 = vmatprep.subr.bf16.mxu0 %v488
    %3473 = vmatpush1.bf16.msra.mxu0 %v487
    %3474 = vmatprep.subr.bf16.mxu0 %v486
    %3475 = vmatpush1.bf16.msra.mxu0 %v485
    %3476 = vmatprep.subr.bf16.mxu0 %v484
    %3477 = vmatpush1.bf16.msra.mxu0 %v483
    %3478 = vmatprep.subr.bf16.mxu0 %v482
    %3479 = vmatpush1.bf16.msra.mxu0 %v481
    %3480 = vmatprep.subr.bf16.mxu0 %v480
    %3481 = vmatpush1.bf16.msra.mxu0 %v479
    %3482 = vmatprep.subr.bf16.mxu0 %v478
    %3483 = vmatpush1.bf16.msra.mxu0 %v477
    %3484 = vmatprep.subr.bf16.mxu0 %v476
    %3485 = vmatpush1.bf16.msra.mxu0 %v475
    %3486 = vmatprep.subr.bf16.mxu0 0
    %3487 = vmatpush2.bf16.msra.mxu0 0
    %3488 = vmatprep.subr.bf16.mxu0 0
    %3489 = vmatpush2.bf16.msra.mxu0 0
    %3490 = vmatprep.subr.bf16.mxu0 0
    %3491 = vmatpush2.bf16.msra.mxu0 0
    %3492 = vmatprep.subr.bf16.mxu0 0
    %3493 = vmatpush2.bf16.msra.mxu0 0
    %3494 = vmatprep.subr.bf16.mxu0 0
    %3495 = vmatpush2.bf16.msra.mxu0 0
    %3496 = vmatprep.subr.bf16.mxu0 0
    %3497 = vmatpush2.bf16.msra.mxu0 0
    %3498 = vmatprep.subr.bf16.mxu0 0
    %3499 = vmatpush2.bf16.msra.mxu0 0
    %3500 = vmatprep.subr.bf16.mxu0 0
    %3501 = vmatpush2.bf16.msra.mxu0 0
    %3502 = vmatprep.mubr.bf16.mxu0 0
    %3503 = vmatmul.mubr.bf16.gmra.mxu0 %v3194
    %v3504 = vpop.f32.mrf.mxu0
    %v3505 = vadd.f32 %v207, %v3504
    %v3506 = vpop.f32.mrf.mxu0
    %v3507 = vadd.f32 %v211, %v3506
    %v3508 = vpop.f32.mrf.mxu0
    %v3509 = vpop.f32.mrf.mxu0
    %3510 = vdwg.mxu0
    %v3511 = vadd.f32 %v3424, %v3505
    %v3512 = vxor.u32 %v3511, 2147483648
    %v3513 = vmul.f32 %v3512, 1.442695
    %v3514 = vpow.pop %v3513
    %v3515 = vadd.f32 %v3514, 1.0
    %v3516 = vrcp.pop %v3515
    %v3517 = vmul.f32 1.0, %v3516
    %v3518 = vadd.f32 %v3426, %v3507
    %v3519 = vxor.u32 %v3518, 2147483648
    %v3520 = vmul.f32 %v3519, 1.442695
    %v3521 = vpow.pop %v3520
    %v3522 = vadd.f32 %v3521, 1.0
    %v3523 = vrcp.pop %v3522
    %v3524 = vmul.f32 1.0, %v3523
    %v3525 = vmul.f32 %v3524, %v3193
    %v3526 = vpack.c.bf16 %v3525, %v3525
    %3527 = vmatprep.subr.bf16.mxu0 0
    %3528 = vmatpush1.bf16.msra.mxu0 %v603
    %3529 = vmatprep.subr.bf16.mxu0 0
    %3530 = vmatpush1.bf16.msra.mxu0 %v602
    %3531 = vmatprep.subr.bf16.mxu0 0
    %3532 = vmatpush1.bf16.msra.mxu0 %v601
    %3533 = vmatprep.subr.bf16.mxu0 0
    %3534 = vmatpush1.bf16.msra.mxu0 %v600
    %3535 = vmatprep.subr.bf16.mxu0 0
    %3536 = vmatpush1.bf16.msra.mxu0 %v599
    %3537 = vmatprep.subr.bf16.mxu0 0
    %3538 = vmatpush1.bf16.msra.mxu0 %v598
    %3539 = vmatprep.subr.bf16.mxu0 0
    %3540 = vmatpush1.bf16.msra.mxu0 %v597
    %3541 = vmatprep.subr.bf16.mxu0 0
    %3542 = vmatpush1.bf16.msra.mxu0 %v596
    %3543 = vmatprep.subr.bf16.mxu0 0
    %3544 = vmatpush2.bf16.msra.mxu0 0
    %3545 = vmatprep.subr.bf16.mxu0 0
    %3546 = vmatpush2.bf16.msra.mxu0 0
    %3547 = vmatprep.subr.bf16.mxu0 0
    %3548 = vmatpush2.bf16.msra.mxu0 0
    %3549 = vmatprep.subr.bf16.mxu0 0
    %3550 = vmatpush2.bf16.msra.mxu0 0
    %3551 = vmatprep.subr.bf16.mxu0 0
    %3552 = vmatpush2.bf16.msra.mxu0 0
    %3553 = vmatprep.subr.bf16.mxu0 0
    %3554 = vmatpush2.bf16.msra.mxu0 0
    %3555 = vmatprep.subr.bf16.mxu0 0
    %3556 = vmatpush2.bf16.msra.mxu0 0
    %3557 = vmatprep.subr.bf16.mxu0 0
    %3558 = vmatpush2.bf16.msra.mxu0 0
    %3559 = vmatprep.mubr.bf16.mxu0 0
    %3560 = vmatmul.mubr.bf16.gmra.mxu0 %v3526
    %v3561 = vpop.f32.mrf.mxu0
    %v3562 = vadd.f32 0.0, %v3561
    %v3563 = vpop.f32.mrf.mxu0
    %v3564 = vpop.f32.mrf.mxu0
    %v3565 = vpop.f32.mrf.mxu0
    %3566 = vdwg.mxu0
    %v3567 = vadd.f32 %v3465, %v3562
    %v3568 = vadd.f32 %v3567, %v235
    %v3569 = vtanh.pop %v3568
    %v3570 = vmul.f32 %v3517, %v3193
    %v3571 = vsub.f32 1.0, %v3517
    %v3572 = vmul.f32 %v3571, %v3569
    %v3573 = vadd.f32 %v3570, %v3572
    %v3574 = vpack.c.bf16 %v3573, %v3573
    %3575 = vmatprep.subr.bf16.mxu0 %v762
    %3576 = vmatpush1.bf16.msra.mxu0 %v761
    %3577 = vmatprep.subr.bf16.mxu0 %v759
    %3578 = vmatpush1.bf16.msra.mxu0 %v758
    %3579 = vmatprep.subr.bf16.mxu0 %v756
    %3580 = vmatpush1.bf16.msra.mxu0 %v755
    %3581 = vmatprep.subr.bf16.mxu0 %v753
    %3582 = vmatpush1.bf16.msra.mxu0 %v752
    %3583 = vmatprep.subr.bf16.mxu0 %v750
    %3584 = vmatpush1.bf16.msra.mxu0 %v749
    %3585 = vmatprep.subr.bf16.mxu0 %v747
    %3586 = vmatpush1.bf16.msra.mxu0 %v746
    %3587 = vmatprep.subr.bf16.mxu0 %v744
    %3588 = vmatpush1.bf16.msra.mxu0 %v743
    %3589 = vmatprep.subr.bf16.mxu0 %v741
    %3590 = vmatpush1.bf16.msra.mxu0 %v740
    %3591 = vmatprep.subr.bf16.mxu0 0
    %3592 = vmatpush2.bf16.msra.mxu0 0
    %3593 = vmatprep.subr.bf16.mxu0 0
    %3594 = vmatpush2.bf16.msra.mxu0 0
    %3595 = vmatprep.subr.bf16.mxu0 0
    %3596 = vmatpush2.bf16.msra.mxu0 0
    %3597 = vmatprep.subr.bf16.mxu0 0
    %3598 = vmatpush2.bf16.msra.mxu0 0
    %3599 = vmatprep.subr.bf16.mxu0 0
    %3600 = vmatpush2.bf16.msra.mxu0 0
    %3601 = vmatprep.subr.bf16.mxu0 0
    %3602 = vmatpush2.bf16.msra.mxu0 0
    %3603 = vmatprep.subr.bf16.mxu0 0
    %3604 = vmatpush2.bf16.msra.mxu0 0
    %3605 = vmatprep.subr.bf16.mxu0 0
    %3606 = vmatpush2.bf16.msra.mxu0 0
    %3607 = vmatprep.mubr.bf16.mxu0 0
    %3608 = vmatmul.mubr.bf16.gmra.mxu0 %v3574
    %v3609 = vpop.f32.mrf.mxu0
    %v3610 = vadd.f32 0.0, %v3609
    %v3611 = vpop.f32.mrf.mxu0
    %v3612 = vadd.f32 0.0, %v3611
    %v3613 = vpop.f32.mrf.mxu0
    %v3614 = vpop.f32.mrf.mxu0
    %3615 = vdwg.mxu0
    %3616 = vmatprep.subr.bf16.mxu0 0
    %3617 = vmatpush1.bf16.msra.mxu0 %v763
    %3618 = vmatprep.subr.bf16.mxu0 0
    %3619 = vmatpush1.bf16.msra.mxu0 %v760
    %3620 = vmatprep.subr.bf16.mxu0 0
    %3621 = vmatpush1.bf16.msra.mxu0 %v757
    %3622 = vmatprep.subr.bf16.mxu0 0
    %3623 = vmatpush1.bf16.msra.mxu0 %v754
    %3624 = vmatprep.subr.bf16.mxu0 0
    %3625 = vmatpush1.bf16.msra.mxu0 %v751
    %3626 = vmatprep.subr.bf16.mxu0 0
    %3627 = vmatpush1.bf16.msra.mxu0 %v748
    %3628 = vmatprep.subr.bf16.mxu0 0
    %3629 = vmatpush1.bf16.msra.mxu0 %v745
    %3630 = vmatprep.subr.bf16.mxu0 0
    %3631 = vmatpush1.bf16.msra.mxu0 %v742
    %3632 = vmatprep.subr.bf16.mxu0 0
    %3633 = vmatpush2.bf16.msra.mxu0 0
    %3634 = vmatprep.subr.bf16.mxu0 0
    %3635 = vmatpush2.bf16.msra.mxu0 0
    %3636 = vmatprep.subr.bf16.mxu0 0
    %3637 = vmatpush2.bf16.msra.mxu0 0
    %3638 = vmatprep.subr.bf16.mxu0 0
    %3639 = vmatpush2.bf16.msra.mxu0 0
    %3640 = vmatprep.subr.bf16.mxu0 0
    %3641 = vmatpush2.bf16.msra.mxu0 0
    %3642 = vmatprep.subr.bf16.mxu0 0
    %3643 = vmatpush2.bf16.msra.mxu0 0
    %3644 = vmatprep.subr.bf16.mxu0 0
    %3645 = vmatpush2.bf16.msra.mxu0 0
    %3646 = vmatprep.subr.bf16.mxu0 0
    %3647 = vmatpush2.bf16.msra.mxu0 0
    %3648 = vmatprep.mubr.bf16.mxu0 0
    %3649 = vmatmul.mubr.bf16.gmra.mxu0 %v3574
    %v3650 = vpop.f32.mrf.mxu0
    %v3651 = vadd.f32 0.0, %v3650
    %v3652 = vpop.f32.mrf.mxu0
    %v3653 = vpop.f32.mrf.mxu0
    %v3654 = vpop.f32.mrf.mxu0
    %3655 = vdwg.mxu0
    %v3656 = vpack.c.bf16 %v3380, %v3380
    %3657 = vmatprep.subr.bf16.mxu0 %v933
    %3658 = vmatpush1.bf16.msra.mxu0 %v932
    %3659 = vmatprep.subr.bf16.mxu0 %v931
    %3660 = vmatpush1.bf16.msra.mxu0 %v930
    %3661 = vmatprep.subr.bf16.mxu0 %v929
    %3662 = vmatpush1.bf16.msra.mxu0 %v928
    %3663 = vmatprep.subr.bf16.mxu0 %v927
    %3664 = vmatpush1.bf16.msra.mxu0 %v926
    %3665 = vmatprep.subr.bf16.mxu0 %v925
    %3666 = vmatpush1.bf16.msra.mxu0 %v924
    %3667 = vmatprep.subr.bf16.mxu0 %v923
    %3668 = vmatpush1.bf16.msra.mxu0 %v922
    %3669 = vmatprep.subr.bf16.mxu0 %v921
    %3670 = vmatpush1.bf16.msra.mxu0 %v920
    %3671 = vmatprep.subr.bf16.mxu0 %v919
    %3672 = vmatpush1.bf16.msra.mxu0 %v918
    %3673 = vmatprep.subr.bf16.mxu0 0
    %3674 = vmatpush2.bf16.msra.mxu0 0
    %3675 = vmatprep.subr.bf16.mxu0 0
    %3676 = vmatpush2.bf16.msra.mxu0 0
    %3677 = vmatprep.subr.bf16.mxu0 0
    %3678 = vmatpush2.bf16.msra.mxu0 0
    %3679 = vmatprep.subr.bf16.mxu0 0
    %3680 = vmatpush2.bf16.msra.mxu0 0
    %3681 = vmatprep.subr.bf16.mxu0 0
    %3682 = vmatpush2.bf16.msra.mxu0 0
    %3683 = vmatprep.subr.bf16.mxu0 0
    %3684 = vmatpush2.bf16.msra.mxu0 0
    %3685 = vmatprep.subr.bf16.mxu0 0
    %3686 = vmatpush2.bf16.msra.mxu0 0
    %3687 = vmatprep.subr.bf16.mxu0 0
    %3688 = vmatpush2.bf16.msra.mxu0 0
    %3689 = vmatprep.mubr.bf16.mxu0 0
    %3690 = vmatmul.mubr.bf16.gmra.mxu0 %v3656
    %v3691 = vpop.f32.mrf.mxu0
    %v3692 = vadd.f32 %v290, %v3691
    %v3693 = vpop.f32.mrf.mxu0
    %v3694 = vadd.f32 %v294, %v3693
    %v3695 = vpop.f32.mrf.mxu0
    %v3696 = vpop.f32.mrf.mxu0
    %3697 = vdwg.mxu0
    %v3698 = vadd.f32 %v3610, %v3692
    %v3699 = vxor.u32 %v3698, 2147483648
    %v3700 = vmul.f32 %v3699, 1.442695
    %v3701 = vpow.pop %v3700
    %v3702 = vadd.f32 %v3701, 1.0
    %v3703 = vrcp.pop %v3702
    %v3704 = vmul.f32 1.0, %v3703
    %v3705 = vadd.f32 %v3612, %v3694
    %v3706 = vxor.u32 %v3705, 2147483648
    %v3707 = vmul.f32 %v3706, 1.442695
    %v3708 = vpow.pop %v3707
    %v3709 = vadd.f32 %v3708, 1.0
    %v3710 = vrcp.pop %v3709
    %v3711 = vmul.f32 1.0, %v3710
    %v3712 = vmul.f32 %v3711, %v3380
    %v3713 = vpack.c.bf16 %v3712, %v3712
    %3714 = vmatprep.subr.bf16.mxu0 0
    %3715 = vmatpush1.bf16.msra.mxu0 %v1046
    %3716 = vmatprep.subr.bf16.mxu0 0
    %3717 = vmatpush1.bf16.msra.mxu0 %v1045
    %3718 = vmatprep.subr.bf16.mxu0 0
    %3719 = vmatpush1.bf16.msra.mxu0 %v1044
    %3720 = vmatprep.subr.bf16.mxu0 0
    %3721 = vmatpush1.bf16.msra.mxu0 %v1043
    %3722 = vmatprep.subr.bf16.mxu0 0
    %3723 = vmatpush1.bf16.msra.mxu0 %v1042
    %3724 = vmatprep.subr.bf16.mxu0 0
    %3725 = vmatpush1.bf16.msra.mxu0 %v1041
    %3726 = vmatprep.subr.bf16.mxu0 0
    %3727 = vmatpush1.bf16.msra.mxu0 %v1040
    %3728 = vmatprep.subr.bf16.mxu0 0
    %3729 = vmatpush1.bf16.msra.mxu0 %v1039
    %3730 = vmatprep.subr.bf16.mxu0 0
    %3731 = vmatpush2.bf16.msra.mxu0 0
    %3732 = vmatprep.subr.bf16.mxu0 0
    %3733 = vmatpush2.bf16.msra.mxu0 0
    %3734 = vmatprep.subr.bf16.mxu0 0
    %3735 = vmatpush2.bf16.msra.mxu0 0
    %3736 = vmatprep.subr.bf16.mxu0 0
    %3737 = vmatpush2.bf16.msra.mxu0 0
    %3738 = vmatprep.subr.bf16.mxu0 0
    %3739 = vmatpush2.bf16.msra.mxu0 0
    %3740 = vmatprep.subr.bf16.mxu0 0
    %3741 = vmatpush2.bf16.msra.mxu0 0
    %3742 = vmatprep.subr.bf16.mxu0 0
    %3743 = vmatpush2.bf16.msra.mxu0 0
    %3744 = vmatprep.subr.bf16.mxu0 0
    %3745 = vmatpush2.bf16.msra.mxu0 0
    %3746 = vmatprep.mubr.bf16.mxu0 0
    %3747 = vmatmul.mubr.bf16.gmra.mxu0 %v3713
    %v3748 = vpop.f32.mrf.mxu0
    %v3749 = vadd.f32 0.0, %v3748
    %v3750 = vpop.f32.mrf.mxu0
    %v3751 = vpop.f32.mrf.mxu0
    %v3752 = vpop.f32.mrf.mxu0
    %3753 = vdwg.mxu0
    %v3754 = vadd.f32 %v3651, %v3749
    %v3755 = vadd.f32 %v3754, %v318
    %v3756 = vtanh.pop %v3755
    %v3757 = vmul.f32 %v3704, %v3380
    %v3758 = vsub.f32 1.0, %v3704
    %v3759 = vmul.f32 %v3758, %v3756
    %v3760 = vadd.f32 %v3757, %v3759
    %s3761 = scalar_lea.vmem [#allocation3], 56
    %3762 = vst [vmem:[%s3761] sm:$0xff] %v3760
    %3763 = vst [vmem:[#allocation2] sm:$0xff] %v3573
    %3764 = vst [vmem:[%s321] sm:$0xff] %v3760
    %v3765 = vld [vmem:[#allocation3] sm:$0xff]
    %v3766 = vld [vmem:[#allocation3 + $0x8] sm:$0xff]
    %v3767 = vld [vmem:[#allocation3 + $0x10] sm:$0xff]
    %v3768 = vld [vmem:[#allocation3 + $0x18] sm:$0xff]
    %v3769 = vld [vmem:[#allocation3 + $0x20] sm:$0xff]
    %v3770 = vld [vmem:[#allocation3 + $0x28] sm:$0xff]
    %v3771 = vld [vmem:[#allocation3 + $0x30] sm:$0xff]
    %v3772 = vld [vmem:[#allocation3 + $0x38] sm:$0xff]
    %v3773 = vpack.c.bf16 %v3765, %v3765
    %v3774 = vpack.c.bf16 %v3766, %v3766
    %v3775 = vpack.c.bf16 %v3767, %v3767
    %v3776 = vpack.c.bf16 %v3768, %v3768
    %v3777 = vpack.c.bf16 %v3769, %v3769
    %v3778 = vpack.c.bf16 %v3770, %v3770
    %v3779 = vpack.c.bf16 %v3771, %v3771
    %v3780 = vpack.c.bf16 %v3772, %v3772
    %v3781 = vld [vmem:[#allocation18] sm:$0xf]
    %v3782 = vld [vmem:[#allocation18 + $0x4] sm:$0xf]
    %v3783 = vld [vmem:[#allocation18 + $0x8] sm:$0xf]
    %v3784 = vld [vmem:[#allocation18 + $0xc] sm:$0xf]
    %v3785 = vld [vmem:[#allocation18 + $0x10] sm:$0xf]
    %v3786 = vld [vmem:[#allocation18 + $0x14] sm:$0xf]
    %v3787 = vld [vmem:[#allocation18 + $0x18] sm:$0xf]
    %v3788 = vld [vmem:[#allocation18 + $0x1c] sm:$0xf]
    %v3789 = vld [vmem:[#allocation18 + $0x20] sm:$0xf]
    %v3790 = vld [vmem:[#allocation18 + $0x24] sm:$0xf]
    %v3791 = vld [vmem:[#allocation18 + $0x28] sm:$0xf]
    %v3792 = vld [vmem:[#allocation18 + $0x2c] sm:$0xf]
    %v3793 = vld [vmem:[#allocation18 + $0x30] sm:$0xf]
    %v3794 = vld [vmem:[#allocation18 + $0x34] sm:$0xf]
    %v3795 = vld [vmem:[#allocation18 + $0x38] sm:$0xf]
    %v3796 = vld [vmem:[#allocation18 + $0x3c] sm:$0xf]
    %v3797 = vld [vmem:[%s13] sm:$0x1]
    %v3799 = vlaneseq
    %v3800 = vshrl.u32 %v3799, 7
    %v3801 = vsub.s32 0, %v3800
    %v3802 = vrot.slane %v3797, %v3801
    %v3812 = vunpack.c.l.b16 %v3773
    %v3813 = vunpack.c.l.b16 %v3774
    %v3814 = vunpack.c.l.b16 %v3775
    %v3815 = vunpack.c.l.b16 %v3776
    %v3816 = vunpack.c.l.b16 %v3777
    %v3817 = vunpack.c.l.b16 %v3778
    %v3818 = vunpack.c.l.b16 %v3779
    %v3819 = vunpack.c.l.b16 %v3780
    %v3820 = vpack.c.b16 %v3813, %v3812
    %v3821 = vpack.c.b16 %v3815, %v3814
    %v3822 = vpack.c.b16 %v3817, %v3816
    %v3823 = vpack.c.b16 %v3819, %v3818
    %v3844 = vunpack.c.l.b16 %v3781
    %v3845 = vunpack.c.l.b16 %v3782
    %v3846 = vunpack.c.l.b16 %v3783
    %v3847 = vunpack.c.l.b16 %v3784
    %v3848 = vunpack.c.l.b16 %v3785
    %v3849 = vunpack.c.l.b16 %v3786
    %v3850 = vunpack.c.l.b16 %v3787
    %v3851 = vunpack.c.l.b16 %v3788
    %v3852 = vunpack.c.l.b16 %v3789
    %v3853 = vunpack.c.l.b16 %v3790
    %v3854 = vunpack.c.l.b16 %v3791
    %v3855 = vunpack.c.l.b16 %v3792
    %v3856 = vunpack.c.l.b16 %v3793
    %v3857 = vunpack.c.l.b16 %v3794
    %v3858 = vunpack.c.l.b16 %v3795
    %v3859 = vunpack.c.l.b16 %v3796
    %v3860 = vpack.c.b16 %v3845, %v3844
    %v3861 = vpack.c.b16 %v3847, %v3846
    %v3862 = vpack.c.b16 %v3849, %v3848
    %v3863 = vpack.c.b16 %v3851, %v3850
    %v3864 = vpack.c.b16 %v3853, %v3852
    %v3865 = vpack.c.b16 %v3855, %v3854
    %v3866 = vpack.c.b16 %v3857, %v3856
    %v3867 = vpack.c.b16 %v3859, %v3858
    %3876 = vmatprep.subr.bf16.mxu0 0
    %3877 = vmatpush1.bf16.msra.mxu0 %v3867
    %3878 = vmatprep.subr.bf16.mxu0 0
    %3879 = vmatpush1.bf16.msra.mxu0 %v3866
    %3880 = vmatprep.subr.bf16.mxu0 0
    %3881 = vmatpush1.bf16.msra.mxu0 %v3865
    %3882 = vmatprep.subr.bf16.mxu0 0
    %3883 = vmatpush1.bf16.msra.mxu0 %v3864
    %3884 = vmatprep.subr.bf16.mxu0 0
    %3885 = vmatpush1.bf16.msra.mxu0 %v3863
    %3886 = vmatprep.subr.bf16.mxu0 0
    %3887 = vmatpush1.bf16.msra.mxu0 %v3862
    %3888 = vmatprep.subr.bf16.mxu0 0
    %3889 = vmatpush1.bf16.msra.mxu0 %v3861
    %3890 = vmatprep.subr.bf16.mxu0 0
    %3891 = vmatpush1.bf16.msra.mxu0 %v3860
    %3892 = vmatprep.subr.bf16.mxu0 0
    %3893 = vmatpush2.bf16.msra.mxu0 0
    %3894 = vmatprep.subr.bf16.mxu0 0
    %3895 = vmatpush2.bf16.msra.mxu0 0
    %3896 = vmatprep.subr.bf16.mxu0 0
    %3897 = vmatpush2.bf16.msra.mxu0 0
    %3898 = vmatprep.subr.bf16.mxu0 0
    %3899 = vmatpush2.bf16.msra.mxu0 0
    %3900 = vmatprep.subr.bf16.mxu0 0
    %3901 = vmatpush2.bf16.msra.mxu0 0
    %3902 = vmatprep.subr.bf16.mxu0 0
    %3903 = vmatpush2.bf16.msra.mxu0 0
    %3904 = vmatprep.subr.bf16.mxu0 0
    %3905 = vmatpush2.bf16.msra.mxu0 0
    %3906 = vmatprep.subr.bf16.mxu0 0
    %3907 = vmatpush2.bf16.msra.mxu0 0
    %3908 = vmatprep.mubr.bf16.mxu0 0
    %3909 = vmatmul.mubr.bf16.gmra.mxu0 %v3820
    %v3910 = vpop.f32.mrf.mxu0
    %v3911 = vadd.f32 %v3802, %v3910
    %v3912 = vpop.f32.mrf.mxu0
    %v3913 = vpop.f32.mrf.mxu0
    %v3914 = vadd.f32 %v3802, %v3913
    %v3915 = vpop.f32.mrf.mxu0
    %3916 = vmatprep.mubr.bf16.mxu0 0
    %3917 = vmatmul.mubr.bf16.gmra.mxu0 %v3821
    %v3918 = vpop.f32.mrf.mxu0
    %v3919 = vadd.f32 %v3802, %v3918
    %v3920 = vpop.f32.mrf.mxu0
    %v3921 = vpop.f32.mrf.mxu0
    %v3922 = vadd.f32 %v3802, %v3921
    %v3923 = vpop.f32.mrf.mxu0
    %3924 = vmatprep.mubr.bf16.mxu0 0
    %3925 = vmatmul.mubr.bf16.gmra.mxu0 %v3822
    %v3926 = vpop.f32.mrf.mxu0
    %v3927 = vadd.f32 %v3802, %v3926
    %v3928 = vpop.f32.mrf.mxu0
    %v3929 = vpop.f32.mrf.mxu0
    %v3930 = vadd.f32 %v3802, %v3929
    %v3931 = vpop.f32.mrf.mxu0
    %3932 = vmatprep.mubr.bf16.mxu0 0
    %3933 = vmatmul.mubr.bf16.gmra.mxu0 %v3823
    %v3934 = vpop.f32.mrf.mxu0
    %v3935 = vadd.f32 %v3802, %v3934
    %v3936 = vpop.f32.mrf.mxu0
    %v3937 = vpop.f32.mrf.mxu0
    %v3938 = vadd.f32 %v3802, %v3937
    %v3939 = vpop.f32.mrf.mxu0
    %3940 = vdwg.mxu0
    %3941 = vst [vmem:[#allocation19] sm:$0xff] %v3911
    %3942 = vst [vmem:[#allocation19 + $0x8] sm:$0xff] %v3914
    %3943 = vst [vmem:[#allocation19 + $0x10] sm:$0xff] %v3919
    %3944 = vst [vmem:[#allocation19 + $0x18] sm:$0xff] %v3922
    %3945 = vst [vmem:[#allocation19 + $0x20] sm:$0xff] %v3927
    %3946 = vst [vmem:[#allocation19 + $0x28] sm:$0xff] %v3930
    %3947 = vst [vmem:[#allocation19 + $0x30] sm:$0xff] %v3935
    %3948 = vst [vmem:[#allocation19 + $0x38] sm:$0xff] %v3938
    // Predicated region
    $region98: #{tpu_custom_call.1} parent=1 // pred_check
      %p3949 = pneg %p174
    $region99: #{tpu_custom_call.1} parent=1 // pred_check_branch
      %3951 = sbr.rel (%p3949) target = $region101
    $region100: #{tpu_custom_call.1} parent=1 // pred_region
      %v3952 = vld [vmem:[#allocation2] sm:$0xff]
      %v3953 = vld [vmem:[#allocation2 + $0x8] sm:$0xff]
      %3954 = vst [vmem:[#allocation20] sm:$0xff] %v3952
      %3955 = vst [vmem:[#allocation20 + $0x8] sm:$0xff] %v3953
    $region101: #{tpu_custom_call.1} parent=1 // pred_fallthru
      _
    // Predicated region
    $region102: #{tpu_custom_call.1} parent=1 // pred_check
      _
    $region103: #{tpu_custom_call.1} parent=1 // pred_check_branch
      %3957 = sbr.rel (0) target = $region105
    $region104: #{tpu_custom_call.1} parent=1 // pred_region
      %s3959 = ssub.s32 1024, 1024
      %3960 = vsyncadd [#allocation6], %s3959
      %s3961 = sshll.u32 [#allocation19], 4
      %s3962 = int_to_ptr.vmem [resolvable:$true] %s3961
      %3967 = dma.vmem_to_hbm [thread:$0]  %s3962, 1024, %s14, [#allocation6], 128, 128, 8
    $region105: #{tpu_custom_call.1} parent=1 // pred_fallthru
      _
    // Predicated region
    $region106: #{tpu_custom_call.1} parent=1 // pred_check
      _
    $region107: #{tpu_custom_call.1} parent=1 // pred_check_branch
      %3969 = sbr.rel (0) target = $region109
    $region108: #{tpu_custom_call.1} parent=1 // pred_region
      %s3971 = ssub.s32 256, 256
      %3972 = vsyncadd [#allocation21], %s3971
      %s3973 = sshll.u32 [#allocation20], 4
      %s3974 = int_to_ptr.vmem [resolvable:$true] %s3973
      %3979 = dma.vmem_to_hbm [thread:$0]  %s3974, 256, %s15, [#allocation21], 128, 128, 8
    $region109: #{tpu_custom_call.1} parent=1 // pred_fallthru
      _
    // Predicated region
    $region110: #{tpu_custom_call.1} parent=1 // pred_check
      _
    $region111: #{tpu_custom_call.1} parent=1 // pred_check_branch
      %3981 = sbr.rel (0) target = $region113
    $region112: #{tpu_custom_call.1} parent=1 // pred_region
      %3982 = dma.done [#allocation6], 1024
    $region113: #{tpu_custom_call.1} parent=1 // pred_fallthru
      _
    // Predicated region
    $region114: #{tpu_custom_call.1} parent=1 // pred_check
      _
    $region115: #{tpu_custom_call.1} parent=1 // pred_check_branch
      %3984 = sbr.rel (0) target = $region117
    $region116: #{tpu_custom_call.1} parent=1 // pred_region
      %3985 = dma.done [#allocation21], 256
    $region117: #{tpu_custom_call.1} parent=1 // pred_fallthru
      _
    %3986 = vsyncpa [#allocation5], 1
    %3987 = vsyncpa [#allocation8], 1
    %3988 = vsyncpa [#allocation11], 1
    %3989 = vsyncpa [#allocation14], 1
    %3990 = vsyncpa [#allocation17], 1
    %3991 = vsyncpa [#allocation6], 1
    %3992 = vsyncpa [#allocation21], 1

</llo_original>
